<compile_context>
chip_gen: v6e
topology: v6e:2x2x1
jax: 0.10.0
libtpu: 0.0.40
codegen_flags: <defaults>
</compile_context>

<pallas_src>
from functools import lru_cache

import numpy as np

import jax
import jax.numpy as jnp
from jax.experimental import pallas as pl
from jax.experimental.pallas import tpu as pltpu

N_PAD = 128  # pad the 7 logits to a lane-dense 128-wide output store


def _ceil8(n):
    return (n + 7) // 8 * 8


# ---------------------------------------------------------------------------
# Fused Pallas kernel
# ---------------------------------------------------------------------------
def _finetune_head_kernel(p1_ref, w1_ref, sel2_ref, sel3_ref, shifts_ref, bh_ref,
                          w2_hbm, w3_hbm, wh_hbm,
                          o_ref,
                          p2_ref, p3_ref, w2_ref, w3_ref, wh_ref, sem_ref):
    """Fused avgpool-head (3x conv3x3+BN+ReLU) + folded fc/classifier.

    p1_ref:     [M1p, 9C]      im2col patches of the 7x7 input (bf16, rows padded)
    w1_ref:     [9C, C]        conv1 weights, tap-major rows, BN scale folded (bf16)
    sel2_ref:   [9*M2p, M1p]   stacked 0/1 tap-gather matrix, layer 2 (bf16)
    sel3_ref:   [9*Bp,  M2p]   stacked 0/1 row-permutation matrix, layer 3 (bf16)
    shifts_ref: [3, 1, C]      per-layer folded BN shift (f32)
    bh_ref:     [1, 128]       fc_b @ cls_w + cls_b, zero-padded (f32)
    w2/w3_hbm:  [9C, C]        conv2/conv3 weights in HBM (bf16, manual DMA)
    wh_hbm:     [C, 128]       fc_w @ cls_w, zero-padded to 128 lanes (bf16, HBM)
    o_ref:      [Bp, 128]      logits (rows >= B and columns 7..127 are junk/zero)
    p2_ref/p3_ref:             f32 VMEM scratch for lane-concatenated patches
    w2_ref/w3_ref/wh_ref:      bf16 VMEM landing buffers for the HBM weights
    sem_ref:                   DMA semaphores (3,)
    """
    C = w1_ref.shape[1]
    M2 = p2_ref.shape[0]      # padded B*9 (multiple of 8)
    BP = p3_ref.shape[0]      # padded batch (multiple of 8)
    f32 = jnp.float32
    bf16 = jnp.bfloat16

    # Kick off the later-layer weight DMAs now; they overlap layer-1/2 compute.
    cp_w2 = pltpu.make_async_copy(w2_hbm, w2_ref, sem_ref.at[0])
    cp_w3 = pltpu.make_async_copy(w3_hbm, w3_ref, sem_ref.at[1])
    cp_wh = pltpu.make_async_copy(wh_hbm, wh_ref, sem_ref.at[2])
    cp_w2.start()
    cp_w3.start()
    cp_wh.start()

    # --- layer 1: one big-K matmul, M = M1p, K = 9C ---------------------------
    h1 = jnp.dot(p1_ref[...], w1_ref[...], preferred_element_type=f32)
    h1 = jnp.maximum(h1 + shifts_ref[0], 0.0)                 # [M1p, C] f32
    h1b = h1.astype(bf16)

    # --- layer 2: ONE stacked tap-gather matmul + ONE [M2,9C]@[9C,C] conv -----
    # g2 row t*M2 + m holds the tap-t input row of output position m.
    g2 = jnp.dot(sel2_ref[...], h1b, preferred_element_type=f32)   # [9*M2, C]
    for t in range(9):        # vreg-aligned slab copies -> lane-concatenated patches
        p2_ref[:, t * C:(t + 1) * C] = g2[t * M2:(t + 1) * M2, :]

    cp_w2.wait()
    h2 = jnp.dot(p2_ref[...].astype(bf16), w2_ref[...], preferred_element_type=f32)
    h2 = jnp.maximum(h2 + shifts_ref[1], 0.0)                 # [M2, C] f32, rows (b, pos)

    # --- layer 3: full 3x3 contraction as ONE [Bp, 9C] @ [9C, C] matmul -------
    # sel3 is just a cheap row permutation ((b, pos) -> (pos, b) with batch padded
    # to Bp) so the lane-concatenation below stays sublane-aligned.
    g3 = jnp.dot(sel3_ref[...], h2.astype(bf16), preferred_element_type=f32)  # [9*Bp, C]
    for t in range(9):
        p3_ref[:, t * C:(t + 1) * C] = g3[t * BP:(t + 1) * BP, :]

    cp_w3.wait()
    h3 = jnp.dot(p3_ref[...].astype(bf16), w3_ref[...], preferred_element_type=f32)
    h3 = jnp.maximum(h3 + shifts_ref[2], 0.0)                 # [Bp, C] f32

    # --- folded (resnet fc -> classifier) head, lane-dense 128-wide store -----
    cp_wh.wait()
    out = jnp.dot(h3.astype(bf16), wh_ref[...], preferred_element_type=f32)
    o_ref[...] = (out + bh_ref[...]).astype(o_ref.dtype)


# ---------------------------------------------------------------------------
# Wrapper-side helpers (plain JAX / numpy, outside the kernel)
# ---------------------------------------------------------------------------
def _im2col_3x3(x_nhwc):
    """Valid 3x3 im2col: [B, H, W, C] -> [B*(H-2)*(W-2), 9*C], tap-major columns."""
    B, H, W, C = x_nhwc.shape
    Ho, Wo = H - 2, W - 2
    cols = [x_nhwc[:, di:di + Ho, dj:dj + Wo, :]
            for di in range(3) for dj in range(3)]
    return jnp.concatenate(cols, axis=-1).reshape(B * Ho * Wo, 9 * C)


@lru_cache(maxsize=None)
def _gather_mats_np(B):
    """Cached 0/1 gather matrices for the 5x5->3x3 and 3x3->1x1 stages.

    sel2 [9*M2p, M1p]: row t*M2p + (b*9 + i*3 + j) selects h1 row
                       b*25 + (i+di)*5 + (j+dj)   (t = 3*di + dj).
    sel3 [9*Bp,  M2p]: row t*Bp + b selects h2 row b*9 + t  (pure permutation,
                       batch padded to Bp so later slab copies stay aligned).
    """
    M1P, M2P, BP = _ceil8(B * 25), _ceil8(B * 9), _ceil8(B)
    sel2 = np.zeros((9 * M2P, M1P), np.float32)
    for t in range(9):
        di, dj = divmod(t, 3)
        for b in range(B):
            for i in range(3):
                for j in range(3):
                    sel2[t * M2P + b * 9 + i * 3 + j,
                         b * 25 + (i + di) * 5 + (j + dj)] = 1.0
    sel3 = np.zeros((9 * BP, M2P), np.float32)
    for t in range(9):
        for b in range(B):
            sel3[t * BP + b, b * 9 + t] = 1.0
    return sel2, sel3


# ---------------------------------------------------------------------------
# Parameters (deterministic synthetic init; shapes follow the module __init__)
# ---------------------------------------------------------------------------
def init_params(key, c_feat):
    eps = 1e-5
    keys = jax.random.split(key, 19)
    k = iter(keys)
    convs = []
    for _ in range(3):
        # NOTE: real PyTorch Conv2d weights are [Cout, Cin, kh, kw]; permute to
        # (kh, kw, Cin, Cout) (w.permute(2, 3, 1, 0)) when loading pretrained.
        w = jax.random.normal(next(k), (3, 3, c_feat, c_feat), jnp.float32) * 0.02
        gamma = 1.0 + 0.1 * jax.random.normal(next(k), (c_feat,), jnp.float32)
        beta = 0.1 * jax.random.normal(next(k), (c_feat,), jnp.float32)
        mean = 0.1 * jax.random.normal(next(k), (c_feat,), jnp.float32)
        var = jnp.abs(jax.random.normal(next(k), (c_feat,), jnp.float32)) + 0.5
        scale = gamma / jnp.sqrt(var + eps)     # eval-mode BN fold
        shift = beta - mean * scale
        convs.append((w, scale, shift))
    params = {"avgpool": convs}
    # resnet152 final fc: c_feat -> 1000 (part of original_model / features)
    params["fc_w"] = jax.random.normal(next(k), (c_feat, 1000), jnp.float32) * 0.02
    params["fc_b"] = 0.01 * jax.random.normal(next(k), (1000,), jnp.float32)
    # FineTuneModel.classifier: nn.Linear(1000, 7)
    params["cls_w"] = jax.random.normal(next(k), (1000, 7), jnp.float32) * 0.02
    params["cls_b"] = 0.01 * jax.random.normal(next(k), (7,), jnp.float32)
    return params


# ---------------------------------------------------------------------------
# FineTuneModel.forward
# ---------------------------------------------------------------------------
def finetune_forward(params, x_feat_nchw):
    """FineTuneModel.forward starting from the [B, C, 7, 7] backbone feature map."""
    B, C, H, W = x_feat_nchw.shape
    assert H == 7 and W == 7, "avgpool head expects the 7x7 resnet152 feature map"
    M1, M2 = B * 25, B * 9
    M1P, M2P, BP = _ceil8(M1), _ceil8(M2), _ceil8(B)

    x = jnp.transpose(x_feat_nchw, (0, 2, 3, 1))             # NCHW -> NHWC (C on lanes)
    p1 = _im2col_3x3(x)                                       # [B*25, 9*C]
    p1 = jnp.pad(p1, ((0, M1P - M1), (0, 0))).astype(jnp.bfloat16)

    # Fold BN scale into the conv weights (bf16 operands, f32 accumulation);
    # keep the shift as a per-layer f32 bias.
    w_mats, shifts = [], []
    for (w, scale, shift) in params["avgpool"]:               # w: [3, 3, Cin, Cout]
        w_mats.append((w * scale.reshape(1, 1, 1, C))
                      .reshape(9 * C, C).astype(jnp.bfloat16))
        shifts.append(shift.reshape(1, C))
    shifts = jnp.stack(shifts)                                # [3, 1, C] f32

    # Fold fc (C->1000) and classifier (1000->7); zero-pad to 128 output lanes.
    wh = jnp.pad(params["fc_w"] @ params["cls_w"],
                 ((0, 0), (0, N_PAD - 7))).astype(jnp.bfloat16)
    bh = jnp.pad(params["fc_b"] @ params["cls_w"] + params["cls_b"],
                 (0, N_PAD - 7)).reshape(1, N_PAD)            # f32

    sel2_np, sel3_np = _gather_mats_np(B)                     # cached numpy constants
    sel2 = jnp.asarray(sel2_np, jnp.bfloat16)                 # [9*M2P, M1P]
    sel3 = jnp.asarray(sel3_np, jnp.bfloat16)                 # [9*BP,  M2P]

    out = pl.pallas_call(
        _finetune_head_kernel,
        out_shape=jax.ShapeDtypeStruct((BP, N_PAD), jnp.float32),
        in_specs=(
            [pl.BlockSpec(memory_space=pltpu.MemorySpace.VMEM)] * 6
            + [pl.BlockSpec(memory_space=pl.ANY)] * 3          # w2, w3, wh stay in HBM
        ),
        out_specs=pl.BlockSpec(memory_space=pltpu.MemorySpace.VMEM),
        scratch_shapes=[
            pltpu.VMEM((M2P, 9 * C), jnp.float32),             # layer-2 patches
            pltpu.VMEM((BP, 9 * C), jnp.float32),              # layer-3 patches
            pltpu.VMEM((9 * C, C), jnp.bfloat16),               # w2 landing buffer
            pltpu.VMEM((9 * C, C), jnp.bfloat16),               # w3 landing buffer
            pltpu.VMEM((C, N_PAD), jnp.bfloat16),               # wh landing buffer
            pltpu.SemaphoreType.DMA((3,)),
        ],
    )(p1, w_mats[0], sel2, sel3, shifts, bh, w_mats[1], w_mats[2], wh)

    return out[:B, :7]                                        # classifier logits [B, 7]


if __name__ == "__main__":
    key = jax.random.PRNGKey(0)
    kx, kp = jax.random.split(key)
    B, C_FEAT, HW = 2, 128, 7          # C scaled down from 2048 for a small run
    # Post-ReLU layer4 feature map (NCHW, like PyTorch conv inputs).
    x_feat = jax.nn.relu(jax.random.normal(kx, (B, C_FEAT, HW, HW), jnp.float32))
    params = init_params(kp, C_FEAT)
    fwd = jax.jit(finetune_forward)    # weight folding / padding compiled once
    y = fwd(params, x_feat)
    y = jax.block_until_ready(y)
    assert y.shape == (B, 7) and y.dtype == jnp.float32
    assert bool(jnp.all(jnp.isfinite(y)))
    print("KERNEL_OK")
</pallas_src>

<mosaic_0001>
module attributes {stable_mosaic.version = 11 : i64} {
  func.func @_finetune_head_kernel(%arg0: memref<56x1152xbf16, #tpu.memory_space<vmem>>, %arg1: memref<1152x128xbf16, #tpu.memory_space<vmem>>, %arg2: memref<216x56xbf16, #tpu.memory_space<vmem>>, %arg3: memref<72x24xbf16, #tpu.memory_space<vmem>>, %arg4: memref<3x1x128xf32, #tpu.memory_space<vmem>>, %arg5: memref<1x128xf32, #tpu.memory_space<vmem>>, %arg6: memref<1152x128xbf16, #tpu.memory_space<any>>, %arg7: memref<1152x128xbf16, #tpu.memory_space<any>>, %arg8: memref<128x128xbf16, #tpu.memory_space<any>>, %arg9: memref<8x128xf32, #tpu.memory_space<vmem>>, %arg10: memref<24x1152xf32, #tpu.memory_space<vmem>>, %arg11: memref<8x1152xf32, #tpu.memory_space<vmem>>, %arg12: memref<1152x128xbf16, #tpu.memory_space<vmem>>, %arg13: memref<1152x128xbf16, #tpu.memory_space<vmem>>, %arg14: memref<128x128xbf16, #tpu.memory_space<vmem>>, %arg15: memref<3x!tpu.dma_semaphore, #tpu.memory_space<semaphore_mem>>) attributes {dimension_semantics = [], scalar_prefetch = 0 : i64, scratch_operands = 6 : i64, tpu.core_type = #tpu.core_type<tc>} {
    %c0_i32 = arith.constant 0 : i32
    %0 = tpu.memref_slice %arg15[%c0_i32] : memref<3x!tpu.dma_semaphore, #tpu.memory_space<semaphore_mem>> -> memref<1x!tpu.dma_semaphore, #tpu.memory_space<semaphore_mem>>
    %1 = tpu.memref_squeeze %0 : memref<1x!tpu.dma_semaphore, #tpu.memory_space<semaphore_mem>> -> memref<!tpu.dma_semaphore, #tpu.memory_space<semaphore_mem>>
    tpu.enqueue_dma source(%arg6 : memref<1152x128xbf16, #tpu.memory_space<any>>) target(%arg12 : memref<1152x128xbf16, #tpu.memory_space<vmem>>) target_semaphore(%1 : memref<!tpu.dma_semaphore, #tpu.memory_space<semaphore_mem>>)
    %c1_i32 = arith.constant 1 : i32
    %2 = tpu.memref_slice %arg15[%c1_i32] : memref<3x!tpu.dma_semaphore, #tpu.memory_space<semaphore_mem>> -> memref<1x!tpu.dma_semaphore, #tpu.memory_space<semaphore_mem>>
    %3 = tpu.memref_squeeze %2 : memref<1x!tpu.dma_semaphore, #tpu.memory_space<semaphore_mem>> -> memref<!tpu.dma_semaphore, #tpu.memory_space<semaphore_mem>>
    tpu.enqueue_dma source(%arg7 : memref<1152x128xbf16, #tpu.memory_space<any>>) target(%arg13 : memref<1152x128xbf16, #tpu.memory_space<vmem>>) target_semaphore(%3 : memref<!tpu.dma_semaphore, #tpu.memory_space<semaphore_mem>>)
    %c2_i32 = arith.constant 2 : i32
    %4 = tpu.memref_slice %arg15[%c2_i32] : memref<3x!tpu.dma_semaphore, #tpu.memory_space<semaphore_mem>> -> memref<1x!tpu.dma_semaphore, #tpu.memory_space<semaphore_mem>>
    %5 = tpu.memref_squeeze %4 : memref<1x!tpu.dma_semaphore, #tpu.memory_space<semaphore_mem>> -> memref<!tpu.dma_semaphore, #tpu.memory_space<semaphore_mem>>
    tpu.enqueue_dma source(%arg8 : memref<128x128xbf16, #tpu.memory_space<any>>) target(%arg14 : memref<128x128xbf16, #tpu.memory_space<vmem>>) target_semaphore(%5 : memref<!tpu.dma_semaphore, #tpu.memory_space<semaphore_mem>>)
    %c0 = arith.constant 0 : index
    %c0_0 = arith.constant 0 : index
    %6 = vector.load %arg0[%c0, %c0_0] : memref<56x1152xbf16, #tpu.memory_space<vmem>>, vector<56x1152xbf16>
    %c0_1 = arith.constant 0 : index
    %c0_2 = arith.constant 0 : index
    %7 = vector.load %arg1[%c0_1, %c0_2] : memref<1152x128xbf16, #tpu.memory_space<vmem>>, vector<1152x128xbf16>
    %cst = arith.constant dense<0.000000e+00> : vector<56x128xf32>
    %8 = tpu.matmul %6, %7, %cst {dimension_numbers = #tpu.dot_dimension_numbers<[1], [0], [0], [1], [0, 0, 1, 1], [], []>} : vector<56x1152xbf16>, vector<1152x128xbf16>, vector<56x128xf32> -> vector<56x128xf32>
    %c0_3 = arith.constant 0 : index
    %c0_4 = arith.constant 0 : index
    %c0_5 = arith.constant 0 : index
    %9 = vector.load %arg4[%c0_3, %c0_4, %c0_5] : memref<3x1x128xf32, #tpu.memory_space<vmem>>, vector<1x1x128xf32>
    %10 = vector.shape_cast %9 : vector<1x1x128xf32> to vector<1x128xf32>
    %11 = vector.broadcast %10 : vector<1x128xf32> to vector<56x128xf32>
    %12 = arith.addf %8, %11 : vector<56x128xf32>
    %cst_6 = arith.constant 0.000000e+00 : f32
    %13 = vector.broadcast %cst_6 : f32 to vector<56x128xf32>
    %14 = arith.maximumf %12, %13 : vector<56x128xf32>
    %15 = arith.truncf %14 : vector<56x128xf32> to vector<56x128xbf16>
    %c0_7 = arith.constant 0 : index
    %c0_8 = arith.constant 0 : index
    %16 = vector.load %arg2[%c0_7, %c0_8] : memref<216x56xbf16, #tpu.memory_space<vmem>>, vector<216x56xbf16>
    %cst_9 = arith.constant dense<0.000000e+00> : vector<216x128xf32>
    %17 = tpu.matmul %16, %15, %cst_9 {dimension_numbers = #tpu.dot_dimension_numbers<[1], [0], [0], [1], [0, 0, 1, 1], [], []>} : vector<216x56xbf16>, vector<56x128xbf16>, vector<216x128xf32> -> vector<216x128xf32>
    %18 = vector.extract_strided_slice %17 {offsets = [0, 0], sizes = [24, 128], strides = [1, 1]} : vector<216x128xf32> to vector<24x128xf32>
    %c0_10 = arith.constant 0 : index
    %c0_11 = arith.constant 0 : index
    %19 = vector.load %arg10[%c0_10, %c0_11] : memref<24x1152xf32, #tpu.memory_space<vmem>>, vector<24x128xf32>
    tpu.vector_store %arg10[%c0_10, %c0_11], %18 {strides = array<i32>} : memref<24x1152xf32, #tpu.memory_space<vmem>>, vector<24x128xf32>,
    %20 = vector.extract_strided_slice %17 {offsets = [24, 0], sizes = [24, 128], strides = [1, 1]} : vector<216x128xf32> to vector<24x128xf32>
    %c0_12 = arith.constant 0 : index
    %c128 = arith.constant 128 : index
    %21 = vector.load %arg10[%c0_12, %c128] : memref<24x1152xf32, #tpu.memory_space<vmem>>, vector<24x128xf32>
    tpu.vector_store %arg10[%c0_12, %c128], %20 {strides = array<i32>} : memref<24x1152xf32, #tpu.memory_space<vmem>>, vector<24x128xf32>,
    %22 = vector.extract_strided_slice %17 {offsets = [48, 0], sizes = [24, 128], strides = [1, 1]} : vector<216x128xf32> to vector<24x128xf32>
    %c0_13 = arith.constant 0 : index
    %c256 = arith.constant 256 : index
    %23 = vector.load %arg10[%c0_13, %c256] : memref<24x1152xf32, #tpu.memory_space<vmem>>, vector<24x128xf32>
    tpu.vector_store %arg10[%c0_13, %c256], %22 {strides = array<i32>} : memref<24x1152xf32, #tpu.memory_space<vmem>>, vector<24x128xf32>,
    %24 = vector.extract_strided_slice %17 {offsets = [72, 0], sizes = [24, 128], strides = [1, 1]} : vector<216x128xf32> to vector<24x128xf32>
    %c0_14 = arith.constant 0 : index
    %c384 = arith.constant 384 : index
    %25 = vector.load %arg10[%c0_14, %c384] : memref<24x1152xf32, #tpu.memory_space<vmem>>, vector<24x128xf32>
    tpu.vector_store %arg10[%c0_14, %c384], %24 {strides = array<i32>} : memref<24x1152xf32, #tpu.memory_space<vmem>>, vector<24x128xf32>,
    %26 = vector.extract_strided_slice %17 {offsets = [96, 0], sizes = [24, 128], strides = [1, 1]} : vector<216x128xf32> to vector<24x128xf32>
    %c0_15 = arith.constant 0 : index
    %c512 = arith.constant 512 : index
    %27 = vector.load %arg10[%c0_15, %c512] : memref<24x1152xf32, #tpu.memory_space<vmem>>, vector<24x128xf32>
    tpu.vector_store %arg10[%c0_15, %c512], %26 {strides = array<i32>} : memref<24x1152xf32, #tpu.memory_space<vmem>>, vector<24x128xf32>,
    %28 = vector.extract_strided_slice %17 {offsets = [120, 0], sizes = [24, 128], strides = [1, 1]} : vector<216x128xf32> to vector<24x128xf32>
    %c0_16 = arith.constant 0 : index
    %c640 = arith.constant 640 : index
    %29 = vector.load %arg10[%c0_16, %c640] : memref<24x1152xf32, #tpu.memory_space<vmem>>, vector<24x128xf32>
    tpu.vector_store %arg10[%c0_16, %c640], %28 {strides = array<i32>} : memref<24x1152xf32, #tpu.memory_space<vmem>>, vector<24x128xf32>,
    %30 = vector.extract_strided_slice %17 {offsets = [144, 0], sizes = [24, 128], strides = [1, 1]} : vector<216x128xf32> to vector<24x128xf32>
    %c0_17 = arith.constant 0 : index
    %c768 = arith.constant 768 : index
    %31 = vector.load %arg10[%c0_17, %c768] : memref<24x1152xf32, #tpu.memory_space<vmem>>, vector<24x128xf32>
    tpu.vector_store %arg10[%c0_17, %c768], %30 {strides = array<i32>} : memref<24x1152xf32, #tpu.memory_space<vmem>>, vector<24x128xf32>,
    %32 = vector.extract_strided_slice %17 {offsets = [168, 0], sizes = [24, 128], strides = [1, 1]} : vector<216x128xf32> to vector<24x128xf32>
    %c0_18 = arith.constant 0 : index
    %c896 = arith.constant 896 : index
    %33 = vector.load %arg10[%c0_18, %c896] : memref<24x1152xf32, #tpu.memory_space<vmem>>, vector<24x128xf32>
    tpu.vector_store %arg10[%c0_18, %c896], %32 {strides = array<i32>} : memref<24x1152xf32, #tpu.memory_space<vmem>>, vector<24x128xf32>,
    %34 = vector.extract_strided_slice %17 {offsets = [192, 0], sizes = [24, 128], strides = [1, 1]} : vector<216x128xf32> to vector<24x128xf32>
    %c0_19 = arith.constant 0 : index
    %c1024 = arith.constant 1024 : index
    %35 = vector.load %arg10[%c0_19, %c1024] : memref<24x1152xf32, #tpu.memory_space<vmem>>, vector<24x128xf32>
    tpu.vector_store %arg10[%c0_19, %c1024], %34 {strides = array<i32>} : memref<24x1152xf32, #tpu.memory_space<vmem>>, vector<24x128xf32>,
    %c0_i32_20 = arith.constant 0 : i32
    %36 = tpu.memref_slice %arg15[%c0_i32_20] : memref<3x!tpu.dma_semaphore, #tpu.memory_space<semaphore_mem>> -> memref<1x!tpu.dma_semaphore, #tpu.memory_space<semaphore_mem>>
    %37 = tpu.memref_squeeze %36 : memref<1x!tpu.dma_semaphore, #tpu.memory_space<semaphore_mem>> -> memref<!tpu.dma_semaphore, #tpu.memory_space<semaphore_mem>>
    tpu.wait_dma2 semaphore(%37 : memref<!tpu.dma_semaphore, #tpu.memory_space<semaphore_mem>>) src(%arg6 : memref<1152x128xbf16, #tpu.memory_space<any>>) dst(%arg12 : memref<1152x128xbf16, #tpu.memory_space<vmem>>)
    %c0_21 = arith.constant 0 : index
    %c0_22 = arith.constant 0 : index
    %38 = vector.load %arg10[%c0_21, %c0_22] : memref<24x1152xf32, #tpu.memory_space<vmem>>, vector<24x1152xf32>
    %39 = arith.truncf %38 : vector<24x1152xf32> to vector<24x1152xbf16>
    %c0_23 = arith.constant 0 : index
    %c0_24 = arith.constant 0 : index
    %40 = vector.load %arg12[%c0_23, %c0_24] : memref<1152x128xbf16, #tpu.memory_space<vmem>>, vector<1152x128xbf16>
    %cst_25 = arith.constant dense<0.000000e+00> : vector<24x128xf32>
    %41 = tpu.matmul %39, %40, %cst_25 {dimension_numbers = #tpu.dot_dimension_numbers<[1], [0], [0], [1], [0, 0, 1, 1], [], []>} : vector<24x1152xbf16>, vector<1152x128xbf16>, vector<24x128xf32> -> vector<24x128xf32>
    %c1 = arith.constant 1 : index
    %c0_26 = arith.constant 0 : index
    %c0_27 = arith.constant 0 : index
    %42 = vector.load %arg4[%c1, %c0_26, %c0_27] : memref<3x1x128xf32, #tpu.memory_space<vmem>>, vector<1x1x128xf32>
    %43 = vector.shape_cast %42 : vector<1x1x128xf32> to vector<1x128xf32>
    %44 = vector.broadcast %43 : vector<1x128xf32> to vector<24x128xf32>
    %45 = arith.addf %41, %44 : vector<24x128xf32>
    %cst_28 = arith.constant 0.000000e+00 : f32
    %46 = vector.broadcast %cst_28 : f32 to vector<24x128xf32>
    %47 = arith.maximumf %45, %46 : vector<24x128xf32>
    %c0_29 = arith.constant 0 : index
    %c0_30 = arith.constant 0 : index
    %48 = vector.load %arg3[%c0_29, %c0_30] : memref<72x24xbf16, #tpu.memory_space<vmem>>, vector<72x24xbf16>
    %49 = arith.truncf %47 : vector<24x128xf32> to vector<24x128xbf16>
    %cst_31 = arith.constant dense<0.000000e+00> : vector<72x128xf32>
    %50 = tpu.matmul %48, %49, %cst_31 {dimension_numbers = #tpu.dot_dimension_numbers<[1], [0], [0], [1], [0, 0, 1, 1], [], []>} : vector<72x24xbf16>, vector<24x128xbf16>, vector<72x128xf32> -> vector<72x128xf32>
    %51 = vector.extract_strided_slice %50 {offsets = [0, 0], sizes = [8, 128], strides = [1, 1]} : vector<72x128xf32> to vector<8x128xf32>
    %c0_32 = arith.constant 0 : index
    %c0_33 = arith.constant 0 : index
    %52 = vector.load %arg11[%c0_32, %c0_33] : memref<8x1152xf32, #tpu.memory_space<vmem>>, vector<8x128xf32>
    tpu.vector_store %arg11[%c0_32, %c0_33], %51 {strides = array<i32>} : memref<8x1152xf32, #tpu.memory_space<vmem>>, vector<8x128xf32>,
    %53 = vector.extract_strided_slice %50 {offsets = [8, 0], sizes = [8, 128], strides = [1, 1]} : vector<72x128xf32> to vector<8x128xf32>
    %c0_34 = arith.constant 0 : index
    %c128_35 = arith.constant 128 : index
    %54 = vector.load %arg11[%c0_34, %c128_35] : memref<8x1152xf32, #tpu.memory_space<vmem>>, vector<8x128xf32>
    tpu.vector_store %arg11[%c0_34, %c128_35], %53 {strides = array<i32>} : memref<8x1152xf32, #tpu.memory_space<vmem>>, vector<8x128xf32>,
    %55 = vector.extract_strided_slice %50 {offsets = [16, 0], sizes = [8, 128], strides = [1, 1]} : vector<72x128xf32> to vector<8x128xf32>
    %c0_36 = arith.constant 0 : index
    %c256_37 = arith.constant 256 : index
    %56 = vector.load %arg11[%c0_36, %c256_37] : memref<8x1152xf32, #tpu.memory_space<vmem>>, vector<8x128xf32>
    tpu.vector_store %arg11[%c0_36, %c256_37], %55 {strides = array<i32>} : memref<8x1152xf32, #tpu.memory_space<vmem>>, vector<8x128xf32>,
    %57 = vector.extract_strided_slice %50 {offsets = [24, 0], sizes = [8, 128], strides = [1, 1]} : vector<72x128xf32> to vector<8x128xf32>
    %c0_38 = arith.constant 0 : index
    %c384_39 = arith.constant 384 : index
    %58 = vector.load %arg11[%c0_38, %c384_39] : memref<8x1152xf32, #tpu.memory_space<vmem>>, vector<8x128xf32>
    tpu.vector_store %arg11[%c0_38, %c384_39], %57 {strides = array<i32>} : memref<8x1152xf32, #tpu.memory_space<vmem>>, vector<8x128xf32>,
    %59 = vector.extract_strided_slice %50 {offsets = [32, 0], sizes = [8, 128], strides = [1, 1]} : vector<72x128xf32> to vector<8x128xf32>
    %c0_40 = arith.constant 0 : index
    %c512_41 = arith.constant 512 : index
    %60 = vector.load %arg11[%c0_40, %c512_41] : memref<8x1152xf32, #tpu.memory_space<vmem>>, vector<8x128xf32>
    tpu.vector_store %arg11[%c0_40, %c512_41], %59 {strides = array<i32>} : memref<8x1152xf32, #tpu.memory_space<vmem>>, vector<8x128xf32>,
    %61 = vector.extract_strided_slice %50 {offsets = [40, 0], sizes = [8, 128], strides = [1, 1]} : vector<72x128xf32> to vector<8x128xf32>
    %c0_42 = arith.constant 0 : index
    %c640_43 = arith.constant 640 : index
    %62 = vector.load %arg11[%c0_42, %c640_43] : memref<8x1152xf32, #tpu.memory_space<vmem>>, vector<8x128xf32>
    tpu.vector_store %arg11[%c0_42, %c640_43], %61 {strides = array<i32>} : memref<8x1152xf32, #tpu.memory_space<vmem>>, vector<8x128xf32>,
    %63 = vector.extract_strided_slice %50 {offsets = [48, 0], sizes = [8, 128], strides = [1, 1]} : vector<72x128xf32> to vector<8x128xf32>
    %c0_44 = arith.constant 0 : index
    %c768_45 = arith.constant 768 : index
    %64 = vector.load %arg11[%c0_44, %c768_45] : memref<8x1152xf32, #tpu.memory_space<vmem>>, vector<8x128xf32>
    tpu.vector_store %arg11[%c0_44, %c768_45], %63 {strides = array<i32>} : memref<8x1152xf32, #tpu.memory_space<vmem>>, vector<8x128xf32>,
    %65 = vector.extract_strided_slice %50 {offsets = [56, 0], sizes = [8, 128], strides = [1, 1]} : vector<72x128xf32> to vector<8x128xf32>
    %c0_46 = arith.constant 0 : index
    %c896_47 = arith.constant 896 : index
    %66 = vector.load %arg11[%c0_46, %c896_47] : memref<8x1152xf32, #tpu.memory_space<vmem>>, vector<8x128xf32>
    tpu.vector_store %arg11[%c0_46, %c896_47], %65 {strides = array<i32>} : memref<8x1152xf32, #tpu.memory_space<vmem>>, vector<8x128xf32>,
    %67 = vector.extract_strided_slice %50 {offsets = [64, 0], sizes = [8, 128], strides = [1, 1]} : vector<72x128xf32> to vector<8x128xf32>
    %c0_48 = arith.constant 0 : index
    %c1024_49 = arith.constant 1024 : index
    %68 = vector.load %arg11[%c0_48, %c1024_49] : memref<8x1152xf32, #tpu.memory_space<vmem>>, vector<8x128xf32>
    tpu.vector_store %arg11[%c0_48, %c1024_49], %67 {strides = array<i32>} : memref<8x1152xf32, #tpu.memory_space<vmem>>, vector<8x128xf32>,
    %c1_i32_50 = arith.constant 1 : i32
    %69 = tpu.memref_slice %arg15[%c1_i32_50] : memref<3x!tpu.dma_semaphore, #tpu.memory_space<semaphore_mem>> -> memref<1x!tpu.dma_semaphore, #tpu.memory_space<semaphore_mem>>
    %70 = tpu.memref_squeeze %69 : memref<1x!tpu.dma_semaphore, #tpu.memory_space<semaphore_mem>> -> memref<!tpu.dma_semaphore, #tpu.memory_space<semaphore_mem>>
    tpu.wait_dma2 semaphore(%70 : memref<!tpu.dma_semaphore, #tpu.memory_space<semaphore_mem>>) src(%arg7 : memref<1152x128xbf16, #tpu.memory_space<any>>) dst(%arg13 : memref<1152x128xbf16, #tpu.memory_space<vmem>>)
    %c0_51 = arith.constant 0 : index
    %c0_52 = arith.constant 0 : index
    %71 = vector.load %arg11[%c0_51, %c0_52] : memref<8x1152xf32, #tpu.memory_space<vmem>>, vector<8x1152xf32>
    %72 = arith.truncf %71 : vector<8x1152xf32> to vector<8x1152xbf16>
    %c0_53 = arith.constant 0 : index
    %c0_54 = arith.constant 0 : index
    %73 = vector.load %arg13[%c0_53, %c0_54] : memref<1152x128xbf16, #tpu.memory_space<vmem>>, vector<1152x128xbf16>
    %cst_55 = arith.constant dense<0.000000e+00> : vector<8x128xf32>
    %74 = tpu.matmul %72, %73, %cst_55 {dimension_numbers = #tpu.dot_dimension_numbers<[1], [0], [0], [1], [0, 0, 1, 1], [], []>} : vector<8x1152xbf16>, vector<1152x128xbf16>, vector<8x128xf32> -> vector<8x128xf32>
    %c2 = arith.constant 2 : index
    %c0_56 = arith.constant 0 : index
    %c0_57 = arith.constant 0 : index
    %75 = vector.load %arg4[%c2, %c0_56, %c0_57] : memref<3x1x128xf32, #tpu.memory_space<vmem>>, vector<1x1x128xf32>
    %76 = vector.shape_cast %75 : vector<1x1x128xf32> to vector<1x128xf32>
    %77 = vector.broadcast %76 : vector<1x128xf32> to vector<8x128xf32>
    %78 = arith.addf %74, %77 : vector<8x128xf32>
    %cst_58 = arith.constant 0.000000e+00 : f32
    %79 = vector.broadcast %cst_58 : f32 to vector<8x128xf32>
    %80 = arith.maximumf %78, %79 : vector<8x128xf32>
    %c2_i32_59 = arith.constant 2 : i32
    %81 = tpu.memref_slice %arg15[%c2_i32_59] : memref<3x!tpu.dma_semaphore, #tpu.memory_space<semaphore_mem>> -> memref<1x!tpu.dma_semaphore, #tpu.memory_space<semaphore_mem>>
    %82 = tpu.memref_squeeze %81 : memref<1x!tpu.dma_semaphore, #tpu.memory_space<semaphore_mem>> -> memref<!tpu.dma_semaphore, #tpu.memory_space<semaphore_mem>>
    tpu.wait_dma2 semaphore(%82 : memref<!tpu.dma_semaphore, #tpu.memory_space<semaphore_mem>>) src(%arg8 : memref<128x128xbf16, #tpu.memory_space<any>>) dst(%arg14 : memref<128x128xbf16, #tpu.memory_space<vmem>>)
    %83 = arith.truncf %80 : vector<8x128xf32> to vector<8x128xbf16>
    %c0_60 = arith.constant 0 : index
    %c0_61 = arith.constant 0 : index
    %84 = vector.load %arg14[%c0_60, %c0_61] : memref<128x128xbf16, #tpu.memory_space<vmem>>, vector<128x128xbf16>
    %cst_62 = arith.constant dense<0.000000e+00> : vector<8x128xf32>
    %85 = tpu.matmul %83, %84, %cst_62 {dimension_numbers = #tpu.dot_dimension_numbers<[1], [0], [0], [1], [0, 0, 1, 1], [], []>} : vector<8x128xbf16>, vector<128x128xbf16>, vector<8x128xf32> -> vector<8x128xf32>
    %c0_63 = arith.constant 0 : index
    %c0_64 = arith.constant 0 : index
    %86 = vector.load %arg5[%c0_63, %c0_64] : memref<1x128xf32, #tpu.memory_space<vmem>>, vector<1x128xf32>
    %87 = vector.broadcast %86 : vector<1x128xf32> to vector<8x128xf32>
    %88 = arith.addf %85, %87 : vector<8x128xf32>
    %c0_65 = arith.constant 0 : index
    %c0_66 = arith.constant 0 : index
    %89 = vector.load %arg9[%c0_65, %c0_66] : memref<8x128xf32, #tpu.memory_space<vmem>>, vector<8x128xf32>
    tpu.vector_store %arg9[%c0_65, %c0_66], %88 {strides = array<i32>} : memref<8x128xf32, #tpu.memory_space<vmem>>, vector<8x128xf32>,
    return
  }
}

</mosaic_0001>

<llo_original>
// kernel: finetune_forward.1
$region0: #{finetune_forward.1}
  #allocation0 [shape = 'u32[]', space=smem, size = 0x4, offset = 0x4, fixed_abs, tag = 'smem constant byte address 0x4 - core index']
  #allocation1 [shape = 'u32[144,128]{1,0:T(1,128)}', space=vmem, size = 0x12000, scoped, tag = 'internal scratch']
  #allocation2 [shape = 'f32[24,1152]{1,0:T(8,128)}', space=vmem, size = 0x1b000, scoped, tag = 'scratch operand']
  #allocation3 [shape = 'f32[8,1152]{1,0:T(8,128)}', space=vmem, size = 0x9000, scoped, tag = 'scratch operand']
  #allocation4 [shape = 'bf16[1152,128]{1,0:T(8,128)(2,1)}', space=vmem, size = 0x48000, scoped, tag = 'scratch operand']
  #allocation5 [shape = 'bf16[1152,128]{1,0:T(8,128)(2,1)}', space=vmem, size = 0x48000, scoped, tag = 'scratch operand']
  #allocation6 [shape = 'bf16[128,128]{1,0:T(8,128)(2,1)}', space=vmem, size = 0x8000, scoped, tag = 'scratch operand']
  #allocation7 [shape = 's32[3]{0}', space=sflag, size = 0xc, scoped, tag = 'scratch operand']
  #allocation8 [shape = 's32[]', space=sflag, size = 0x4, offset = 0, fixed_abs, tag = 'sflag constant byte address 0x0 - dummy sync flag']
  #allocation9 [shape = 's32[]', space=sflag, size = 0x4, offset = 0, fixed_abs, tag = 'sflag constant byte address 0x0 - dummy sync flag']
  #allocation10 [shape = 's32[]', space=sflag, size = 0x4, offset = 0, fixed_abs, tag = 'sflag constant byte address 0x0 - dummy sync flag']
  %s0 = inlined_call_operand.vmem [shape: bf16[56,1152], index: 0, kind: input, shape index: {}]
  %s1 = inlined_call_operand.vmem [shape: bf16[1152,128], index: 1, kind: input, shape index: {}]
  %s2 = inlined_call_operand.vmem [shape: bf16[216,56], index: 2, kind: input, shape index: {}]
  %s3 = inlined_call_operand.vmem [shape: bf16[72,24], index: 3, kind: input, shape index: {}]
  %s4 = inlined_call_operand.vmem [shape: f32[3,1,128], index: 4, kind: input, shape index: {}]
  %s5 = inlined_call_operand.vmem [shape: f32[1,128], index: 5, kind: input, shape index: {}]
  %s6 = inlined_call_operand.vmem [shape: bf16[1152,128], index: 6, kind: input, shape index: {}]
  %s7 = inlined_call_operand.vmem [shape: bf16[1152,128], index: 7, kind: input, shape index: {}]
  %s8 = inlined_call_operand.vmem [shape: bf16[128,128], index: 8, kind: input, shape index: {}]
  %s9 = inlined_call_operand.vmem [shape: f32[8,128], index: 9, kind: output, shape index: {}]
  %s10 = sld [smem:[#allocation0]]
  $region136: #{finetune_forward.1} parent=0
    _
  %s12 = ssub.s32 1, %s10
  %s13 = scalar_select 0, %s12, %s10
  // Predicated region
  $region2: #{finetune_forward.1} parent=0 // pred_check
    _
  $region3: #{finetune_forward.1} parent=0 // pred_check_branch
    %15 = sbr.rel (0) target = $region5
  $region4: #{finetune_forward.1} parent=0 // pred_region
    _
  $region5: #{finetune_forward.1} parent=0 // pred_fallthru
    _
  // Predicated region
  $region6: #{finetune_forward.1} parent=0 // pred_check
    _
  $region7: #{finetune_forward.1} parent=0 // pred_check_branch
    %17 = sbr.rel (0) target = $region9
  $region8: #{finetune_forward.1} parent=0 // pred_region
    _
  $region9: #{finetune_forward.1} parent=0 // pred_fallthru
    _
  // Predicated region
  $region10: #{finetune_forward.1} parent=0 // pred_check
    _
  $region11: #{finetune_forward.1} parent=0 // pred_check_branch
    %19 = sbr.rel (0) target = $region13
  $region12: #{finetune_forward.1} parent=0 // pred_region
    _
  $region13: #{finetune_forward.1} parent=0 // pred_fallthru
    _
  // Predicated region
  $region14: #{finetune_forward.1} parent=0 // pred_check
    _
  $region15: #{finetune_forward.1} parent=0 // pred_check_branch
    %21 = sbr.rel (0) target = $region17
  $region16: #{finetune_forward.1} parent=0 // pred_region
    _
  $region17: #{finetune_forward.1} parent=0 // pred_fallthru
    _
  // Predicated region
  $region18: #{finetune_forward.1} parent=0 // pred_check
    _
  $region19: #{finetune_forward.1} parent=0 // pred_check_branch
    %23 = sbr.rel (0) target = $region21
  $region20: #{finetune_forward.1} parent=0 // pred_region
    _
  $region21: #{finetune_forward.1} parent=0 // pred_fallthru
    _
  // Predicated region
  $region22: #{finetune_forward.1} parent=0 // pred_check
    _
  $region23: #{finetune_forward.1} parent=0 // pred_check_branch
    %25 = sbr.rel (0) target = $region25
  $region24: #{finetune_forward.1} parent=0 // pred_region
    _
  $region25: #{finetune_forward.1} parent=0 // pred_fallthru
    _
  %p28 = scmp.lt.u32.totalorder 576, 8
  %p29 = pneg %p28
  // Predicated region
  $region26: #{finetune_forward.1} parent=0 // pred_check
    _
  $region27: #{finetune_forward.1} parent=0 // pred_check_branch
    %31 = sbr.rel (%p28) target = $region29
  $region28: #{finetune_forward.1} parent=0 // pred_region
    %s47 = sand.u32 576, 7
    %p48 = scmp.eq.s32.totalorder %s47, 0
    // Predicated region
    $region41: #{finetune_forward.1} parent=28 // pred_check
      %p49 = pneg %p48
    $region42: #{finetune_forward.1} parent=28 // pred_check_branch
      %51 = sbr.rel (%p49) target = $region44
    $region43: #{finetune_forward.1} parent=28 // pred_region
      loop: start=0, step=1, limit=1
      $region45: #{finetune_forward.1} parent=43 // loop_pre_header
        _
      $region46: #{finetune_forward.1} parent=43 // loop_header
        %s53 = sphi 0, %s57
        %p54 = scmp.ge.s32.totalorder %s53, 1
        %s58 = sphi %s6, %s6
        %s59 = sphi [#allocation4], [#allocation4]
      $region47: #{finetune_forward.1} parent=43 // loop_header_branch
        %56 = sbr.rel (%p54) target = $region51
      $region48: #{finetune_forward.1} parent=43 // loop_body
        %v60 = vld [vmem:[%s58] sm:$0xff]
        %61 = vst [vmem:[%s59] sm:$0xff] %v60
        %v62 = vld [vmem:[%s58 + $0x8] sm:$0xff]
        %63 = vst [vmem:[%s59 + $0x8] sm:$0xff] %v62
        %v64 = vld [vmem:[%s58 + $0x10] sm:$0xff]
        %65 = vst [vmem:[%s59 + $0x10] sm:$0xff] %v64
        %v66 = vld [vmem:[%s58 + $0x18] sm:$0xff]
        %67 = vst [vmem:[%s59 + $0x18] sm:$0xff] %v66
        %v68 = vld [vmem:[%s58 + $0x20] sm:$0xff]
        %69 = vst [vmem:[%s59 + $0x20] sm:$0xff] %v68
        %v70 = vld [vmem:[%s58 + $0x28] sm:$0xff]
        %71 = vst [vmem:[%s59 + $0x28] sm:$0xff] %v70
        %v72 = vld [vmem:[%s58 + $0x30] sm:$0xff]
        %73 = vst [vmem:[%s59 + $0x30] sm:$0xff] %v72
        %v74 = vld [vmem:[%s58 + $0x38] sm:$0xff]
        %75 = vst [vmem:[%s59 + $0x38] sm:$0xff] %v74
        %v76 = vld [vmem:[%s58 + $0x40] sm:$0xff]
        %77 = vst [vmem:[%s59 + $0x40] sm:$0xff] %v76
        %v78 = vld [vmem:[%s58 + $0x48] sm:$0xff]
        %79 = vst [vmem:[%s59 + $0x48] sm:$0xff] %v78
        %v80 = vld [vmem:[%s58 + $0x50] sm:$0xff]
        %81 = vst [vmem:[%s59 + $0x50] sm:$0xff] %v80
        %v82 = vld [vmem:[%s58 + $0x58] sm:$0xff]
        %83 = vst [vmem:[%s59 + $0x58] sm:$0xff] %v82
        %v84 = vld [vmem:[%s58 + $0x60] sm:$0xff]
        %85 = vst [vmem:[%s59 + $0x60] sm:$0xff] %v84
        %v86 = vld [vmem:[%s58 + $0x68] sm:$0xff]
        %87 = vst [vmem:[%s59 + $0x68] sm:$0xff] %v86
        %v88 = vld [vmem:[%s58 + $0x70] sm:$0xff]
        %89 = vst [vmem:[%s59 + $0x70] sm:$0xff] %v88
        %v90 = vld [vmem:[%s58 + $0x78] sm:$0xff]
        %91 = vst [vmem:[%s59 + $0x78] sm:$0xff] %v90
        %v92 = vld [vmem:[%s58 + $0x80] sm:$0xff]
        %93 = vst [vmem:[%s59 + $0x80] sm:$0xff] %v92
        %v94 = vld [vmem:[%s58 + $0x88] sm:$0xff]
        %95 = vst [vmem:[%s59 + $0x88] sm:$0xff] %v94
        %v96 = vld [vmem:[%s58 + $0x90] sm:$0xff]
        %97 = vst [vmem:[%s59 + $0x90] sm:$0xff] %v96
        %v98 = vld [vmem:[%s58 + $0x98] sm:$0xff]
        %99 = vst [vmem:[%s59 + $0x98] sm:$0xff] %v98
        %v100 = vld [vmem:[%s58 + $0xa0] sm:$0xff]
        %101 = vst [vmem:[%s59 + $0xa0] sm:$0xff] %v100
        %v102 = vld [vmem:[%s58 + $0xa8] sm:$0xff]
        %103 = vst [vmem:[%s59 + $0xa8] sm:$0xff] %v102
        %v104 = vld [vmem:[%s58 + $0xb0] sm:$0xff]
        %105 = vst [vmem:[%s59 + $0xb0] sm:$0xff] %v104
        %v106 = vld [vmem:[%s58 + $0xb8] sm:$0xff]
        %107 = vst [vmem:[%s59 + $0xb8] sm:$0xff] %v106
        %v108 = vld [vmem:[%s58 + $0xc0] sm:$0xff]
        %109 = vst [vmem:[%s59 + $0xc0] sm:$0xff] %v108
        %v110 = vld [vmem:[%s58 + $0xc8] sm:$0xff]
        %111 = vst [vmem:[%s59 + $0xc8] sm:$0xff] %v110
        %v112 = vld [vmem:[%s58 + $0xd0] sm:$0xff]
        %113 = vst [vmem:[%s59 + $0xd0] sm:$0xff] %v112
        %v114 = vld [vmem:[%s58 + $0xd8] sm:$0xff]
        %115 = vst [vmem:[%s59 + $0xd8] sm:$0xff] %v114
        %v116 = vld [vmem:[%s58 + $0xe0] sm:$0xff]
        %117 = vst [vmem:[%s59 + $0xe0] sm:$0xff] %v116
        %v118 = vld [vmem:[%s58 + $0xe8] sm:$0xff]
        %119 = vst [vmem:[%s59 + $0xe8] sm:$0xff] %v118
        %v120 = vld [vmem:[%s58 + $0xf0] sm:$0xff]
        %121 = vst [vmem:[%s59 + $0xf0] sm:$0xff] %v120
        %v122 = vld [vmem:[%s58 + $0xf8] sm:$0xff]
        %123 = vst [vmem:[%s59 + $0xf8] sm:$0xff] %v122
        %v124 = vld [vmem:[%s58 + $0x100] sm:$0xff]
        %125 = vst [vmem:[%s59 + $0x100] sm:$0xff] %v124
        %v126 = vld [vmem:[%s58 + $0x108] sm:$0xff]
        %127 = vst [vmem:[%s59 + $0x108] sm:$0xff] %v126
        %v128 = vld [vmem:[%s58 + $0x110] sm:$0xff]
        %129 = vst [vmem:[%s59 + $0x110] sm:$0xff] %v128
        %v130 = vld [vmem:[%s58 + $0x118] sm:$0xff]
        %131 = vst [vmem:[%s59 + $0x118] sm:$0xff] %v130
        %v132 = vld [vmem:[%s58 + $0x120] sm:$0xff]
        %133 = vst [vmem:[%s59 + $0x120] sm:$0xff] %v132
        %v134 = vld [vmem:[%s58 + $0x128] sm:$0xff]
        %135 = vst [vmem:[%s59 + $0x128] sm:$0xff] %v134
        %v136 = vld [vmem:[%s58 + $0x130] sm:$0xff]
        %137 = vst [vmem:[%s59 + $0x130] sm:$0xff] %v136
        %v138 = vld [vmem:[%s58 + $0x138] sm:$0xff]
        %139 = vst [vmem:[%s59 + $0x138] sm:$0xff] %v138
        %v140 = vld [vmem:[%s58 + $0x140] sm:$0xff]
        %141 = vst [vmem:[%s59 + $0x140] sm:$0xff] %v140
        %v142 = vld [vmem:[%s58 + $0x148] sm:$0xff]
        %143 = vst [vmem:[%s59 + $0x148] sm:$0xff] %v142
        %v144 = vld [vmem:[%s58 + $0x150] sm:$0xff]
        %145 = vst [vmem:[%s59 + $0x150] sm:$0xff] %v144
        %v146 = vld [vmem:[%s58 + $0x158] sm:$0xff]
        %147 = vst [vmem:[%s59 + $0x158] sm:$0xff] %v146
        %v148 = vld [vmem:[%s58 + $0x160] sm:$0xff]
        %149 = vst [vmem:[%s59 + $0x160] sm:$0xff] %v148
        %v150 = vld [vmem:[%s58 + $0x168] sm:$0xff]
        %151 = vst [vmem:[%s59 + $0x168] sm:$0xff] %v150
        %v152 = vld [vmem:[%s58 + $0x170] sm:$0xff]
        %153 = vst [vmem:[%s59 + $0x170] sm:$0xff] %v152
        %v154 = vld [vmem:[%s58 + $0x178] sm:$0xff]
        %155 = vst [vmem:[%s59 + $0x178] sm:$0xff] %v154
        %v156 = vld [vmem:[%s58 + $0x180] sm:$0xff]
        %157 = vst [vmem:[%s59 + $0x180] sm:$0xff] %v156
        %v158 = vld [vmem:[%s58 + $0x188] sm:$0xff]
        %159 = vst [vmem:[%s59 + $0x188] sm:$0xff] %v158
        %v160 = vld [vmem:[%s58 + $0x190] sm:$0xff]
        %161 = vst [vmem:[%s59 + $0x190] sm:$0xff] %v160
        %v162 = vld [vmem:[%s58 + $0x198] sm:$0xff]
        %163 = vst [vmem:[%s59 + $0x198] sm:$0xff] %v162
        %v164 = vld [vmem:[%s58 + $0x1a0] sm:$0xff]
        %165 = vst [vmem:[%s59 + $0x1a0] sm:$0xff] %v164
        %v166 = vld [vmem:[%s58 + $0x1a8] sm:$0xff]
        %167 = vst [vmem:[%s59 + $0x1a8] sm:$0xff] %v166
        %v168 = vld [vmem:[%s58 + $0x1b0] sm:$0xff]
        %169 = vst [vmem:[%s59 + $0x1b0] sm:$0xff] %v168
        %v170 = vld [vmem:[%s58 + $0x1b8] sm:$0xff]
        %171 = vst [vmem:[%s59 + $0x1b8] sm:$0xff] %v170
        %v172 = vld [vmem:[%s58 + $0x1c0] sm:$0xff]
        %173 = vst [vmem:[%s59 + $0x1c0] sm:$0xff] %v172
        %v174 = vld [vmem:[%s58 + $0x1c8] sm:$0xff]
        %175 = vst [vmem:[%s59 + $0x1c8] sm:$0xff] %v174
        %v176 = vld [vmem:[%s58 + $0x1d0] sm:$0xff]
        %177 = vst [vmem:[%s59 + $0x1d0] sm:$0xff] %v176
        %v178 = vld [vmem:[%s58 + $0x1d8] sm:$0xff]
        %179 = vst [vmem:[%s59 + $0x1d8] sm:$0xff] %v178
        %v180 = vld [vmem:[%s58 + $0x1e0] sm:$0xff]
        %181 = vst [vmem:[%s59 + $0x1e0] sm:$0xff] %v180
        %v182 = vld [vmem:[%s58 + $0x1e8] sm:$0xff]
        %183 = vst [vmem:[%s59 + $0x1e8] sm:$0xff] %v182
        %v184 = vld [vmem:[%s58 + $0x1f0] sm:$0xff]
        %185 = vst [vmem:[%s59 + $0x1f0] sm:$0xff] %v184
        %v186 = vld [vmem:[%s58 + $0x1f8] sm:$0xff]
        %187 = vst [vmem:[%s59 + $0x1f8] sm:$0xff] %v186
        %v188 = vld [vmem:[%s58 + $0x200] sm:$0xff]
        %189 = vst [vmem:[%s59 + $0x200] sm:$0xff] %v188
        %v190 = vld [vmem:[%s58 + $0x208] sm:$0xff]
        %191 = vst [vmem:[%s59 + $0x208] sm:$0xff] %v190
        %v192 = vld [vmem:[%s58 + $0x210] sm:$0xff]
        %193 = vst [vmem:[%s59 + $0x210] sm:$0xff] %v192
        %v194 = vld [vmem:[%s58 + $0x218] sm:$0xff]
        %195 = vst [vmem:[%s59 + $0x218] sm:$0xff] %v194
        %v196 = vld [vmem:[%s58 + $0x220] sm:$0xff]
        %197 = vst [vmem:[%s59 + $0x220] sm:$0xff] %v196
        %v198 = vld [vmem:[%s58 + $0x228] sm:$0xff]
        %199 = vst [vmem:[%s59 + $0x228] sm:$0xff] %v198
        %v200 = vld [vmem:[%s58 + $0x230] sm:$0xff]
        %201 = vst [vmem:[%s59 + $0x230] sm:$0xff] %v200
        %v202 = vld [vmem:[%s58 + $0x238] sm:$0xff]
        %203 = vst [vmem:[%s59 + $0x238] sm:$0xff] %v202
      $region49: #{finetune_forward.1} parent=43 // loop_footer
        %s57 = sadd.s32 1, %s53
      $region50: #{finetune_forward.1} parent=43 // loop_footer_branch
        %52 = sbr.rel target = $region46
      $region51: #{finetune_forward.1} parent=43 // loop_exit
        _
    $region44: #{finetune_forward.1} parent=28 // pred_fallthru
      _
    %p204 = pneg %p48
    // Predicated region
    $region52: #{finetune_forward.1} parent=28 // pred_check
      _
    $region53: #{finetune_forward.1} parent=28 // pred_check_branch
      %206 = sbr.rel (%p48) target = $region55
    $region54: #{finetune_forward.1} parent=28 // pred_region
      %s207 = sand.u32 576, 7
    $region55: #{finetune_forward.1} parent=28 // pred_fallthru
      _
  $region29: #{finetune_forward.1} parent=0 // pred_fallthru
    _
  // Predicated region
  $region30: #{finetune_forward.1} parent=0 // pred_check
    %p32 = pneg %p28
  $region31: #{finetune_forward.1} parent=0 // pred_check_branch
    %34 = sbr.rel (%p32) target = $region33
  $region32: #{finetune_forward.1} parent=0 // pred_region
    %s35 = sshll.u32 1, 576
    %s36 = ssub.s32 %s35, 1
    loop: start=0, step=1, limit=1
    $region34: #{finetune_forward.1} parent=32 // loop_pre_header
      _
    $region35: #{finetune_forward.1} parent=32 // loop_header
      %s38 = sphi 0, %s42
      %p39 = scmp.ge.s32.totalorder %s38, 1
      %s43 = sphi %s6, %s6
      %s44 = sphi [#allocation4], [#allocation4]
    $region36: #{finetune_forward.1} parent=32 // loop_header_branch
      %41 = sbr.rel (%p39) target = $region40
    $region37: #{finetune_forward.1} parent=32 // loop_body
      %v45 = vld [vmem:[%s43] sm:%s36]
      %46 = vst [vmem:[%s44] sm:%s36] %v45
    $region38: #{finetune_forward.1} parent=32 // loop_footer
      %s42 = sadd.s32 1, %s38
    $region39: #{finetune_forward.1} parent=32 // loop_footer_branch
      %37 = sbr.rel target = $region35
    $region40: #{finetune_forward.1} parent=32 // loop_exit
      _
  $region33: #{finetune_forward.1} parent=0 // pred_fallthru
    _
  // Predicated region
  $region56: #{finetune_forward.1} parent=0 // pred_check
    _
  $region57: #{finetune_forward.1} parent=0 // pred_check_branch
    %210 = sbr.rel (0) target = $region59
  $region58: #{finetune_forward.1} parent=0 // pred_region
    %211 = vsyncadd [#allocation7], 9216
  $region59: #{finetune_forward.1} parent=0 // pred_fallthru
    _
  %s212 = scalar_lea.sflag [#allocation7], 1
  %p214 = scmp.lt.u32.totalorder 576, 8
  %p215 = pneg %p214
  // Predicated region
  $region60: #{finetune_forward.1} parent=0 // pred_check
    _
  $region61: #{finetune_forward.1} parent=0 // pred_check_branch
    %217 = sbr.rel (%p214) target = $region63
  $region62: #{finetune_forward.1} parent=0 // pred_region
    %s233 = sand.u32 576, 7
    %p234 = scmp.eq.s32.totalorder %s233, 0
    // Predicated region
    $region75: #{finetune_forward.1} parent=62 // pred_check
      %p235 = pneg %p234
    $region76: #{finetune_forward.1} parent=62 // pred_check_branch
      %237 = sbr.rel (%p235) target = $region78
    $region77: #{finetune_forward.1} parent=62 // pred_region
      loop: start=0, step=1, limit=1
      $region79: #{finetune_forward.1} parent=77 // loop_pre_header
        _
      $region80: #{finetune_forward.1} parent=77 // loop_header
        %s239 = sphi 0, %s243
        %p240 = scmp.ge.s32.totalorder %s239, 1
        %s244 = sphi %s7, %s7
        %s245 = sphi [#allocation5], [#allocation5]
      $region81: #{finetune_forward.1} parent=77 // loop_header_branch
        %242 = sbr.rel (%p240) target = $region85
      $region82: #{finetune_forward.1} parent=77 // loop_body
        %v246 = vld [vmem:[%s244] sm:$0xff]
        %247 = vst [vmem:[%s245] sm:$0xff] %v246
        %v248 = vld [vmem:[%s244 + $0x8] sm:$0xff]
        %249 = vst [vmem:[%s245 + $0x8] sm:$0xff] %v248
        %v250 = vld [vmem:[%s244 + $0x10] sm:$0xff]
        %251 = vst [vmem:[%s245 + $0x10] sm:$0xff] %v250
        %v252 = vld [vmem:[%s244 + $0x18] sm:$0xff]
        %253 = vst [vmem:[%s245 + $0x18] sm:$0xff] %v252
        %v254 = vld [vmem:[%s244 + $0x20] sm:$0xff]
        %255 = vst [vmem:[%s245 + $0x20] sm:$0xff] %v254
        %v256 = vld [vmem:[%s244 + $0x28] sm:$0xff]
        %257 = vst [vmem:[%s245 + $0x28] sm:$0xff] %v256
        %v258 = vld [vmem:[%s244 + $0x30] sm:$0xff]
        %259 = vst [vmem:[%s245 + $0x30] sm:$0xff] %v258
        %v260 = vld [vmem:[%s244 + $0x38] sm:$0xff]
        %261 = vst [vmem:[%s245 + $0x38] sm:$0xff] %v260
        %v262 = vld [vmem:[%s244 + $0x40] sm:$0xff]
        %263 = vst [vmem:[%s245 + $0x40] sm:$0xff] %v262
        %v264 = vld [vmem:[%s244 + $0x48] sm:$0xff]
        %265 = vst [vmem:[%s245 + $0x48] sm:$0xff] %v264
        %v266 = vld [vmem:[%s244 + $0x50] sm:$0xff]
        %267 = vst [vmem:[%s245 + $0x50] sm:$0xff] %v266
        %v268 = vld [vmem:[%s244 + $0x58] sm:$0xff]
        %269 = vst [vmem:[%s245 + $0x58] sm:$0xff] %v268
        %v270 = vld [vmem:[%s244 + $0x60] sm:$0xff]
        %271 = vst [vmem:[%s245 + $0x60] sm:$0xff] %v270
        %v272 = vld [vmem:[%s244 + $0x68] sm:$0xff]
        %273 = vst [vmem:[%s245 + $0x68] sm:$0xff] %v272
        %v274 = vld [vmem:[%s244 + $0x70] sm:$0xff]
        %275 = vst [vmem:[%s245 + $0x70] sm:$0xff] %v274
        %v276 = vld [vmem:[%s244 + $0x78] sm:$0xff]
        %277 = vst [vmem:[%s245 + $0x78] sm:$0xff] %v276
        %v278 = vld [vmem:[%s244 + $0x80] sm:$0xff]
        %279 = vst [vmem:[%s245 + $0x80] sm:$0xff] %v278
        %v280 = vld [vmem:[%s244 + $0x88] sm:$0xff]
        %281 = vst [vmem:[%s245 + $0x88] sm:$0xff] %v280
        %v282 = vld [vmem:[%s244 + $0x90] sm:$0xff]
        %283 = vst [vmem:[%s245 + $0x90] sm:$0xff] %v282
        %v284 = vld [vmem:[%s244 + $0x98] sm:$0xff]
        %285 = vst [vmem:[%s245 + $0x98] sm:$0xff] %v284
        %v286 = vld [vmem:[%s244 + $0xa0] sm:$0xff]
        %287 = vst [vmem:[%s245 + $0xa0] sm:$0xff] %v286
        %v288 = vld [vmem:[%s244 + $0xa8] sm:$0xff]
        %289 = vst [vmem:[%s245 + $0xa8] sm:$0xff] %v288
        %v290 = vld [vmem:[%s244 + $0xb0] sm:$0xff]
        %291 = vst [vmem:[%s245 + $0xb0] sm:$0xff] %v290
        %v292 = vld [vmem:[%s244 + $0xb8] sm:$0xff]
        %293 = vst [vmem:[%s245 + $0xb8] sm:$0xff] %v292
        %v294 = vld [vmem:[%s244 + $0xc0] sm:$0xff]
        %295 = vst [vmem:[%s245 + $0xc0] sm:$0xff] %v294
        %v296 = vld [vmem:[%s244 + $0xc8] sm:$0xff]
        %297 = vst [vmem:[%s245 + $0xc8] sm:$0xff] %v296
        %v298 = vld [vmem:[%s244 + $0xd0] sm:$0xff]
        %299 = vst [vmem:[%s245 + $0xd0] sm:$0xff] %v298
        %v300 = vld [vmem:[%s244 + $0xd8] sm:$0xff]
        %301 = vst [vmem:[%s245 + $0xd8] sm:$0xff] %v300
        %v302 = vld [vmem:[%s244 + $0xe0] sm:$0xff]
        %303 = vst [vmem:[%s245 + $0xe0] sm:$0xff] %v302
        %v304 = vld [vmem:[%s244 + $0xe8] sm:$0xff]
        %305 = vst [vmem:[%s245 + $0xe8] sm:$0xff] %v304
        %v306 = vld [vmem:[%s244 + $0xf0] sm:$0xff]
        %307 = vst [vmem:[%s245 + $0xf0] sm:$0xff] %v306
        %v308 = vld [vmem:[%s244 + $0xf8] sm:$0xff]
        %309 = vst [vmem:[%s245 + $0xf8] sm:$0xff] %v308
        %v310 = vld [vmem:[%s244 + $0x100] sm:$0xff]
        %311 = vst [vmem:[%s245 + $0x100] sm:$0xff] %v310
        %v312 = vld [vmem:[%s244 + $0x108] sm:$0xff]
        %313 = vst [vmem:[%s245 + $0x108] sm:$0xff] %v312
        %v314 = vld [vmem:[%s244 + $0x110] sm:$0xff]
        %315 = vst [vmem:[%s245 + $0x110] sm:$0xff] %v314
        %v316 = vld [vmem:[%s244 + $0x118] sm:$0xff]
        %317 = vst [vmem:[%s245 + $0x118] sm:$0xff] %v316
        %v318 = vld [vmem:[%s244 + $0x120] sm:$0xff]
        %319 = vst [vmem:[%s245 + $0x120] sm:$0xff] %v318
        %v320 = vld [vmem:[%s244 + $0x128] sm:$0xff]
        %321 = vst [vmem:[%s245 + $0x128] sm:$0xff] %v320
        %v322 = vld [vmem:[%s244 + $0x130] sm:$0xff]
        %323 = vst [vmem:[%s245 + $0x130] sm:$0xff] %v322
        %v324 = vld [vmem:[%s244 + $0x138] sm:$0xff]
        %325 = vst [vmem:[%s245 + $0x138] sm:$0xff] %v324
        %v326 = vld [vmem:[%s244 + $0x140] sm:$0xff]
        %327 = vst [vmem:[%s245 + $0x140] sm:$0xff] %v326
        %v328 = vld [vmem:[%s244 + $0x148] sm:$0xff]
        %329 = vst [vmem:[%s245 + $0x148] sm:$0xff] %v328
        %v330 = vld [vmem:[%s244 + $0x150] sm:$0xff]
        %331 = vst [vmem:[%s245 + $0x150] sm:$0xff] %v330
        %v332 = vld [vmem:[%s244 + $0x158] sm:$0xff]
        %333 = vst [vmem:[%s245 + $0x158] sm:$0xff] %v332
        %v334 = vld [vmem:[%s244 + $0x160] sm:$0xff]
        %335 = vst [vmem:[%s245 + $0x160] sm:$0xff] %v334
        %v336 = vld [vmem:[%s244 + $0x168] sm:$0xff]
        %337 = vst [vmem:[%s245 + $0x168] sm:$0xff] %v336
        %v338 = vld [vmem:[%s244 + $0x170] sm:$0xff]
        %339 = vst [vmem:[%s245 + $0x170] sm:$0xff] %v338
        %v340 = vld [vmem:[%s244 + $0x178] sm:$0xff]
        %341 = vst [vmem:[%s245 + $0x178] sm:$0xff] %v340
        %v342 = vld [vmem:[%s244 + $0x180] sm:$0xff]
        %343 = vst [vmem:[%s245 + $0x180] sm:$0xff] %v342
        %v344 = vld [vmem:[%s244 + $0x188] sm:$0xff]
        %345 = vst [vmem:[%s245 + $0x188] sm:$0xff] %v344
        %v346 = vld [vmem:[%s244 + $0x190] sm:$0xff]
        %347 = vst [vmem:[%s245 + $0x190] sm:$0xff] %v346
        %v348 = vld [vmem:[%s244 + $0x198] sm:$0xff]
        %349 = vst [vmem:[%s245 + $0x198] sm:$0xff] %v348
        %v350 = vld [vmem:[%s244 + $0x1a0] sm:$0xff]
        %351 = vst [vmem:[%s245 + $0x1a0] sm:$0xff] %v350
        %v352 = vld [vmem:[%s244 + $0x1a8] sm:$0xff]
        %353 = vst [vmem:[%s245 + $0x1a8] sm:$0xff] %v352
        %v354 = vld [vmem:[%s244 + $0x1b0] sm:$0xff]
        %355 = vst [vmem:[%s245 + $0x1b0] sm:$0xff] %v354
        %v356 = vld [vmem:[%s244 + $0x1b8] sm:$0xff]
        %357 = vst [vmem:[%s245 + $0x1b8] sm:$0xff] %v356
        %v358 = vld [vmem:[%s244 + $0x1c0] sm:$0xff]
        %359 = vst [vmem:[%s245 + $0x1c0] sm:$0xff] %v358
        %v360 = vld [vmem:[%s244 + $0x1c8] sm:$0xff]
        %361 = vst [vmem:[%s245 + $0x1c8] sm:$0xff] %v360
        %v362 = vld [vmem:[%s244 + $0x1d0] sm:$0xff]
        %363 = vst [vmem:[%s245 + $0x1d0] sm:$0xff] %v362
        %v364 = vld [vmem:[%s244 + $0x1d8] sm:$0xff]
        %365 = vst [vmem:[%s245 + $0x1d8] sm:$0xff] %v364
        %v366 = vld [vmem:[%s244 + $0x1e0] sm:$0xff]
        %367 = vst [vmem:[%s245 + $0x1e0] sm:$0xff] %v366
        %v368 = vld [vmem:[%s244 + $0x1e8] sm:$0xff]
        %369 = vst [vmem:[%s245 + $0x1e8] sm:$0xff] %v368
        %v370 = vld [vmem:[%s244 + $0x1f0] sm:$0xff]
        %371 = vst [vmem:[%s245 + $0x1f0] sm:$0xff] %v370
        %v372 = vld [vmem:[%s244 + $0x1f8] sm:$0xff]
        %373 = vst [vmem:[%s245 + $0x1f8] sm:$0xff] %v372
        %v374 = vld [vmem:[%s244 + $0x200] sm:$0xff]
        %375 = vst [vmem:[%s245 + $0x200] sm:$0xff] %v374
        %v376 = vld [vmem:[%s244 + $0x208] sm:$0xff]
        %377 = vst [vmem:[%s245 + $0x208] sm:$0xff] %v376
        %v378 = vld [vmem:[%s244 + $0x210] sm:$0xff]
        %379 = vst [vmem:[%s245 + $0x210] sm:$0xff] %v378
        %v380 = vld [vmem:[%s244 + $0x218] sm:$0xff]
        %381 = vst [vmem:[%s245 + $0x218] sm:$0xff] %v380
        %v382 = vld [vmem:[%s244 + $0x220] sm:$0xff]
        %383 = vst [vmem:[%s245 + $0x220] sm:$0xff] %v382
        %v384 = vld [vmem:[%s244 + $0x228] sm:$0xff]
        %385 = vst [vmem:[%s245 + $0x228] sm:$0xff] %v384
        %v386 = vld [vmem:[%s244 + $0x230] sm:$0xff]
        %387 = vst [vmem:[%s245 + $0x230] sm:$0xff] %v386
        %v388 = vld [vmem:[%s244 + $0x238] sm:$0xff]
        %389 = vst [vmem:[%s245 + $0x238] sm:$0xff] %v388
      $region83: #{finetune_forward.1} parent=77 // loop_footer
        %s243 = sadd.s32 1, %s239
      $region84: #{finetune_forward.1} parent=77 // loop_footer_branch
        %238 = sbr.rel target = $region80
      $region85: #{finetune_forward.1} parent=77 // loop_exit
        _
    $region78: #{finetune_forward.1} parent=62 // pred_fallthru
      _
    %p390 = pneg %p234
    // Predicated region
    $region86: #{finetune_forward.1} parent=62 // pred_check
      _
    $region87: #{finetune_forward.1} parent=62 // pred_check_branch
      %392 = sbr.rel (%p234) target = $region89
    $region88: #{finetune_forward.1} parent=62 // pred_region
      %s393 = sand.u32 576, 7
    $region89: #{finetune_forward.1} parent=62 // pred_fallthru
      _
  $region63: #{finetune_forward.1} parent=0 // pred_fallthru
    _
  // Predicated region
  $region64: #{finetune_forward.1} parent=0 // pred_check
    %p218 = pneg %p214
  $region65: #{finetune_forward.1} parent=0 // pred_check_branch
    %220 = sbr.rel (%p218) target = $region67
  $region66: #{finetune_forward.1} parent=0 // pred_region
    %s221 = sshll.u32 1, 576
    %s222 = ssub.s32 %s221, 1
    loop: start=0, step=1, limit=1
    $region68: #{finetune_forward.1} parent=66 // loop_pre_header
      _
    $region69: #{finetune_forward.1} parent=66 // loop_header
      %s224 = sphi 0, %s228
      %p225 = scmp.ge.s32.totalorder %s224, 1
      %s229 = sphi %s7, %s7
      %s230 = sphi [#allocation5], [#allocation5]
    $region70: #{finetune_forward.1} parent=66 // loop_header_branch
      %227 = sbr.rel (%p225) target = $region74
    $region71: #{finetune_forward.1} parent=66 // loop_body
      %v231 = vld [vmem:[%s229] sm:%s222]
      %232 = vst [vmem:[%s230] sm:%s222] %v231
    $region72: #{finetune_forward.1} parent=66 // loop_footer
      %s228 = sadd.s32 1, %s224
    $region73: #{finetune_forward.1} parent=66 // loop_footer_branch
      %223 = sbr.rel target = $region69
    $region74: #{finetune_forward.1} parent=66 // loop_exit
      _
  $region67: #{finetune_forward.1} parent=0 // pred_fallthru
    _
  // Predicated region
  $region90: #{finetune_forward.1} parent=0 // pred_check
    _
  $region91: #{finetune_forward.1} parent=0 // pred_check_branch
    %396 = sbr.rel (0) target = $region93
  $region92: #{finetune_forward.1} parent=0 // pred_region
    %397 = vsyncadd %s212, 9216
  $region93: #{finetune_forward.1} parent=0 // pred_fallthru
    _
  %s398 = scalar_lea.sflag [#allocation7], 2
  %p400 = scmp.lt.u32.totalorder 64, 8
  %p401 = pneg %p400
  // Predicated region
  $region94: #{finetune_forward.1} parent=0 // pred_check
    _
  $region95: #{finetune_forward.1} parent=0 // pred_check_branch
    %403 = sbr.rel (%p400) target = $region97
  $region96: #{finetune_forward.1} parent=0 // pred_region
    %s419 = sand.u32 64, 7
    %p420 = scmp.eq.s32.totalorder %s419, 0
    // Predicated region
    $region109: #{finetune_forward.1} parent=96 // pred_check
      %p421 = pneg %p420
    $region110: #{finetune_forward.1} parent=96 // pred_check_branch
      %423 = sbr.rel (%p421) target = $region112
    $region111: #{finetune_forward.1} parent=96 // pred_region
      loop: start=0, step=1, limit=1
      $region113: #{finetune_forward.1} parent=111 // loop_pre_header
        _
      $region114: #{finetune_forward.1} parent=111 // loop_header
        %s425 = sphi 0, %s429
        %p426 = scmp.ge.s32.totalorder %s425, 1
        %s430 = sphi %s8, %s8
        %s431 = sphi [#allocation6], [#allocation6]
      $region115: #{finetune_forward.1} parent=111 // loop_header_branch
        %428 = sbr.rel (%p426) target = $region119
      $region116: #{finetune_forward.1} parent=111 // loop_body
        %v432 = vld [vmem:[%s430] sm:$0xff]
        %433 = vst [vmem:[%s431] sm:$0xff] %v432
        %v434 = vld [vmem:[%s430 + $0x8] sm:$0xff]
        %435 = vst [vmem:[%s431 + $0x8] sm:$0xff] %v434
        %v436 = vld [vmem:[%s430 + $0x10] sm:$0xff]
        %437 = vst [vmem:[%s431 + $0x10] sm:$0xff] %v436
        %v438 = vld [vmem:[%s430 + $0x18] sm:$0xff]
        %439 = vst [vmem:[%s431 + $0x18] sm:$0xff] %v438
        %v440 = vld [vmem:[%s430 + $0x20] sm:$0xff]
        %441 = vst [vmem:[%s431 + $0x20] sm:$0xff] %v440
        %v442 = vld [vmem:[%s430 + $0x28] sm:$0xff]
        %443 = vst [vmem:[%s431 + $0x28] sm:$0xff] %v442
        %v444 = vld [vmem:[%s430 + $0x30] sm:$0xff]
        %445 = vst [vmem:[%s431 + $0x30] sm:$0xff] %v444
        %v446 = vld [vmem:[%s430 + $0x38] sm:$0xff]
        %447 = vst [vmem:[%s431 + $0x38] sm:$0xff] %v446
      $region117: #{finetune_forward.1} parent=111 // loop_footer
        %s429 = sadd.s32 1, %s425
      $region118: #{finetune_forward.1} parent=111 // loop_footer_branch
        %424 = sbr.rel target = $region114
      $region119: #{finetune_forward.1} parent=111 // loop_exit
        _
    $region112: #{finetune_forward.1} parent=96 // pred_fallthru
      _
    %p448 = pneg %p420
    // Predicated region
    $region120: #{finetune_forward.1} parent=96 // pred_check
      _
    $region121: #{finetune_forward.1} parent=96 // pred_check_branch
      %450 = sbr.rel (%p420) target = $region123
    $region122: #{finetune_forward.1} parent=96 // pred_region
      %s451 = sand.u32 64, 7
    $region123: #{finetune_forward.1} parent=96 // pred_fallthru
      _
  $region97: #{finetune_forward.1} parent=0 // pred_fallthru
    _
  // Predicated region
  $region98: #{finetune_forward.1} parent=0 // pred_check
    %p404 = pneg %p400
  $region99: #{finetune_forward.1} parent=0 // pred_check_branch
    %406 = sbr.rel (%p404) target = $region101
  $region100: #{finetune_forward.1} parent=0 // pred_region
    %s407 = sshll.u32 1, 64
    %s408 = ssub.s32 %s407, 1
    loop: start=0, step=1, limit=1
    $region102: #{finetune_forward.1} parent=100 // loop_pre_header
      _
    $region103: #{finetune_forward.1} parent=100 // loop_header
      %s410 = sphi 0, %s414
      %p411 = scmp.ge.s32.totalorder %s410, 1
      %s415 = sphi %s8, %s8
      %s416 = sphi [#allocation6], [#allocation6]
    $region104: #{finetune_forward.1} parent=100 // loop_header_branch
      %413 = sbr.rel (%p411) target = $region108
    $region105: #{finetune_forward.1} parent=100 // loop_body
      %v417 = vld [vmem:[%s415] sm:%s408]
      %418 = vst [vmem:[%s416] sm:%s408] %v417
    $region106: #{finetune_forward.1} parent=100 // loop_footer
      %s414 = sadd.s32 1, %s410
    $region107: #{finetune_forward.1} parent=100 // loop_footer_branch
      %409 = sbr.rel target = $region103
    $region108: #{finetune_forward.1} parent=100 // loop_exit
      _
  $region101: #{finetune_forward.1} parent=0 // pred_fallthru
    _
  // Predicated region
  $region124: #{finetune_forward.1} parent=0 // pred_check
    _
  $region125: #{finetune_forward.1} parent=0 // pred_check_branch
    %454 = sbr.rel (0) target = $region127
  $region126: #{finetune_forward.1} parent=0 // pred_region
    %455 = vsyncadd %s398, 1024
  $region127: #{finetune_forward.1} parent=0 // pred_fallthru
    _
  %v456 = vld [vmem:[%s0] sm:$0xff]
  %v457 = vld [vmem:[%s0 + $0x8] sm:$0xff]
  %v458 = vld [vmem:[%s0 + $0x10] sm:$0xff]
  %v459 = vld [vmem:[%s0 + $0x18] sm:$0xff]
  %v460 = vld [vmem:[%s0 + $0x20] sm:$0xf]
  %v461 = vld [vmem:[%s0 + $0x24] sm:$0xff]
  %v462 = vld [vmem:[%s0 + $0x2c] sm:$0xff]
  %v463 = vld [vmem:[%s0 + $0x34] sm:$0xff]
  %v464 = vld [vmem:[%s0 + $0x3c] sm:$0xff]
  %v465 = vld [vmem:[%s0 + $0x44] sm:$0xf]
  %v466 = vld [vmem:[%s0 + $0x48] sm:$0xff]
  %v467 = vld [vmem:[%s0 + $0x50] sm:$0xff]
  %v468 = vld [vmem:[%s0 + $0x58] sm:$0xff]
  %v469 = vld [vmem:[%s0 + $0x60] sm:$0xff]
  %v470 = vld [vmem:[%s0 + $0x68] sm:$0xf]
  %v471 = vld [vmem:[%s0 + $0x6c] sm:$0xff]
  %v472 = vld [vmem:[%s0 + $0x74] sm:$0xff]
  %v473 = vld [vmem:[%s0 + $0x7c] sm:$0xff]
  %v474 = vld [vmem:[%s0 + $0x84] sm:$0xff]
  %v475 = vld [vmem:[%s0 + $0x8c] sm:$0xf]
  %v476 = vld [vmem:[%s0 + $0x90] sm:$0xff]
  %v477 = vld [vmem:[%s0 + $0x98] sm:$0xff]
  %v478 = vld [vmem:[%s0 + $0xa0] sm:$0xff]
  %v479 = vld [vmem:[%s0 + $0xa8] sm:$0xff]
  %v480 = vld [vmem:[%s0 + $0xb0] sm:$0xf]
  %v481 = vld [vmem:[%s0 + $0xb4] sm:$0xff]
  %v482 = vld [vmem:[%s0 + $0xbc] sm:$0xff]
  %v483 = vld [vmem:[%s0 + $0xc4] sm:$0xff]
  %v484 = vld [vmem:[%s0 + $0xcc] sm:$0xff]
  %v485 = vld [vmem:[%s0 + $0xd4] sm:$0xf]
  %v486 = vld [vmem:[%s0 + $0xd8] sm:$0xff]
  %v487 = vld [vmem:[%s0 + $0xe0] sm:$0xff]
  %v488 = vld [vmem:[%s0 + $0xe8] sm:$0xff]
  %v489 = vld [vmem:[%s0 + $0xf0] sm:$0xff]
  %v490 = vld [vmem:[%s0 + $0xf8] sm:$0xf]
  %v491 = vld [vmem:[%s1] sm:$0xf]
  %v492 = vld [vmem:[%s1 + $0x4] sm:$0xf]
  %v493 = vld [vmem:[%s1 + $0x8] sm:$0xf]
  %v494 = vld [vmem:[%s1 + $0xc] sm:$0xf]
  %v495 = vld [vmem:[%s1 + $0x10] sm:$0xf]
  %v496 = vld [vmem:[%s1 + $0x14] sm:$0xf]
  %v497 = vld [vmem:[%s1 + $0x18] sm:$0xf]
  %v498 = vld [vmem:[%s1 + $0x1c] sm:$0xf]
  %v499 = vld [vmem:[%s1 + $0x20] sm:$0xf]
  %v500 = vld [vmem:[%s1 + $0x24] sm:$0xf]
  %v501 = vld [vmem:[%s1 + $0x28] sm:$0xf]
  %v502 = vld [vmem:[%s1 + $0x2c] sm:$0xf]
  %v503 = vld [vmem:[%s1 + $0x30] sm:$0xf]
  %v504 = vld [vmem:[%s1 + $0x34] sm:$0xf]
  %v505 = vld [vmem:[%s1 + $0x38] sm:$0xf]
  %v506 = vld [vmem:[%s1 + $0x3c] sm:$0xf]
  %v507 = vld [vmem:[%s1 + $0x40] sm:$0xf]
  %v508 = vld [vmem:[%s1 + $0x44] sm:$0xf]
  %v509 = vld [vmem:[%s1 + $0x48] sm:$0xf]
  %v510 = vld [vmem:[%s1 + $0x4c] sm:$0xf]
  %v511 = vld [vmem:[%s1 + $0x50] sm:$0xf]
  %v512 = vld [vmem:[%s1 + $0x54] sm:$0xf]
  %v513 = vld [vmem:[%s1 + $0x58] sm:$0xf]
  %v514 = vld [vmem:[%s1 + $0x5c] sm:$0xf]
  %v515 = vld [vmem:[%s1 + $0x60] sm:$0xf]
  %v516 = vld [vmem:[%s1 + $0x64] sm:$0xf]
  %v517 = vld [vmem:[%s1 + $0x68] sm:$0xf]
  %v518 = vld [vmem:[%s1 + $0x6c] sm:$0xf]
  %v519 = vld [vmem:[%s1 + $0x70] sm:$0xf]
  %v520 = vld [vmem:[%s1 + $0x74] sm:$0xf]
  %v521 = vld [vmem:[%s1 + $0x78] sm:$0xf]
  %v522 = vld [vmem:[%s1 + $0x7c] sm:$0xf]
  %v523 = vld [vmem:[%s1 + $0x80] sm:$0xf]
  %v524 = vld [vmem:[%s1 + $0x84] sm:$0xf]
  %v525 = vld [vmem:[%s1 + $0x88] sm:$0xf]
  %v526 = vld [vmem:[%s1 + $0x8c] sm:$0xf]
  %v527 = vld [vmem:[%s1 + $0x90] sm:$0xf]
  %v528 = vld [vmem:[%s1 + $0x94] sm:$0xf]
  %v529 = vld [vmem:[%s1 + $0x98] sm:$0xf]
  %v530 = vld [vmem:[%s1 + $0x9c] sm:$0xf]
  %v531 = vld [vmem:[%s1 + $0xa0] sm:$0xf]
  %v532 = vld [vmem:[%s1 + $0xa4] sm:$0xf]
  %v533 = vld [vmem:[%s1 + $0xa8] sm:$0xf]
  %v534 = vld [vmem:[%s1 + $0xac] sm:$0xf]
  %v535 = vld [vmem:[%s1 + $0xb0] sm:$0xf]
  %v536 = vld [vmem:[%s1 + $0xb4] sm:$0xf]
  %v537 = vld [vmem:[%s1 + $0xb8] sm:$0xf]
  %v538 = vld [vmem:[%s1 + $0xbc] sm:$0xf]
  %v539 = vld [vmem:[%s1 + $0xc0] sm:$0xf]
  %v540 = vld [vmem:[%s1 + $0xc4] sm:$0xf]
  %v541 = vld [vmem:[%s1 + $0xc8] sm:$0xf]
  %v542 = vld [vmem:[%s1 + $0xcc] sm:$0xf]
  %v543 = vld [vmem:[%s1 + $0xd0] sm:$0xf]
  %v544 = vld [vmem:[%s1 + $0xd4] sm:$0xf]
  %v545 = vld [vmem:[%s1 + $0xd8] sm:$0xf]
  %v546 = vld [vmem:[%s1 + $0xdc] sm:$0xf]
  %v547 = vld [vmem:[%s1 + $0xe0] sm:$0xf]
  %v548 = vld [vmem:[%s1 + $0xe4] sm:$0xf]
  %v549 = vld [vmem:[%s1 + $0xe8] sm:$0xf]
  %v550 = vld [vmem:[%s1 + $0xec] sm:$0xf]
  %v551 = vld [vmem:[%s1 + $0xf0] sm:$0xf]
  %v552 = vld [vmem:[%s1 + $0xf4] sm:$0xf]
  %v553 = vld [vmem:[%s1 + $0xf8] sm:$0xf]
  %v554 = vld [vmem:[%s1 + $0xfc] sm:$0xf]
  %v555 = vld [vmem:[%s1 + $0x100] sm:$0xf]
  %v556 = vld [vmem:[%s1 + $0x104] sm:$0xf]
  %v557 = vld [vmem:[%s1 + $0x108] sm:$0xf]
  %v558 = vld [vmem:[%s1 + $0x10c] sm:$0xf]
  %v559 = vld [vmem:[%s1 + $0x110] sm:$0xf]
  %v560 = vld [vmem:[%s1 + $0x114] sm:$0xf]
  %v561 = vld [vmem:[%s1 + $0x118] sm:$0xf]
  %v562 = vld [vmem:[%s1 + $0x11c] sm:$0xf]
  %v563 = vld [vmem:[%s1 + $0x120] sm:$0xf]
  %v564 = vld [vmem:[%s1 + $0x124] sm:$0xf]
  %v565 = vld [vmem:[%s1 + $0x128] sm:$0xf]
  %v566 = vld [vmem:[%s1 + $0x12c] sm:$0xf]
  %v567 = vld [vmem:[%s1 + $0x130] sm:$0xf]
  %v568 = vld [vmem:[%s1 + $0x134] sm:$0xf]
  %v569 = vld [vmem:[%s1 + $0x138] sm:$0xf]
  %v570 = vld [vmem:[%s1 + $0x13c] sm:$0xf]
  %v571 = vld [vmem:[%s1 + $0x140] sm:$0xf]
  %v572 = vld [vmem:[%s1 + $0x144] sm:$0xf]
  %v573 = vld [vmem:[%s1 + $0x148] sm:$0xf]
  %v574 = vld [vmem:[%s1 + $0x14c] sm:$0xf]
  %v575 = vld [vmem:[%s1 + $0x150] sm:$0xf]
  %v576 = vld [vmem:[%s1 + $0x154] sm:$0xf]
  %v577 = vld [vmem:[%s1 + $0x158] sm:$0xf]
  %v578 = vld [vmem:[%s1 + $0x15c] sm:$0xf]
  %v579 = vld [vmem:[%s1 + $0x160] sm:$0xf]
  %v580 = vld [vmem:[%s1 + $0x164] sm:$0xf]
  %v581 = vld [vmem:[%s1 + $0x168] sm:$0xf]
  %v582 = vld [vmem:[%s1 + $0x16c] sm:$0xf]
  %v583 = vld [vmem:[%s1 + $0x170] sm:$0xf]
  %v584 = vld [vmem:[%s1 + $0x174] sm:$0xf]
  %v585 = vld [vmem:[%s1 + $0x178] sm:$0xf]
  %v586 = vld [vmem:[%s1 + $0x17c] sm:$0xf]
  %v587 = vld [vmem:[%s1 + $0x180] sm:$0xf]
  %v588 = vld [vmem:[%s1 + $0x184] sm:$0xf]
  %v589 = vld [vmem:[%s1 + $0x188] sm:$0xf]
  %v590 = vld [vmem:[%s1 + $0x18c] sm:$0xf]
  %v591 = vld [vmem:[%s1 + $0x190] sm:$0xf]
  %v592 = vld [vmem:[%s1 + $0x194] sm:$0xf]
  %v593 = vld [vmem:[%s1 + $0x198] sm:$0xf]
  %v594 = vld [vmem:[%s1 + $0x19c] sm:$0xf]
  %v595 = vld [vmem:[%s1 + $0x1a0] sm:$0xf]
  %v596 = vld [vmem:[%s1 + $0x1a4] sm:$0xf]
  %v597 = vld [vmem:[%s1 + $0x1a8] sm:$0xf]
  %v598 = vld [vmem:[%s1 + $0x1ac] sm:$0xf]
  %v599 = vld [vmem:[%s1 + $0x1b0] sm:$0xf]
  %v600 = vld [vmem:[%s1 + $0x1b4] sm:$0xf]
  %v601 = vld [vmem:[%s1 + $0x1b8] sm:$0xf]
  %v602 = vld [vmem:[%s1 + $0x1bc] sm:$0xf]
  %v603 = vld [vmem:[%s1 + $0x1c0] sm:$0xf]
  %v604 = vld [vmem:[%s1 + $0x1c4] sm:$0xf]
  %v605 = vld [vmem:[%s1 + $0x1c8] sm:$0xf]
  %v606 = vld [vmem:[%s1 + $0x1cc] sm:$0xf]
  %v607 = vld [vmem:[%s1 + $0x1d0] sm:$0xf]
  %v608 = vld [vmem:[%s1 + $0x1d4] sm:$0xf]
  %v609 = vld [vmem:[%s1 + $0x1d8] sm:$0xf]
  %v610 = vld [vmem:[%s1 + $0x1dc] sm:$0xf]
  %v611 = vld [vmem:[%s1 + $0x1e0] sm:$0xf]
  %v612 = vld [vmem:[%s1 + $0x1e4] sm:$0xf]
  %v613 = vld [vmem:[%s1 + $0x1e8] sm:$0xf]
  %v614 = vld [vmem:[%s1 + $0x1ec] sm:$0xf]
  %v615 = vld [vmem:[%s1 + $0x1f0] sm:$0xf]
  %v616 = vld [vmem:[%s1 + $0x1f4] sm:$0xf]
  %v617 = vld [vmem:[%s1 + $0x1f8] sm:$0xf]
  %v618 = vld [vmem:[%s1 + $0x1fc] sm:$0xf]
  %v619 = vld [vmem:[%s1 + $0x200] sm:$0xf]
  %v620 = vld [vmem:[%s1 + $0x204] sm:$0xf]
  %v621 = vld [vmem:[%s1 + $0x208] sm:$0xf]
  %v622 = vld [vmem:[%s1 + $0x20c] sm:$0xf]
  %v623 = vld [vmem:[%s1 + $0x210] sm:$0xf]
  %v624 = vld [vmem:[%s1 + $0x214] sm:$0xf]
  %v625 = vld [vmem:[%s1 + $0x218] sm:$0xf]
  %v626 = vld [vmem:[%s1 + $0x21c] sm:$0xf]
  %v627 = vld [vmem:[%s1 + $0x220] sm:$0xf]
  %v628 = vld [vmem:[%s1 + $0x224] sm:$0xf]
  %v629 = vld [vmem:[%s1 + $0x228] sm:$0xf]
  %v630 = vld [vmem:[%s1 + $0x22c] sm:$0xf]
  %v631 = vld [vmem:[%s1 + $0x230] sm:$0xf]
  %v632 = vld [vmem:[%s1 + $0x234] sm:$0xf]
  %v633 = vld [vmem:[%s1 + $0x238] sm:$0xf]
  %v634 = vld [vmem:[%s1 + $0x23c] sm:$0xf]
  %v635 = vld [vmem:[%s4] sm:$0x1]
  %v637 = vlaneseq
  %v638 = vshrl.u32 %v637, 7
  %v639 = vsub.s32 0, %v638
  %v640 = vrot.slane %v635, %v639
  %v677 = vunpack.c.l.b16 %v456
  %v678 = vunpack.c.h.b16 %v456
  %v679 = vunpack.c.l.b16 %v457
  %v680 = vunpack.c.h.b16 %v457
  %v681 = vunpack.c.l.b16 %v458
  %v682 = vunpack.c.h.b16 %v458
  %v683 = vunpack.c.l.b16 %v459
  %v684 = vunpack.c.h.b16 %v459
  %v685 = vunpack.c.l.b16 %v460
  %v686 = vunpack.c.l.b16 %v461
  %v687 = vunpack.c.h.b16 %v461
  %v688 = vunpack.c.l.b16 %v462
  %v689 = vunpack.c.h.b16 %v462
  %v690 = vunpack.c.l.b16 %v463
  %v691 = vunpack.c.h.b16 %v463
  %v692 = vunpack.c.l.b16 %v464
  %v693 = vunpack.c.h.b16 %v464
  %v694 = vunpack.c.l.b16 %v465
  %v695 = vunpack.c.l.b16 %v466
  %v696 = vunpack.c.h.b16 %v466
  %v697 = vunpack.c.l.b16 %v467
  %v698 = vunpack.c.h.b16 %v467
  %v699 = vunpack.c.l.b16 %v468
  %v700 = vunpack.c.h.b16 %v468
  %v701 = vunpack.c.l.b16 %v469
  %v702 = vunpack.c.h.b16 %v469
  %v703 = vunpack.c.l.b16 %v470
  %v704 = vunpack.c.l.b16 %v471
  %v705 = vunpack.c.h.b16 %v471
  %v706 = vunpack.c.l.b16 %v472
  %v707 = vunpack.c.h.b16 %v472
  %v708 = vunpack.c.l.b16 %v473
  %v709 = vunpack.c.h.b16 %v473
  %v710 = vunpack.c.l.b16 %v474
  %v711 = vunpack.c.h.b16 %v474
  %v712 = vunpack.c.l.b16 %v475
  %v713 = vunpack.c.l.b16 %v476
  %v714 = vunpack.c.h.b16 %v476
  %v715 = vunpack.c.l.b16 %v477
  %v716 = vunpack.c.h.b16 %v477
  %v717 = vunpack.c.l.b16 %v478
  %v718 = vunpack.c.h.b16 %v478
  %v719 = vunpack.c.l.b16 %v479
  %v720 = vunpack.c.h.b16 %v479
  %v721 = vunpack.c.l.b16 %v480
  %v722 = vunpack.c.l.b16 %v481
  %v723 = vunpack.c.h.b16 %v481
  %v724 = vunpack.c.l.b16 %v482
  %v725 = vunpack.c.h.b16 %v482
  %v726 = vunpack.c.l.b16 %v483
  %v727 = vunpack.c.h.b16 %v483
  %v728 = vunpack.c.l.b16 %v484
  %v729 = vunpack.c.h.b16 %v484
  %v730 = vunpack.c.l.b16 %v485
  %v731 = vunpack.c.l.b16 %v486
  %v732 = vunpack.c.h.b16 %v486
  %v733 = vunpack.c.l.b16 %v487
  %v734 = vunpack.c.h.b16 %v487
  %v735 = vunpack.c.l.b16 %v488
  %v736 = vunpack.c.h.b16 %v488
  %v737 = vunpack.c.l.b16 %v489
  %v738 = vunpack.c.h.b16 %v489
  %v739 = vunpack.c.l.b16 %v490
  %v740 = vpack.c.b16 %v686, %v677
  %v741 = vpack.c.b16 %v687, %v678
  %v742 = vpack.c.b16 %v688, %v679
  %v743 = vpack.c.b16 %v689, %v680
  %v744 = vpack.c.b16 %v690, %v681
  %v745 = vpack.c.b16 %v691, %v682
  %v746 = vpack.c.b16 %v692, %v683
  %v747 = vpack.c.b16 %v693, %v684
  %v748 = vpack.c.b16 %v694, %v685
  %v749 = vpack.c.b16 %v704, %v695
  %v750 = vpack.c.b16 %v705, %v696
  %v751 = vpack.c.b16 %v706, %v697
  %v752 = vpack.c.b16 %v707, %v698
  %v753 = vpack.c.b16 %v708, %v699
  %v754 = vpack.c.b16 %v709, %v700
  %v755 = vpack.c.b16 %v710, %v701
  %v756 = vpack.c.b16 %v711, %v702
  %v757 = vpack.c.b16 %v712, %v703
  %v758 = vpack.c.b16 %v722, %v713
  %v759 = vpack.c.b16 %v723, %v714
  %v760 = vpack.c.b16 %v724, %v715
  %v761 = vpack.c.b16 %v725, %v716
  %v762 = vpack.c.b16 %v726, %v717
  %v763 = vpack.c.b16 %v727, %v718
  %v764 = vpack.c.b16 %v728, %v719
  %v765 = vpack.c.b16 %v729, %v720
  %v766 = vpack.c.b16 %v730, %v721
  %v767 = vpack.c.b16 %v731, %v731
  %v768 = vpack.c.b16 %v732, %v732
  %v769 = vpack.c.b16 %v733, %v733
  %v770 = vpack.c.b16 %v734, %v734
  %v771 = vpack.c.b16 %v735, %v735
  %v772 = vpack.c.b16 %v736, %v736
  %v773 = vpack.c.b16 %v737, %v737
  %v774 = vpack.c.b16 %v738, %v738
  %v775 = vpack.c.b16 %v739, %v739
  %v956 = vunpack.c.l.b16 %v491
  %v957 = vunpack.c.l.b16 %v492
  %v958 = vunpack.c.l.b16 %v493
  %v959 = vunpack.c.l.b16 %v494
  %v960 = vunpack.c.l.b16 %v495
  %v961 = vunpack.c.l.b16 %v496
  %v962 = vunpack.c.l.b16 %v497
  %v963 = vunpack.c.l.b16 %v498
  %v964 = vunpack.c.l.b16 %v499
  %v965 = vunpack.c.l.b16 %v500
  %v966 = vunpack.c.l.b16 %v501
  %v967 = vunpack.c.l.b16 %v502
  %v968 = vunpack.c.l.b16 %v503
  %v969 = vunpack.c.l.b16 %v504
  %v970 = vunpack.c.l.b16 %v505
  %v971 = vunpack.c.l.b16 %v506
  %v972 = vunpack.c.l.b16 %v507
  %v973 = vunpack.c.l.b16 %v508
  %v974 = vunpack.c.l.b16 %v509
  %v975 = vunpack.c.l.b16 %v510
  %v976 = vunpack.c.l.b16 %v511
  %v977 = vunpack.c.l.b16 %v512
  %v978 = vunpack.c.l.b16 %v513
  %v979 = vunpack.c.l.b16 %v514
  %v980 = vunpack.c.l.b16 %v515
  %v981 = vunpack.c.l.b16 %v516
  %v982 = vunpack.c.l.b16 %v517
  %v983 = vunpack.c.l.b16 %v518
  %v984 = vunpack.c.l.b16 %v519
  %v985 = vunpack.c.l.b16 %v520
  %v986 = vunpack.c.l.b16 %v521
  %v987 = vunpack.c.l.b16 %v522
  %v988 = vunpack.c.l.b16 %v523
  %v989 = vunpack.c.l.b16 %v524
  %v990 = vunpack.c.l.b16 %v525
  %v991 = vunpack.c.l.b16 %v526
  %v992 = vunpack.c.l.b16 %v527
  %v993 = vunpack.c.l.b16 %v528
  %v994 = vunpack.c.l.b16 %v529
  %v995 = vunpack.c.l.b16 %v530
  %v996 = vunpack.c.l.b16 %v531
  %v997 = vunpack.c.l.b16 %v532
  %v998 = vunpack.c.l.b16 %v533
  %v999 = vunpack.c.l.b16 %v534
  %v1000 = vunpack.c.l.b16 %v535
  %v1001 = vunpack.c.l.b16 %v536
  %v1002 = vunpack.c.l.b16 %v537
  %v1003 = vunpack.c.l.b16 %v538
  %v1004 = vunpack.c.l.b16 %v539
  %v1005 = vunpack.c.l.b16 %v540
  %v1006 = vunpack.c.l.b16 %v541
  %v1007 = vunpack.c.l.b16 %v542
  %v1008 = vunpack.c.l.b16 %v543
  %v1009 = vunpack.c.l.b16 %v544
  %v1010 = vunpack.c.l.b16 %v545
  %v1011 = vunpack.c.l.b16 %v546
  %v1012 = vunpack.c.l.b16 %v547
  %v1013 = vunpack.c.l.b16 %v548
  %v1014 = vunpack.c.l.b16 %v549
  %v1015 = vunpack.c.l.b16 %v550
  %v1016 = vunpack.c.l.b16 %v551
  %v1017 = vunpack.c.l.b16 %v552
  %v1018 = vunpack.c.l.b16 %v553
  %v1019 = vunpack.c.l.b16 %v554
  %v1020 = vunpack.c.l.b16 %v555
  %v1021 = vunpack.c.l.b16 %v556
  %v1022 = vunpack.c.l.b16 %v557
  %v1023 = vunpack.c.l.b16 %v558
  %v1024 = vunpack.c.l.b16 %v559
  %v1025 = vunpack.c.l.b16 %v560
  %v1026 = vunpack.c.l.b16 %v561
  %v1027 = vunpack.c.l.b16 %v562
  %v1028 = vunpack.c.l.b16 %v563
  %v1029 = vunpack.c.l.b16 %v564
  %v1030 = vunpack.c.l.b16 %v565
  %v1031 = vunpack.c.l.b16 %v566
  %v1032 = vunpack.c.l.b16 %v567
  %v1033 = vunpack.c.l.b16 %v568
  %v1034 = vunpack.c.l.b16 %v569
  %v1035 = vunpack.c.l.b16 %v570
  %v1036 = vunpack.c.l.b16 %v571
  %v1037 = vunpack.c.l.b16 %v572
  %v1038 = vunpack.c.l.b16 %v573
  %v1039 = vunpack.c.l.b16 %v574
  %v1040 = vunpack.c.l.b16 %v575
  %v1041 = vunpack.c.l.b16 %v576
  %v1042 = vunpack.c.l.b16 %v577
  %v1043 = vunpack.c.l.b16 %v578
  %v1044 = vunpack.c.l.b16 %v579
  %v1045 = vunpack.c.l.b16 %v580
  %v1046 = vunpack.c.l.b16 %v581
  %v1047 = vunpack.c.l.b16 %v582
  %v1048 = vunpack.c.l.b16 %v583
  %v1049 = vunpack.c.l.b16 %v584
  %v1050 = vunpack.c.l.b16 %v585
  %v1051 = vunpack.c.l.b16 %v586
  %v1052 = vunpack.c.l.b16 %v587
  %v1053 = vunpack.c.l.b16 %v588
  %v1054 = vunpack.c.l.b16 %v589
  %v1055 = vunpack.c.l.b16 %v590
  %v1056 = vunpack.c.l.b16 %v591
  %v1057 = vunpack.c.l.b16 %v592
  %v1058 = vunpack.c.l.b16 %v593
  %v1059 = vunpack.c.l.b16 %v594
  %v1060 = vunpack.c.l.b16 %v595
  %v1061 = vunpack.c.l.b16 %v596
  %v1062 = vunpack.c.l.b16 %v597
  %v1063 = vunpack.c.l.b16 %v598
  %v1064 = vunpack.c.l.b16 %v599
  %v1065 = vunpack.c.l.b16 %v600
  %v1066 = vunpack.c.l.b16 %v601
  %v1067 = vunpack.c.l.b16 %v602
  %v1068 = vunpack.c.l.b16 %v603
  %v1069 = vunpack.c.l.b16 %v604
  %v1070 = vunpack.c.l.b16 %v605
  %v1071 = vunpack.c.l.b16 %v606
  %v1072 = vunpack.c.l.b16 %v607
  %v1073 = vunpack.c.l.b16 %v608
  %v1074 = vunpack.c.l.b16 %v609
  %v1075 = vunpack.c.l.b16 %v610
  %v1076 = vunpack.c.l.b16 %v611
  %v1077 = vunpack.c.l.b16 %v612
  %v1078 = vunpack.c.l.b16 %v613
  %v1079 = vunpack.c.l.b16 %v614
  %v1080 = vunpack.c.l.b16 %v615
  %v1081 = vunpack.c.l.b16 %v616
  %v1082 = vunpack.c.l.b16 %v617
  %v1083 = vunpack.c.l.b16 %v618
  %v1084 = vunpack.c.l.b16 %v619
  %v1085 = vunpack.c.l.b16 %v620
  %v1086 = vunpack.c.l.b16 %v621
  %v1087 = vunpack.c.l.b16 %v622
  %v1088 = vunpack.c.l.b16 %v623
  %v1089 = vunpack.c.l.b16 %v624
  %v1090 = vunpack.c.l.b16 %v625
  %v1091 = vunpack.c.l.b16 %v626
  %v1092 = vunpack.c.l.b16 %v627
  %v1093 = vunpack.c.l.b16 %v628
  %v1094 = vunpack.c.l.b16 %v629
  %v1095 = vunpack.c.l.b16 %v630
  %v1096 = vunpack.c.l.b16 %v631
  %v1097 = vunpack.c.l.b16 %v632
  %v1098 = vunpack.c.l.b16 %v633
  %v1099 = vunpack.c.l.b16 %v634
  %v1100 = vpack.c.b16 %v957, %v956
  %v1101 = vpack.c.b16 %v959, %v958
  %v1102 = vpack.c.b16 %v961, %v960
  %v1103 = vpack.c.b16 %v963, %v962
  %v1104 = vpack.c.b16 %v965, %v964
  %v1105 = vpack.c.b16 %v967, %v966
  %v1106 = vpack.c.b16 %v969, %v968
  %v1107 = vpack.c.b16 %v971, %v970
  %v1108 = vpack.c.b16 %v973, %v972
  %v1109 = vpack.c.b16 %v975, %v974
  %v1110 = vpack.c.b16 %v977, %v976
  %v1111 = vpack.c.b16 %v979, %v978
  %v1112 = vpack.c.b16 %v981, %v980
  %v1113 = vpack.c.b16 %v983, %v982
  %v1114 = vpack.c.b16 %v985, %v984
  %v1115 = vpack.c.b16 %v987, %v986
  %v1116 = vpack.c.b16 %v989, %v988
  %v1117 = vpack.c.b16 %v991, %v990
  %v1118 = vpack.c.b16 %v993, %v992
  %v1119 = vpack.c.b16 %v995, %v994
  %v1120 = vpack.c.b16 %v997, %v996
  %v1121 = vpack.c.b16 %v999, %v998
  %v1122 = vpack.c.b16 %v1001, %v1000
  %v1123 = vpack.c.b16 %v1003, %v1002
  %v1124 = vpack.c.b16 %v1005, %v1004
  %v1125 = vpack.c.b16 %v1007, %v1006
  %v1126 = vpack.c.b16 %v1009, %v1008
  %v1127 = vpack.c.b16 %v1011, %v1010
  %v1128 = vpack.c.b16 %v1013, %v1012
  %v1129 = vpack.c.b16 %v1015, %v1014
  %v1130 = vpack.c.b16 %v1017, %v1016
  %v1131 = vpack.c.b16 %v1019, %v1018
  %v1132 = vpack.c.b16 %v1021, %v1020
  %v1133 = vpack.c.b16 %v1023, %v1022
  %v1134 = vpack.c.b16 %v1025, %v1024
  %v1135 = vpack.c.b16 %v1027, %v1026
  %v1136 = vpack.c.b16 %v1029, %v1028
  %v1137 = vpack.c.b16 %v1031, %v1030
  %v1138 = vpack.c.b16 %v1033, %v1032
  %v1139 = vpack.c.b16 %v1035, %v1034
  %v1140 = vpack.c.b16 %v1037, %v1036
  %v1141 = vpack.c.b16 %v1039, %v1038
  %v1142 = vpack.c.b16 %v1041, %v1040
  %v1143 = vpack.c.b16 %v1043, %v1042
  %v1144 = vpack.c.b16 %v1045, %v1044
  %v1145 = vpack.c.b16 %v1047, %v1046
  %v1146 = vpack.c.b16 %v1049, %v1048
  %v1147 = vpack.c.b16 %v1051, %v1050
  %v1148 = vpack.c.b16 %v1053, %v1052
  %v1149 = vpack.c.b16 %v1055, %v1054
  %v1150 = vpack.c.b16 %v1057, %v1056
  %v1151 = vpack.c.b16 %v1059, %v1058
  %v1152 = vpack.c.b16 %v1061, %v1060
  %v1153 = vpack.c.b16 %v1063, %v1062
  %v1154 = vpack.c.b16 %v1065, %v1064
  %v1155 = vpack.c.b16 %v1067, %v1066
  %v1156 = vpack.c.b16 %v1069, %v1068
  %v1157 = vpack.c.b16 %v1071, %v1070
  %v1158 = vpack.c.b16 %v1073, %v1072
  %v1159 = vpack.c.b16 %v1075, %v1074
  %v1160 = vpack.c.b16 %v1077, %v1076
  %v1161 = vpack.c.b16 %v1079, %v1078
  %v1162 = vpack.c.b16 %v1081, %v1080
  %v1163 = vpack.c.b16 %v1083, %v1082
  %v1164 = vpack.c.b16 %v1085, %v1084
  %v1165 = vpack.c.b16 %v1087, %v1086
  %v1166 = vpack.c.b16 %v1089, %v1088
  %v1167 = vpack.c.b16 %v1091, %v1090
  %v1168 = vpack.c.b16 %v1093, %v1092
  %v1169 = vpack.c.b16 %v1095, %v1094
  %v1170 = vpack.c.b16 %v1097, %v1096
  %v1171 = vpack.c.b16 %v1099, %v1098
  %1244 = vmatprep.subr.bf16.mxu0 0
  %1245 = vmatpush1.bf16.msra.mxu0 %v1107
  %1246 = vmatprep.subr.bf16.mxu0 0
  %1247 = vmatpush1.bf16.msra.mxu0 %v1106
  %1248 = vmatprep.subr.bf16.mxu0 0
  %1249 = vmatpush1.bf16.msra.mxu0 %v1105
  %1250 = vmatprep.subr.bf16.mxu0 0
  %1251 = vmatpush1.bf16.msra.mxu0 %v1104
  %1252 = vmatprep.subr.bf16.mxu0 0
  %1253 = vmatpush1.bf16.msra.mxu0 %v1103
  %1254 = vmatprep.subr.bf16.mxu0 0
  %1255 = vmatpush1.bf16.msra.mxu0 %v1102
  %1256 = vmatprep.subr.bf16.mxu0 0
  %1257 = vmatpush1.bf16.msra.mxu0 %v1101
  %1258 = vmatprep.subr.bf16.mxu0 0
  %1259 = vmatpush1.bf16.msra.mxu0 %v1100
  %1260 = vmatprep.subr.bf16.mxu0 0
  %1261 = vmatpush2.bf16.msra.mxu0 %v1115
  %1262 = vmatprep.subr.bf16.mxu0 0
  %1263 = vmatpush2.bf16.msra.mxu0 %v1114
  %1264 = vmatprep.subr.bf16.mxu0 0
  %1265 = vmatpush2.bf16.msra.mxu0 %v1113
  %1266 = vmatprep.subr.bf16.mxu0 0
  %1267 = vmatpush2.bf16.msra.mxu0 %v1112
  %1268 = vmatprep.subr.bf16.mxu0 0
  %1269 = vmatpush2.bf16.msra.mxu0 %v1111
  %1270 = vmatprep.subr.bf16.mxu0 0
  %1271 = vmatpush2.bf16.msra.mxu0 %v1110
  %1272 = vmatprep.subr.bf16.mxu0 0
  %1273 = vmatpush2.bf16.msra.mxu0 %v1109
  %1274 = vmatprep.subr.bf16.mxu0 0
  %1275 = vmatpush2.bf16.msra.mxu0 %v1108
  %1276 = vmatprep.mubr.bf16.mxu0 %v741
  %1277 = vmatmul.mubr.bf16.gmra.mxu0 %v740
  %v1278 = vpop.f32.mrf.mxu0
  %v1279 = vadd.f32 %v640, %v1278
  %v1280 = vpop.f32.mrf.mxu0
  %v1281 = vpop.f32.mrf.mxu0
  %v1282 = vadd.f32 %v640, %v1281
  %v1283 = vpop.f32.mrf.mxu0
  %1284 = vmatprep.mubr.bf16.mxu0 %v750
  %1285 = vmatmul.mubr.bf16.gmra.mxu0 %v749
  %v1286 = vpop.f32.mrf.mxu0
  %v1287 = vadd.f32 %v640, %v1286
  %v1288 = vpop.f32.mrf.mxu0
  %v1289 = vpop.f32.mrf.mxu0
  %v1290 = vadd.f32 %v640, %v1289
  %v1291 = vpop.f32.mrf.mxu0
  %1292 = vmatprep.mubr.bf16.mxu0 %v759
  %1293 = vmatmul.mubr.bf16.gmra.mxu0 %v758
  %v1294 = vpop.f32.mrf.mxu0
  %v1295 = vadd.f32 %v640, %v1294
  %v1296 = vpop.f32.mrf.mxu0
  %v1297 = vpop.f32.mrf.mxu0
  %v1298 = vadd.f32 %v640, %v1297
  %v1299 = vpop.f32.mrf.mxu0
  %1300 = vmatprep.mubr.bf16.mxu0 %v768
  %1301 = vmatmul.mubr.bf16.gmra.mxu0 %v767
  %v1302 = vpop.f32.mrf.mxu0
  %v1303 = vadd.f32 %v640, %v1302
  %v1304 = vpop.f32.mrf.mxu0
  %v1305 = vpop.f32.mrf.mxu0
  %v1306 = vpop.f32.mrf.mxu0
  %1307 = vdwg.mxu0
  %1308 = vmatprep.subr.bf16.mxu0 0
  %1309 = vmatpush1.bf16.msra.mxu0 %v1123
  %1310 = vmatprep.subr.bf16.mxu0 0
  %1311 = vmatpush1.bf16.msra.mxu0 %v1122
  %1312 = vmatprep.subr.bf16.mxu0 0
  %1313 = vmatpush1.bf16.msra.mxu0 %v1121
  %1314 = vmatprep.subr.bf16.mxu0 0
  %1315 = vmatpush1.bf16.msra.mxu0 %v1120
  %1316 = vmatprep.subr.bf16.mxu0 0
  %1317 = vmatpush1.bf16.msra.mxu0 %v1119
  %1318 = vmatprep.subr.bf16.mxu0 0
  %1319 = vmatpush1.bf16.msra.mxu0 %v1118
  %1320 = vmatprep.subr.bf16.mxu0 0
  %1321 = vmatpush1.bf16.msra.mxu0 %v1117
  %1322 = vmatprep.subr.bf16.mxu0 0
  %1323 = vmatpush1.bf16.msra.mxu0 %v1116
  %1324 = vmatprep.subr.bf16.mxu0 0
  %1325 = vmatpush2.bf16.msra.mxu0 %v1131
  %1326 = vmatprep.subr.bf16.mxu0 0
  %1327 = vmatpush2.bf16.msra.mxu0 %v1130
  %1328 = vmatprep.subr.bf16.mxu0 0
  %1329 = vmatpush2.bf16.msra.mxu0 %v1129
  %1330 = vmatprep.subr.bf16.mxu0 0
  %1331 = vmatpush2.bf16.msra.mxu0 %v1128
  %1332 = vmatprep.subr.bf16.mxu0 0
  %1333 = vmatpush2.bf16.msra.mxu0 %v1127
  %1334 = vmatprep.subr.bf16.mxu0 0
  %1335 = vmatpush2.bf16.msra.mxu0 %v1126
  %1336 = vmatprep.subr.bf16.mxu0 0
  %1337 = vmatpush2.bf16.msra.mxu0 %v1125
  %1338 = vmatprep.subr.bf16.mxu0 0
  %1339 = vmatpush2.bf16.msra.mxu0 %v1124
  %1340 = vmatprep.mubr.bf16.mxu0 %v743
  %1341 = vmatmul.mubr.bf16.gmra.mxu0 %v742
  %v1342 = vpop.f32.mrf.mxu0
  %v1343 = vadd.f32 %v1279, %v1342
  %v1344 = vpop.f32.mrf.mxu0
  %v1345 = vpop.f32.mrf.mxu0
  %v1346 = vadd.f32 %v1282, %v1345
  %v1347 = vpop.f32.mrf.mxu0
  %1348 = vmatprep.mubr.bf16.mxu0 %v752
  %1349 = vmatmul.mubr.bf16.gmra.mxu0 %v751
  %v1350 = vpop.f32.mrf.mxu0
  %v1351 = vadd.f32 %v1287, %v1350
  %v1352 = vpop.f32.mrf.mxu0
  %v1353 = vpop.f32.mrf.mxu0
  %v1354 = vadd.f32 %v1290, %v1353
  %v1355 = vpop.f32.mrf.mxu0
  %1356 = vmatprep.mubr.bf16.mxu0 %v761
  %1357 = vmatmul.mubr.bf16.gmra.mxu0 %v760
  %v1358 = vpop.f32.mrf.mxu0
  %v1359 = vadd.f32 %v1295, %v1358
  %v1360 = vpop.f32.mrf.mxu0
  %v1361 = vpop.f32.mrf.mxu0
  %v1362 = vadd.f32 %v1298, %v1361
  %v1363 = vpop.f32.mrf.mxu0
  %1364 = vmatprep.mubr.bf16.mxu0 %v770
  %1365 = vmatmul.mubr.bf16.gmra.mxu0 %v769
  %v1366 = vpop.f32.mrf.mxu0
  %v1367 = vadd.f32 %v1303, %v1366
  %v1368 = vpop.f32.mrf.mxu0
  %v1369 = vpop.f32.mrf.mxu0
  %v1370 = vpop.f32.mrf.mxu0
  %1371 = vdwg.mxu0
  %1372 = vmatprep.subr.bf16.mxu0 0
  %1373 = vmatpush1.bf16.msra.mxu0 %v1139
  %1374 = vmatprep.subr.bf16.mxu0 0
  %1375 = vmatpush1.bf16.msra.mxu0 %v1138
  %1376 = vmatprep.subr.bf16.mxu0 0
  %1377 = vmatpush1.bf16.msra.mxu0 %v1137
  %1378 = vmatprep.subr.bf16.mxu0 0
  %1379 = vmatpush1.bf16.msra.mxu0 %v1136
  %1380 = vmatprep.subr.bf16.mxu0 0
  %1381 = vmatpush1.bf16.msra.mxu0 %v1135
  %1382 = vmatprep.subr.bf16.mxu0 0
  %1383 = vmatpush1.bf16.msra.mxu0 %v1134
  %1384 = vmatprep.subr.bf16.mxu0 0
  %1385 = vmatpush1.bf16.msra.mxu0 %v1133
  %1386 = vmatprep.subr.bf16.mxu0 0
  %1387 = vmatpush1.bf16.msra.mxu0 %v1132
  %1388 = vmatprep.subr.bf16.mxu0 0
  %1389 = vmatpush2.bf16.msra.mxu0 %v1147
  %1390 = vmatprep.subr.bf16.mxu0 0
  %1391 = vmatpush2.bf16.msra.mxu0 %v1146
  %1392 = vmatprep.subr.bf16.mxu0 0
  %1393 = vmatpush2.bf16.msra.mxu0 %v1145
  %1394 = vmatprep.subr.bf16.mxu0 0
  %1395 = vmatpush2.bf16.msra.mxu0 %v1144
  %1396 = vmatprep.subr.bf16.mxu0 0
  %1397 = vmatpush2.bf16.msra.mxu0 %v1143
  %1398 = vmatprep.subr.bf16.mxu0 0
  %1399 = vmatpush2.bf16.msra.mxu0 %v1142
  %1400 = vmatprep.subr.bf16.mxu0 0
  %1401 = vmatpush2.bf16.msra.mxu0 %v1141
  %1402 = vmatprep.subr.bf16.mxu0 0
  %1403 = vmatpush2.bf16.msra.mxu0 %v1140
  %1404 = vmatprep.mubr.bf16.mxu0 %v745
  %1405 = vmatmul.mubr.bf16.gmra.mxu0 %v744
  %v1406 = vpop.f32.mrf.mxu0
  %v1407 = vadd.f32 %v1343, %v1406
  %v1408 = vpop.f32.mrf.mxu0
  %v1409 = vpop.f32.mrf.mxu0
  %v1410 = vadd.f32 %v1346, %v1409
  %v1411 = vpop.f32.mrf.mxu0
  %1412 = vmatprep.mubr.bf16.mxu0 %v754
  %1413 = vmatmul.mubr.bf16.gmra.mxu0 %v753
  %v1414 = vpop.f32.mrf.mxu0
  %v1415 = vadd.f32 %v1351, %v1414
  %v1416 = vpop.f32.mrf.mxu0
  %v1417 = vpop.f32.mrf.mxu0
  %v1418 = vadd.f32 %v1354, %v1417
  %v1419 = vpop.f32.mrf.mxu0
  %1420 = vmatprep.mubr.bf16.mxu0 %v763
  %1421 = vmatmul.mubr.bf16.gmra.mxu0 %v762
  %v1422 = vpop.f32.mrf.mxu0
  %v1423 = vadd.f32 %v1359, %v1422
  %v1424 = vpop.f32.mrf.mxu0
  %v1425 = vpop.f32.mrf.mxu0
  %v1426 = vadd.f32 %v1362, %v1425
  %v1427 = vpop.f32.mrf.mxu0
  %1428 = vmatprep.mubr.bf16.mxu0 %v772
  %1429 = vmatmul.mubr.bf16.gmra.mxu0 %v771
  %v1430 = vpop.f32.mrf.mxu0
  %v1431 = vadd.f32 %v1367, %v1430
  %v1432 = vpop.f32.mrf.mxu0
  %v1433 = vpop.f32.mrf.mxu0
  %v1434 = vpop.f32.mrf.mxu0
  %1435 = vdwg.mxu0
  %1436 = vmatprep.subr.bf16.mxu0 0
  %1437 = vmatpush1.bf16.msra.mxu0 %v1155
  %1438 = vmatprep.subr.bf16.mxu0 0
  %1439 = vmatpush1.bf16.msra.mxu0 %v1154
  %1440 = vmatprep.subr.bf16.mxu0 0
  %1441 = vmatpush1.bf16.msra.mxu0 %v1153
  %1442 = vmatprep.subr.bf16.mxu0 0
  %1443 = vmatpush1.bf16.msra.mxu0 %v1152
  %1444 = vmatprep.subr.bf16.mxu0 0
  %1445 = vmatpush1.bf16.msra.mxu0 %v1151
  %1446 = vmatprep.subr.bf16.mxu0 0
  %1447 = vmatpush1.bf16.msra.mxu0 %v1150
  %1448 = vmatprep.subr.bf16.mxu0 0
  %1449 = vmatpush1.bf16.msra.mxu0 %v1149
  %1450 = vmatprep.subr.bf16.mxu0 0
  %1451 = vmatpush1.bf16.msra.mxu0 %v1148
  %1452 = vmatprep.subr.bf16.mxu0 0
  %1453 = vmatpush2.bf16.msra.mxu0 %v1163
  %1454 = vmatprep.subr.bf16.mxu0 0
  %1455 = vmatpush2.bf16.msra.mxu0 %v1162
  %1456 = vmatprep.subr.bf16.mxu0 0
  %1457 = vmatpush2.bf16.msra.mxu0 %v1161
  %1458 = vmatprep.subr.bf16.mxu0 0
  %1459 = vmatpush2.bf16.msra.mxu0 %v1160
  %1460 = vmatprep.subr.bf16.mxu0 0
  %1461 = vmatpush2.bf16.msra.mxu0 %v1159
  %1462 = vmatprep.subr.bf16.mxu0 0
  %1463 = vmatpush2.bf16.msra.mxu0 %v1158
  %1464 = vmatprep.subr.bf16.mxu0 0
  %1465 = vmatpush2.bf16.msra.mxu0 %v1157
  %1466 = vmatprep.subr.bf16.mxu0 0
  %1467 = vmatpush2.bf16.msra.mxu0 %v1156
  %1468 = vmatprep.mubr.bf16.mxu0 %v747
  %1469 = vmatmul.mubr.bf16.gmra.mxu0 %v746
  %v1470 = vpop.f32.mrf.mxu0
  %v1471 = vadd.f32 %v1407, %v1470
  %v1472 = vpop.f32.mrf.mxu0
  %v1473 = vpop.f32.mrf.mxu0
  %v1474 = vadd.f32 %v1410, %v1473
  %v1475 = vpop.f32.mrf.mxu0
  %1476 = vmatprep.mubr.bf16.mxu0 %v756
  %1477 = vmatmul.mubr.bf16.gmra.mxu0 %v755
  %v1478 = vpop.f32.mrf.mxu0
  %v1479 = vadd.f32 %v1415, %v1478
  %v1480 = vpop.f32.mrf.mxu0
  %v1481 = vpop.f32.mrf.mxu0
  %v1482 = vadd.f32 %v1418, %v1481
  %v1483 = vpop.f32.mrf.mxu0
  %1484 = vmatprep.mubr.bf16.mxu0 %v765
  %1485 = vmatmul.mubr.bf16.gmra.mxu0 %v764
  %v1486 = vpop.f32.mrf.mxu0
  %v1487 = vadd.f32 %v1423, %v1486
  %v1488 = vpop.f32.mrf.mxu0
  %v1489 = vpop.f32.mrf.mxu0
  %v1490 = vadd.f32 %v1426, %v1489
  %v1491 = vpop.f32.mrf.mxu0
  %1492 = vmatprep.mubr.bf16.mxu0 %v774
  %1493 = vmatmul.mubr.bf16.gmra.mxu0 %v773
  %v1494 = vpop.f32.mrf.mxu0
  %v1495 = vadd.f32 %v1431, %v1494
  %v1496 = vpop.f32.mrf.mxu0
  %v1497 = vpop.f32.mrf.mxu0
  %v1498 = vpop.f32.mrf.mxu0
  %1499 = vdwg.mxu0
  %1500 = vmatprep.subr.bf16.mxu0 0
  %1501 = vmatpush1.bf16.msra.mxu0 %v1171
  %1502 = vmatprep.subr.bf16.mxu0 0
  %1503 = vmatpush1.bf16.msra.mxu0 %v1170
  %1504 = vmatprep.subr.bf16.mxu0 0
  %1505 = vmatpush1.bf16.msra.mxu0 %v1169
  %1506 = vmatprep.subr.bf16.mxu0 0
  %1507 = vmatpush1.bf16.msra.mxu0 %v1168
  %1508 = vmatprep.subr.bf16.mxu0 0
  %1509 = vmatpush1.bf16.msra.mxu0 %v1167
  %1510 = vmatprep.subr.bf16.mxu0 0
  %1511 = vmatpush1.bf16.msra.mxu0 %v1166
  %1512 = vmatprep.subr.bf16.mxu0 0
  %1513 = vmatpush1.bf16.msra.mxu0 %v1165
  %1514 = vmatprep.subr.bf16.mxu0 0
  %1515 = vmatpush1.bf16.msra.mxu0 %v1164
  %1516 = vmatprep.subr.bf16.mxu0 0
  %1517 = vmatpush2.bf16.msra.mxu0 0
  %1518 = vmatprep.subr.bf16.mxu0 0
  %1519 = vmatpush2.bf16.msra.mxu0 0
  %1520 = vmatprep.subr.bf16.mxu0 0
  %1521 = vmatpush2.bf16.msra.mxu0 0
  %1522 = vmatprep.subr.bf16.mxu0 0
  %1523 = vmatpush2.bf16.msra.mxu0 0
  %1524 = vmatprep.subr.bf16.mxu0 0
  %1525 = vmatpush2.bf16.msra.mxu0 0
  %1526 = vmatprep.subr.bf16.mxu0 0
  %1527 = vmatpush2.bf16.msra.mxu0 0
  %1528 = vmatprep.subr.bf16.mxu0 0
  %1529 = vmatpush2.bf16.msra.mxu0 0
  %1530 = vmatprep.subr.bf16.mxu0 0
  %1531 = vmatpush2.bf16.msra.mxu0 0
  %1532 = vmatprep.mubr.bf16.mxu0 0
  %1533 = vmatmul.mubr.bf16.gmra.mxu0 %v748
  %v1534 = vpop.f32.mrf.mxu0
  %v1535 = vadd.f32 %v1471, %v1534
  %v1536 = vpop.f32.mrf.mxu0
  %v1537 = vpop.f32.mrf.mxu0
  %v1538 = vadd.f32 %v1474, %v1537
  %v1539 = vpop.f32.mrf.mxu0
  %1540 = vmatprep.mubr.bf16.mxu0 0
  %1541 = vmatmul.mubr.bf16.gmra.mxu0 %v757
  %v1542 = vpop.f32.mrf.mxu0
  %v1543 = vadd.f32 %v1479, %v1542
  %v1544 = vpop.f32.mrf.mxu0
  %v1545 = vpop.f32.mrf.mxu0
  %v1546 = vadd.f32 %v1482, %v1545
  %v1547 = vpop.f32.mrf.mxu0
  %1548 = vmatprep.mubr.bf16.mxu0 0
  %1549 = vmatmul.mubr.bf16.gmra.mxu0 %v766
  %v1550 = vpop.f32.mrf.mxu0
  %v1551 = vadd.f32 %v1487, %v1550
  %v1552 = vpop.f32.mrf.mxu0
  %v1553 = vpop.f32.mrf.mxu0
  %v1554 = vadd.f32 %v1490, %v1553
  %v1555 = vpop.f32.mrf.mxu0
  %1556 = vmatprep.mubr.bf16.mxu0 0
  %1557 = vmatmul.mubr.bf16.gmra.mxu0 %v775
  %v1558 = vpop.f32.mrf.mxu0
  %v1559 = vadd.f32 %v1495, %v1558
  %v1560 = vpop.f32.mrf.mxu0
  %v1561 = vpop.f32.mrf.mxu0
  %v1562 = vpop.f32.mrf.mxu0
  %1563 = vdwg.mxu0
  %v1564 = vmax.f32 %v1535, 0.0
  %v1565 = vmax.f32 %v1538, 0.0
  %v1566 = vmax.f32 %v1543, 0.0
  %v1567 = vmax.f32 %v1546, 0.0
  %v1568 = vmax.f32 %v1551, 0.0
  %v1569 = vmax.f32 %v1554, 0.0
  %v1570 = vmax.f32 %v1559, 0.0
  %v1571 = vpack.c.bf16 %v1565, %v1564
  %v1572 = vpack.c.bf16 %v1567, %v1566
  %v1573 = vpack.c.bf16 %v1569, %v1568
  %v1574 = vpack.c.bf16 %v1570, %v1570
  %v1575 = vld [vmem:[%s2] sm:$0xf]
  %v1576 = vld [vmem:[%s2 + $0x4] sm:$0xf]
  %v1577 = vld [vmem:[%s2 + $0x8] sm:$0xf]
  %v1578 = vld [vmem:[%s2 + $0xc] sm:$0xf]
  %v1579 = vld [vmem:[%s2 + $0x10] sm:$0xf]
  %v1580 = vld [vmem:[%s2 + $0x14] sm:$0xf]
  %v1581 = vld [vmem:[%s2 + $0x18] sm:$0xf]
  %v1582 = vld [vmem:[%s2 + $0x1c] sm:$0xf]
  %v1583 = vld [vmem:[%s2 + $0x20] sm:$0xf]
  %v1584 = vld [vmem:[%s2 + $0x24] sm:$0xf]
  %v1585 = vld [vmem:[%s2 + $0x28] sm:$0xf]
  %v1586 = vld [vmem:[%s2 + $0x2c] sm:$0xf]
  %v1587 = vld [vmem:[%s2 + $0x30] sm:$0xf]
  %v1588 = vld [vmem:[%s2 + $0x34] sm:$0xf]
  %v1589 = vld [vmem:[%s2 + $0x38] sm:$0xf]
  %v1590 = vld [vmem:[%s2 + $0x3c] sm:$0xf]
  %v1591 = vld [vmem:[%s2 + $0x40] sm:$0xf]
  %v1592 = vld [vmem:[%s2 + $0x44] sm:$0xf]
  %v1593 = vld [vmem:[%s2 + $0x48] sm:$0xf]
  %v1594 = vld [vmem:[%s2 + $0x4c] sm:$0xf]
  %v1595 = vld [vmem:[%s2 + $0x50] sm:$0xf]
  %v1596 = vld [vmem:[%s2 + $0x54] sm:$0xf]
  %v1597 = vld [vmem:[%s2 + $0x58] sm:$0xf]
  %v1598 = vld [vmem:[%s2 + $0x5c] sm:$0xf]
  %v1599 = vld [vmem:[%s2 + $0x60] sm:$0xf]
  %v1600 = vld [vmem:[%s2 + $0x64] sm:$0xf]
  %v1601 = vld [vmem:[%s2 + $0x68] sm:$0xf]
  %v1629 = vunpack.c.l.b16 %v1575
  %v1630 = vunpack.c.l.b16 %v1576
  %v1631 = vunpack.c.l.b16 %v1577
  %v1632 = vunpack.c.l.b16 %v1578
  %v1633 = vunpack.c.l.b16 %v1579
  %v1634 = vunpack.c.l.b16 %v1580
  %v1635 = vunpack.c.l.b16 %v1581
  %v1636 = vunpack.c.l.b16 %v1582
  %v1637 = vunpack.c.l.b16 %v1583
  %v1638 = vunpack.c.l.b16 %v1584
  %v1639 = vunpack.c.l.b16 %v1585
  %v1640 = vunpack.c.l.b16 %v1586
  %v1641 = vunpack.c.l.b16 %v1587
  %v1642 = vunpack.c.l.b16 %v1588
  %v1643 = vunpack.c.l.b16 %v1589
  %v1644 = vunpack.c.l.b16 %v1590
  %v1645 = vunpack.c.l.b16 %v1591
  %v1646 = vunpack.c.l.b16 %v1592
  %v1647 = vunpack.c.l.b16 %v1593
  %v1648 = vunpack.c.l.b16 %v1594
  %v1649 = vunpack.c.l.b16 %v1595
  %v1650 = vunpack.c.l.b16 %v1596
  %v1651 = vunpack.c.l.b16 %v1597
  %v1652 = vunpack.c.l.b16 %v1598
  %v1653 = vunpack.c.l.b16 %v1599
  %v1654 = vunpack.c.l.b16 %v1600
  %v1655 = vunpack.c.l.b16 %v1601
  %v1656 = vpack.c.b16 %v1630, %v1629
  %v1657 = vpack.c.b16 %v1632, %v1631
  %v1658 = vpack.c.b16 %v1634, %v1633
  %v1659 = vpack.c.b16 %v1636, %v1635
  %v1660 = vpack.c.b16 %v1638, %v1637
  %v1661 = vpack.c.b16 %v1640, %v1639
  %v1662 = vpack.c.b16 %v1642, %v1641
  %v1663 = vpack.c.b16 %v1644, %v1643
  %v1664 = vpack.c.b16 %v1646, %v1645
  %v1665 = vpack.c.b16 %v1648, %v1647
  %v1666 = vpack.c.b16 %v1650, %v1649
  %v1667 = vpack.c.b16 %v1652, %v1651
  %v1668 = vpack.c.b16 %v1654, %v1653
  %v1669 = vpack.c.b16 %v1655, %v1655
  %vm1670 = vcmask 457728
  %v1672 = vsel %vm1670, %v1656, 0
  %v1675 = vsel %vm1670, %v1657, 0
  %v1678 = vsel %vm1670, %v1658, 0
  %v1681 = vsel %vm1670, %v1659, 0
  %v1684 = vsel %vm1670, %v1660, 0
  %v1687 = vsel %vm1670, %v1661, 0
  %v1690 = vsel %vm1670, %v1662, 0
  %v1693 = vsel %vm1670, %v1663, 0
  %v1696 = vsel %vm1670, %v1664, 0
  %v1699 = vsel %vm1670, %v1665, 0
  %v1702 = vsel %vm1670, %v1666, 0
  %v1705 = vsel %vm1670, %v1667, 0
  %v1708 = vsel %vm1670, %v1668, 0
  %v1711 = vsel %vm1670, %v1669, 0
  %vm1713 = vcmask 1043456
  %v1715 = vsel %vm1713, %v1574, 0
  %1717 = vmatprep.subr.bf16.mxu0 0
  %1718 = vmatpush1.bf16.msra.mxu0 0
  %1719 = vmatprep.subr.bf16.mxu0 0
  %1720 = vmatpush1.bf16.msra.mxu0 0
  %1721 = vmatprep.subr.bf16.mxu0 0
  %1722 = vmatpush1.bf16.msra.mxu0 0
  %1723 = vmatprep.subr.bf16.mxu0 0
  %1724 = vmatpush1.bf16.msra.mxu0 0
  %1725 = vmatprep.subr.bf16.mxu0 0
  %1726 = vmatpush1.bf16.msra.mxu0 %v1715
  %1727 = vmatprep.subr.bf16.mxu0 0
  %1728 = vmatpush1.bf16.msra.mxu0 %v1573
  %1729 = vmatprep.subr.bf16.mxu0 0
  %1730 = vmatpush1.bf16.msra.mxu0 %v1572
  %1731 = vmatprep.subr.bf16.mxu0 0
  %1732 = vmatpush1.bf16.msra.mxu0 %v1571
  %1733 = vmatprep.subr.bf16.mxu0 0
  %1734 = vmatpush2.bf16.msra.mxu0 0
  %1735 = vmatprep.subr.bf16.mxu0 0
  %1736 = vmatpush2.bf16.msra.mxu0 0
  %1737 = vmatprep.subr.bf16.mxu0 0
  %1738 = vmatpush2.bf16.msra.mxu0 0
  %1739 = vmatprep.subr.bf16.mxu0 0
  %1740 = vmatpush2.bf16.msra.mxu0 0
  %1741 = vmatprep.subr.bf16.mxu0 0
  %1742 = vmatpush2.bf16.msra.mxu0 0
  %1743 = vmatprep.subr.bf16.mxu0 0
  %1744 = vmatpush2.bf16.msra.mxu0 0
  %1745 = vmatprep.subr.bf16.mxu0 0
  %1746 = vmatpush2.bf16.msra.mxu0 0
  %1747 = vmatprep.subr.bf16.mxu0 0
  %1748 = vmatpush2.bf16.msra.mxu0 0
  %1749 = vmatprep.mubr.bf16.mxu0 0
  %1750 = vmatmul.mubr.bf16.gmra.mxu0 %v1672
  %v1751 = vpop.f32.mrf.mxu0
  %v1752 = vadd.f32 0.0, %v1751
  %v1753 = vpop.f32.mrf.mxu0
  %v1754 = vpop.f32.mrf.mxu0
  %v1755 = vadd.f32 0.0, %v1754
  %v1756 = vpop.f32.mrf.mxu0
  %1757 = vmatprep.mubr.bf16.mxu0 0
  %1758 = vmatmul.mubr.bf16.gmra.mxu0 %v1675
  %v1759 = vpop.f32.mrf.mxu0
  %v1760 = vadd.f32 0.0, %v1759
  %v1761 = vpop.f32.mrf.mxu0
  %v1762 = vpop.f32.mrf.mxu0
  %v1763 = vadd.f32 0.0, %v1762
  %v1764 = vpop.f32.mrf.mxu0
  %1765 = vmatprep.mubr.bf16.mxu0 0
  %1766 = vmatmul.mubr.bf16.gmra.mxu0 %v1678
  %v1767 = vpop.f32.mrf.mxu0
  %v1768 = vadd.f32 0.0, %v1767
  %v1769 = vpop.f32.mrf.mxu0
  %v1770 = vpop.f32.mrf.mxu0
  %v1771 = vadd.f32 0.0, %v1770
  %v1772 = vpop.f32.mrf.mxu0
  %1773 = vmatprep.mubr.bf16.mxu0 0
  %1774 = vmatmul.mubr.bf16.gmra.mxu0 %v1681
  %v1775 = vpop.f32.mrf.mxu0
  %v1776 = vadd.f32 0.0, %v1775
  %v1777 = vpop.f32.mrf.mxu0
  %v1778 = vpop.f32.mrf.mxu0
  %v1779 = vadd.f32 0.0, %v1778
  %v1780 = vpop.f32.mrf.mxu0
  %1781 = vmatprep.mubr.bf16.mxu0 0
  %1782 = vmatmul.mubr.bf16.gmra.mxu0 %v1684
  %v1783 = vpop.f32.mrf.mxu0
  %v1784 = vadd.f32 0.0, %v1783
  %v1785 = vpop.f32.mrf.mxu0
  %v1786 = vpop.f32.mrf.mxu0
  %v1787 = vadd.f32 0.0, %v1786
  %v1788 = vpop.f32.mrf.mxu0
  %1789 = vmatprep.mubr.bf16.mxu0 0
  %1790 = vmatmul.mubr.bf16.gmra.mxu0 %v1687
  %v1791 = vpop.f32.mrf.mxu0
  %v1792 = vadd.f32 0.0, %v1791
  %v1793 = vpop.f32.mrf.mxu0
  %v1794 = vpop.f32.mrf.mxu0
  %v1795 = vadd.f32 0.0, %v1794
  %v1796 = vpop.f32.mrf.mxu0
  %1797 = vmatprep.mubr.bf16.mxu0 0
  %1798 = vmatmul.mubr.bf16.gmra.mxu0 %v1690
  %v1799 = vpop.f32.mrf.mxu0
  %v1800 = vadd.f32 0.0, %v1799
  %v1801 = vpop.f32.mrf.mxu0
  %v1802 = vpop.f32.mrf.mxu0
  %v1803 = vadd.f32 0.0, %v1802
  %v1804 = vpop.f32.mrf.mxu0
  %1805 = vmatprep.mubr.bf16.mxu0 0
  %1806 = vmatmul.mubr.bf16.gmra.mxu0 %v1693
  %v1807 = vpop.f32.mrf.mxu0
  %v1808 = vadd.f32 0.0, %v1807
  %v1809 = vpop.f32.mrf.mxu0
  %v1810 = vpop.f32.mrf.mxu0
  %v1811 = vadd.f32 0.0, %v1810
  %v1812 = vpop.f32.mrf.mxu0
  %1813 = vmatprep.mubr.bf16.mxu0 0
  %1814 = vmatmul.mubr.bf16.gmra.mxu0 %v1696
  %v1815 = vpop.f32.mrf.mxu0
  %v1816 = vadd.f32 0.0, %v1815
  %v1817 = vpop.f32.mrf.mxu0
  %v1818 = vpop.f32.mrf.mxu0
  %v1819 = vadd.f32 0.0, %v1818
  %v1820 = vpop.f32.mrf.mxu0
  %1821 = vmatprep.mubr.bf16.mxu0 0
  %1822 = vmatmul.mubr.bf16.gmra.mxu0 %v1699
  %v1823 = vpop.f32.mrf.mxu0
  %v1824 = vadd.f32 0.0, %v1823
  %v1825 = vpop.f32.mrf.mxu0
  %v1826 = vpop.f32.mrf.mxu0
  %v1827 = vadd.f32 0.0, %v1826
  %v1828 = vpop.f32.mrf.mxu0
  %1829 = vmatprep.mubr.bf16.mxu0 0
  %1830 = vmatmul.mubr.bf16.gmra.mxu0 %v1702
  %v1831 = vpop.f32.mrf.mxu0
  %v1832 = vadd.f32 0.0, %v1831
  %v1833 = vpop.f32.mrf.mxu0
  %v1834 = vpop.f32.mrf.mxu0
  %v1835 = vadd.f32 0.0, %v1834
  %v1836 = vpop.f32.mrf.mxu0
  %1837 = vmatprep.mubr.bf16.mxu0 0
  %1838 = vmatmul.mubr.bf16.gmra.mxu0 %v1705
  %v1839 = vpop.f32.mrf.mxu0
  %v1840 = vadd.f32 0.0, %v1839
  %v1841 = vpop.f32.mrf.mxu0
  %v1842 = vpop.f32.mrf.mxu0
  %v1843 = vadd.f32 0.0, %v1842
  %v1844 = vpop.f32.mrf.mxu0
  %1845 = vmatprep.mubr.bf16.mxu0 0
  %1846 = vmatmul.mubr.bf16.gmra.mxu0 %v1708
  %v1847 = vpop.f32.mrf.mxu0
  %v1848 = vadd.f32 0.0, %v1847
  %v1849 = vpop.f32.mrf.mxu0
  %v1850 = vpop.f32.mrf.mxu0
  %v1851 = vadd.f32 0.0, %v1850
  %v1852 = vpop.f32.mrf.mxu0
  %1853 = vmatprep.mubr.bf16.mxu0 0
  %1854 = vmatmul.mubr.bf16.gmra.mxu0 %v1711
  %v1855 = vpop.f32.mrf.mxu0
  %v1856 = vadd.f32 0.0, %v1855
  %v1857 = vpop.f32.mrf.mxu0
  %v1858 = vpop.f32.mrf.mxu0
  %v1859 = vpop.f32.mrf.mxu0
  %1860 = vdwg.mxu0
  %1861 = vst [vmem:[#allocation2] sm:$0xff] %v1752
  %1862 = vst [vmem:[#allocation2 + $0x48] sm:$0xff] %v1755
  %1863 = vst [vmem:[#allocation2 + $0x90] sm:$0xff] %v1760
  %1864 = vst [vmem:[#allocation2 + $0x8] sm:$0xff] %v1763
  %1865 = vst [vmem:[#allocation2 + $0x50] sm:$0xff] %v1768
  %1866 = vst [vmem:[#allocation2 + $0x98] sm:$0xff] %v1771
  %1867 = vst [vmem:[#allocation2 + $0x10] sm:$0xff] %v1776
  %1868 = vst [vmem:[#allocation2 + $0x58] sm:$0xff] %v1779
  %1869 = vst [vmem:[#allocation2 + $0xa0] sm:$0xff] %v1784
  %1870 = vst [vmem:[#allocation2 + $0x18] sm:$0xff] %v1787
  %1871 = vst [vmem:[#allocation2 + $0x60] sm:$0xff] %v1792
  %1872 = vst [vmem:[#allocation2 + $0xa8] sm:$0xff] %v1795
  %1873 = vst [vmem:[#allocation2 + $0x20] sm:$0xff] %v1800
  %1874 = vst [vmem:[#allocation2 + $0x68] sm:$0xff] %v1803
  %1875 = vst [vmem:[#allocation2 + $0xb0] sm:$0xff] %v1808
  %1876 = vst [vmem:[#allocation2 + $0x28] sm:$0xff] %v1811
  %1877 = vst [vmem:[#allocation2 + $0x70] sm:$0xff] %v1816
  %1878 = vst [vmem:[#allocation2 + $0xb8] sm:$0xff] %v1819
  %1879 = vst [vmem:[#allocation2 + $0x30] sm:$0xff] %v1824
  %1880 = vst [vmem:[#allocation2 + $0x78] sm:$0xff] %v1827
  %1881 = vst [vmem:[#allocation2 + $0xc0] sm:$0xff] %v1832
  %1882 = vst [vmem:[#allocation2 + $0x38] sm:$0xff] %v1835
  %1883 = vst [vmem:[#allocation2 + $0x80] sm:$0xff] %v1840
  %1884 = vst [vmem:[#allocation2 + $0xc8] sm:$0xff] %v1843
  %1885 = vst [vmem:[#allocation2 + $0x40] sm:$0xff] %v1848
  %1886 = vst [vmem:[#allocation2 + $0x88] sm:$0xff] %v1851
  %1887 = vst [vmem:[#allocation2 + $0xd0] sm:$0xff] %v1856
  %s1888 = smul.u32 4, 144
  %s1889 = smul.u32 %s1888, 1
  %s1890 = sshll.u32 %s1889, 4
  %1891 = dma.done [#allocation7], %s1890
  %v1892 = vld [vmem:[#allocation2] sm:$0xff]
  %v1893 = vld [vmem:[#allocation2 + $0x8] sm:$0xff]
  %v1894 = vld [vmem:[#allocation2 + $0x10] sm:$0xff]
  %v1895 = vld [vmem:[#allocation2 + $0x18] sm:$0xff]
  %v1896 = vld [vmem:[#allocation2 + $0x20] sm:$0xff]
  %v1897 = vld [vmem:[#allocation2 + $0x28] sm:$0xff]
  %v1898 = vld [vmem:[#allocation2 + $0x30] sm:$0xff]
  %v1899 = vld [vmem:[#allocation2 + $0x38] sm:$0xff]
  %v1900 = vld [vmem:[#allocation2 + $0x40] sm:$0xff]
  %v1901 = vld [vmem:[#allocation2 + $0x48] sm:$0xff]
  %v1902 = vld [vmem:[#allocation2 + $0x50] sm:$0xff]
  %v1903 = vld [vmem:[#allocation2 + $0x58] sm:$0xff]
  %v1904 = vld [vmem:[#allocation2 + $0x60] sm:$0xff]
  %v1905 = vld [vmem:[#allocation2 + $0x68] sm:$0xff]
  %v1906 = vld [vmem:[#allocation2 + $0x70] sm:$0xff]
  %v1907 = vld [vmem:[#allocation2 + $0x78] sm:$0xff]
  %v1908 = vld [vmem:[#allocation2 + $0x80] sm:$0xff]
  %v1909 = vld [vmem:[#allocation2 + $0x88] sm:$0xff]
  %v1910 = vld [vmem:[#allocation2 + $0x90] sm:$0xff]
  %v1911 = vld [vmem:[#allocation2 + $0x98] sm:$0xff]
  %v1912 = vld [vmem:[#allocation2 + $0xa0] sm:$0xff]
  %v1913 = vld [vmem:[#allocation2 + $0xa8] sm:$0xff]
  %v1914 = vld [vmem:[#allocation2 + $0xb0] sm:$0xff]
  %v1915 = vld [vmem:[#allocation2 + $0xb8] sm:$0xff]
  %v1916 = vld [vmem:[#allocation2 + $0xc0] sm:$0xff]
  %v1917 = vld [vmem:[#allocation2 + $0xc8] sm:$0xff]
  %v1918 = vld [vmem:[#allocation2 + $0xd0] sm:$0xff]
  %v1919 = vpack.c.bf16 %v1901, %v1892
  %v1920 = vpack.c.bf16 %v1902, %v1893
  %v1921 = vpack.c.bf16 %v1903, %v1894
  %v1922 = vpack.c.bf16 %v1904, %v1895
  %v1923 = vpack.c.bf16 %v1905, %v1896
  %v1924 = vpack.c.bf16 %v1906, %v1897
  %v1925 = vpack.c.bf16 %v1907, %v1898
  %v1926 = vpack.c.bf16 %v1908, %v1899
  %v1927 = vpack.c.bf16 %v1909, %v1900
  %v1928 = vpack.c.bf16 %v1910, %v1910
  %v1929 = vpack.c.bf16 %v1911, %v1911
  %v1930 = vpack.c.bf16 %v1912, %v1912
  %v1931 = vpack.c.bf16 %v1913, %v1913
  %v1932 = vpack.c.bf16 %v1914, %v1914
  %v1933 = vpack.c.bf16 %v1915, %v1915
  %v1934 = vpack.c.bf16 %v1916, %v1916
  %v1935 = vpack.c.bf16 %v1917, %v1917
  %v1936 = vpack.c.bf16 %v1918, %v1918
  %v1937 = vld [vmem:[#allocation4] sm:$0xf]
  %v1938 = vld [vmem:[#allocation4 + $0x4] sm:$0xf]
  %v1939 = vld [vmem:[#allocation4 + $0x8] sm:$0xf]
  %v1940 = vld [vmem:[#allocation4 + $0xc] sm:$0xf]
  %v1941 = vld [vmem:[#allocation4 + $0x10] sm:$0xf]
  %v1942 = vld [vmem:[#allocation4 + $0x14] sm:$0xf]
  %v1943 = vld [vmem:[#allocation4 + $0x18] sm:$0xf]
  %v1944 = vld [vmem:[#allocation4 + $0x1c] sm:$0xf]
  %v1945 = vld [vmem:[#allocation4 + $0x20] sm:$0xf]
  %v1946 = vld [vmem:[#allocation4 + $0x24] sm:$0xf]
  %v1947 = vld [vmem:[#allocation4 + $0x28] sm:$0xf]
  %v1948 = vld [vmem:[#allocation4 + $0x2c] sm:$0xf]
  %v1949 = vld [vmem:[#allocation4 + $0x30] sm:$0xf]
  %v1950 = vld [vmem:[#allocation4 + $0x34] sm:$0xf]
  %v1951 = vld [vmem:[#allocation4 + $0x38] sm:$0xf]
  %v1952 = vld [vmem:[#allocation4 + $0x3c] sm:$0xf]
  %v1953 = vld [vmem:[#allocation4 + $0x40] sm:$0xf]
  %v1954 = vld [vmem:[#allocation4 + $0x44] sm:$0xf]
  %v1955 = vld [vmem:[#allocation4 + $0x48] sm:$0xf]
  %v1956 = vld [vmem:[#allocation4 + $0x4c] sm:$0xf]
  %v1957 = vld [vmem:[#allocation4 + $0x50] sm:$0xf]
  %v1958 = vld [vmem:[#allocation4 + $0x54] sm:$0xf]
  %v1959 = vld [vmem:[#allocation4 + $0x58] sm:$0xf]
  %v1960 = vld [vmem:[#allocation4 + $0x5c] sm:$0xf]
  %v1961 = vld [vmem:[#allocation4 + $0x60] sm:$0xf]
  %v1962 = vld [vmem:[#allocation4 + $0x64] sm:$0xf]
  %v1963 = vld [vmem:[#allocation4 + $0x68] sm:$0xf]
  %v1964 = vld [vmem:[#allocation4 + $0x6c] sm:$0xf]
  %v1965 = vld [vmem:[#allocation4 + $0x70] sm:$0xf]
  %v1966 = vld [vmem:[#allocation4 + $0x74] sm:$0xf]
  %v1967 = vld [vmem:[#allocation4 + $0x78] sm:$0xf]
  %v1968 = vld [vmem:[#allocation4 + $0x7c] sm:$0xf]
  %v1969 = vld [vmem:[#allocation4 + $0x80] sm:$0xf]
  %v1970 = vld [vmem:[#allocation4 + $0x84] sm:$0xf]
  %v1971 = vld [vmem:[#allocation4 + $0x88] sm:$0xf]
  %v1972 = vld [vmem:[#allocation4 + $0x8c] sm:$0xf]
  %v1973 = vld [vmem:[#allocation4 + $0x90] sm:$0xf]
  %v1974 = vld [vmem:[#allocation4 + $0x94] sm:$0xf]
  %v1975 = vld [vmem:[#allocation4 + $0x98] sm:$0xf]
  %v1976 = vld [vmem:[#allocation4 + $0x9c] sm:$0xf]
  %v1977 = vld [vmem:[#allocation4 + $0xa0] sm:$0xf]
  %v1978 = vld [vmem:[#allocation4 + $0xa4] sm:$0xf]
  %v1979 = vld [vmem:[#allocation4 + $0xa8] sm:$0xf]
  %v1980 = vld [vmem:[#allocation4 + $0xac] sm:$0xf]
  %v1981 = vld [vmem:[#allocation4 + $0xb0] sm:$0xf]
  %v1982 = vld [vmem:[#allocation4 + $0xb4] sm:$0xf]
  %v1983 = vld [vmem:[#allocation4 + $0xb8] sm:$0xf]
  %v1984 = vld [vmem:[#allocation4 + $0xbc] sm:$0xf]
  %v1985 = vld [vmem:[#allocation4 + $0xc0] sm:$0xf]
  %v1986 = vld [vmem:[#allocation4 + $0xc4] sm:$0xf]
  %v1987 = vld [vmem:[#allocation4 + $0xc8] sm:$0xf]
  %v1988 = vld [vmem:[#allocation4 + $0xcc] sm:$0xf]
  %v1989 = vld [vmem:[#allocation4 + $0xd0] sm:$0xf]
  %v1990 = vld [vmem:[#allocation4 + $0xd4] sm:$0xf]
  %v1991 = vld [vmem:[#allocation4 + $0xd8] sm:$0xf]
  %v1992 = vld [vmem:[#allocation4 + $0xdc] sm:$0xf]
  %v1993 = vld [vmem:[#allocation4 + $0xe0] sm:$0xf]
  %v1994 = vld [vmem:[#allocation4 + $0xe4] sm:$0xf]
  %v1995 = vld [vmem:[#allocation4 + $0xe8] sm:$0xf]
  %v1996 = vld [vmem:[#allocation4 + $0xec] sm:$0xf]
  %v1997 = vld [vmem:[#allocation4 + $0xf0] sm:$0xf]
  %v1998 = vld [vmem:[#allocation4 + $0xf4] sm:$0xf]
  %v1999 = vld [vmem:[#allocation4 + $0xf8] sm:$0xf]
  %v2000 = vld [vmem:[#allocation4 + $0xfc] sm:$0xf]
  %v2001 = vld [vmem:[#allocation4 + $0x100] sm:$0xf]
  %v2002 = vld [vmem:[#allocation4 + $0x104] sm:$0xf]
  %v2003 = vld [vmem:[#allocation4 + $0x108] sm:$0xf]
  %v2004 = vld [vmem:[#allocation4 + $0x10c] sm:$0xf]
  %v2005 = vld [vmem:[#allocation4 + $0x110] sm:$0xf]
  %v2006 = vld [vmem:[#allocation4 + $0x114] sm:$0xf]
  %v2007 = vld [vmem:[#allocation4 + $0x118] sm:$0xf]
  %v2008 = vld [vmem:[#allocation4 + $0x11c] sm:$0xf]
  %v2009 = vld [vmem:[#allocation4 + $0x120] sm:$0xf]
  %v2010 = vld [vmem:[#allocation4 + $0x124] sm:$0xf]
  %v2011 = vld [vmem:[#allocation4 + $0x128] sm:$0xf]
  %v2012 = vld [vmem:[#allocation4 + $0x12c] sm:$0xf]
  %v2013 = vld [vmem:[#allocation4 + $0x130] sm:$0xf]
  %v2014 = vld [vmem:[#allocation4 + $0x134] sm:$0xf]
  %v2015 = vld [vmem:[#allocation4 + $0x138] sm:$0xf]
  %v2016 = vld [vmem:[#allocation4 + $0x13c] sm:$0xf]
  %v2017 = vld [vmem:[#allocation4 + $0x140] sm:$0xf]
  %v2018 = vld [vmem:[#allocation4 + $0x144] sm:$0xf]
  %v2019 = vld [vmem:[#allocation4 + $0x148] sm:$0xf]
  %v2020 = vld [vmem:[#allocation4 + $0x14c] sm:$0xf]
  %v2021 = vld [vmem:[#allocation4 + $0x150] sm:$0xf]
  %v2022 = vld [vmem:[#allocation4 + $0x154] sm:$0xf]
  %v2023 = vld [vmem:[#allocation4 + $0x158] sm:$0xf]
  %v2024 = vld [vmem:[#allocation4 + $0x15c] sm:$0xf]
  %v2025 = vld [vmem:[#allocation4 + $0x160] sm:$0xf]
  %v2026 = vld [vmem:[#allocation4 + $0x164] sm:$0xf]
  %v2027 = vld [vmem:[#allocation4 + $0x168] sm:$0xf]
  %v2028 = vld [vmem:[#allocation4 + $0x16c] sm:$0xf]
  %v2029 = vld [vmem:[#allocation4 + $0x170] sm:$0xf]
  %v2030 = vld [vmem:[#allocation4 + $0x174] sm:$0xf]
  %v2031 = vld [vmem:[#allocation4 + $0x178] sm:$0xf]
  %v2032 = vld [vmem:[#allocation4 + $0x17c] sm:$0xf]
  %v2033 = vld [vmem:[#allocation4 + $0x180] sm:$0xf]
  %v2034 = vld [vmem:[#allocation4 + $0x184] sm:$0xf]
  %v2035 = vld [vmem:[#allocation4 + $0x188] sm:$0xf]
  %v2036 = vld [vmem:[#allocation4 + $0x18c] sm:$0xf]
  %v2037 = vld [vmem:[#allocation4 + $0x190] sm:$0xf]
  %v2038 = vld [vmem:[#allocation4 + $0x194] sm:$0xf]
  %v2039 = vld [vmem:[#allocation4 + $0x198] sm:$0xf]
  %v2040 = vld [vmem:[#allocation4 + $0x19c] sm:$0xf]
  %v2041 = vld [vmem:[#allocation4 + $0x1a0] sm:$0xf]
  %v2042 = vld [vmem:[#allocation4 + $0x1a4] sm:$0xf]
  %v2043 = vld [vmem:[#allocation4 + $0x1a8] sm:$0xf]
  %v2044 = vld [vmem:[#allocation4 + $0x1ac] sm:$0xf]
  %v2045 = vld [vmem:[#allocation4 + $0x1b0] sm:$0xf]
  %v2046 = vld [vmem:[#allocation4 + $0x1b4] sm:$0xf]
  %v2047 = vld [vmem:[#allocation4 + $0x1b8] sm:$0xf]
  %v2048 = vld [vmem:[#allocation4 + $0x1bc] sm:$0xf]
  %v2049 = vld [vmem:[#allocation4 + $0x1c0] sm:$0xf]
  %v2050 = vld [vmem:[#allocation4 + $0x1c4] sm:$0xf]
  %v2051 = vld [vmem:[#allocation4 + $0x1c8] sm:$0xf]
  %v2052 = vld [vmem:[#allocation4 + $0x1cc] sm:$0xf]
  %v2053 = vld [vmem:[#allocation4 + $0x1d0] sm:$0xf]
  %v2054 = vld [vmem:[#allocation4 + $0x1d4] sm:$0xf]
  %v2055 = vld [vmem:[#allocation4 + $0x1d8] sm:$0xf]
  %v2056 = vld [vmem:[#allocation4 + $0x1dc] sm:$0xf]
  %v2057 = vld [vmem:[#allocation4 + $0x1e0] sm:$0xf]
  %v2058 = vld [vmem:[#allocation4 + $0x1e4] sm:$0xf]
  %v2059 = vld [vmem:[#allocation4 + $0x1e8] sm:$0xf]
  %v2060 = vld [vmem:[#allocation4 + $0x1ec] sm:$0xf]
  %v2061 = vld [vmem:[#allocation4 + $0x1f0] sm:$0xf]
  %v2062 = vld [vmem:[#allocation4 + $0x1f4] sm:$0xf]
  %v2063 = vld [vmem:[#allocation4 + $0x1f8] sm:$0xf]
  %v2064 = vld [vmem:[#allocation4 + $0x1fc] sm:$0xf]
  %v2065 = vld [vmem:[#allocation4 + $0x200] sm:$0xf]
  %v2066 = vld [vmem:[#allocation4 + $0x204] sm:$0xf]
  %v2067 = vld [vmem:[#allocation4 + $0x208] sm:$0xf]
  %v2068 = vld [vmem:[#allocation4 + $0x20c] sm:$0xf]
  %v2069 = vld [vmem:[#allocation4 + $0x210] sm:$0xf]
  %v2070 = vld [vmem:[#allocation4 + $0x214] sm:$0xf]
  %v2071 = vld [vmem:[#allocation4 + $0x218] sm:$0xf]
  %v2072 = vld [vmem:[#allocation4 + $0x21c] sm:$0xf]
  %v2073 = vld [vmem:[#allocation4 + $0x220] sm:$0xf]
  %v2074 = vld [vmem:[#allocation4 + $0x224] sm:$0xf]
  %v2075 = vld [vmem:[#allocation4 + $0x228] sm:$0xf]
  %v2076 = vld [vmem:[#allocation4 + $0x22c] sm:$0xf]
  %v2077 = vld [vmem:[#allocation4 + $0x230] sm:$0xf]
  %v2078 = vld [vmem:[#allocation4 + $0x234] sm:$0xf]
  %v2079 = vld [vmem:[#allocation4 + $0x238] sm:$0xf]
  %v2080 = vld [vmem:[#allocation4 + $0x23c] sm:$0xf]
  %s2081 = scalar_lea.vmem %s4, 1
  %v2082 = vld [vmem:[%s2081] sm:$0x1]
  %v2084 = vlaneseq
  %v2085 = vshrl.u32 %v2084, 7
  %v2086 = vsub.s32 0, %v2085
  %v2087 = vrot.slane %v2082, %v2086
  %v2233 = vunpack.c.l.b16 %v1937
  %v2234 = vunpack.c.l.b16 %v1938
  %v2235 = vunpack.c.l.b16 %v1939
  %v2236 = vunpack.c.l.b16 %v1940
  %v2237 = vunpack.c.l.b16 %v1941
  %v2238 = vunpack.c.l.b16 %v1942
  %v2239 = vunpack.c.l.b16 %v1943
  %v2240 = vunpack.c.l.b16 %v1944
  %v2241 = vunpack.c.l.b16 %v1945
  %v2242 = vunpack.c.l.b16 %v1946
  %v2243 = vunpack.c.l.b16 %v1947
  %v2244 = vunpack.c.l.b16 %v1948
  %v2245 = vunpack.c.l.b16 %v1949
  %v2246 = vunpack.c.l.b16 %v1950
  %v2247 = vunpack.c.l.b16 %v1951
  %v2248 = vunpack.c.l.b16 %v1952
  %v2249 = vunpack.c.l.b16 %v1953
  %v2250 = vunpack.c.l.b16 %v1954
  %v2251 = vunpack.c.l.b16 %v1955
  %v2252 = vunpack.c.l.b16 %v1956
  %v2253 = vunpack.c.l.b16 %v1957
  %v2254 = vunpack.c.l.b16 %v1958
  %v2255 = vunpack.c.l.b16 %v1959
  %v2256 = vunpack.c.l.b16 %v1960
  %v2257 = vunpack.c.l.b16 %v1961
  %v2258 = vunpack.c.l.b16 %v1962
  %v2259 = vunpack.c.l.b16 %v1963
  %v2260 = vunpack.c.l.b16 %v1964
  %v2261 = vunpack.c.l.b16 %v1965
  %v2262 = vunpack.c.l.b16 %v1966
  %v2263 = vunpack.c.l.b16 %v1967
  %v2264 = vunpack.c.l.b16 %v1968
  %v2265 = vunpack.c.l.b16 %v1969
  %v2266 = vunpack.c.l.b16 %v1970
  %v2267 = vunpack.c.l.b16 %v1971
  %v2268 = vunpack.c.l.b16 %v1972
  %v2269 = vunpack.c.l.b16 %v1973
  %v2270 = vunpack.c.l.b16 %v1974
  %v2271 = vunpack.c.l.b16 %v1975
  %v2272 = vunpack.c.l.b16 %v1976
  %v2273 = vunpack.c.l.b16 %v1977
  %v2274 = vunpack.c.l.b16 %v1978
  %v2275 = vunpack.c.l.b16 %v1979
  %v2276 = vunpack.c.l.b16 %v1980
  %v2277 = vunpack.c.l.b16 %v1981
  %v2278 = vunpack.c.l.b16 %v1982
  %v2279 = vunpack.c.l.b16 %v1983
  %v2280 = vunpack.c.l.b16 %v1984
  %v2281 = vunpack.c.l.b16 %v1985
  %v2282 = vunpack.c.l.b16 %v1986
  %v2283 = vunpack.c.l.b16 %v1987
  %v2284 = vunpack.c.l.b16 %v1988
  %v2285 = vunpack.c.l.b16 %v1989
  %v2286 = vunpack.c.l.b16 %v1990
  %v2287 = vunpack.c.l.b16 %v1991
  %v2288 = vunpack.c.l.b16 %v1992
  %v2289 = vunpack.c.l.b16 %v1993
  %v2290 = vunpack.c.l.b16 %v1994
  %v2291 = vunpack.c.l.b16 %v1995
  %v2292 = vunpack.c.l.b16 %v1996
  %v2293 = vunpack.c.l.b16 %v1997
  %v2294 = vunpack.c.l.b16 %v1998
  %v2295 = vunpack.c.l.b16 %v1999
  %v2296 = vunpack.c.l.b16 %v2000
  %v2297 = vunpack.c.l.b16 %v2001
  %v2298 = vunpack.c.l.b16 %v2002
  %v2299 = vunpack.c.l.b16 %v2003
  %v2300 = vunpack.c.l.b16 %v2004
  %v2301 = vunpack.c.l.b16 %v2005
  %v2302 = vunpack.c.l.b16 %v2006
  %v2303 = vunpack.c.l.b16 %v2007
  %v2304 = vunpack.c.l.b16 %v2008
  %v2305 = vunpack.c.l.b16 %v2009
  %v2306 = vunpack.c.l.b16 %v2010
  %v2307 = vunpack.c.l.b16 %v2011
  %v2308 = vunpack.c.l.b16 %v2012
  %v2309 = vunpack.c.l.b16 %v2013
  %v2310 = vunpack.c.l.b16 %v2014
  %v2311 = vunpack.c.l.b16 %v2015
  %v2312 = vunpack.c.l.b16 %v2016
  %v2313 = vunpack.c.l.b16 %v2017
  %v2314 = vunpack.c.l.b16 %v2018
  %v2315 = vunpack.c.l.b16 %v2019
  %v2316 = vunpack.c.l.b16 %v2020
  %v2317 = vunpack.c.l.b16 %v2021
  %v2318 = vunpack.c.l.b16 %v2022
  %v2319 = vunpack.c.l.b16 %v2023
  %v2320 = vunpack.c.l.b16 %v2024
  %v2321 = vunpack.c.l.b16 %v2025
  %v2322 = vunpack.c.l.b16 %v2026
  %v2323 = vunpack.c.l.b16 %v2027
  %v2324 = vunpack.c.l.b16 %v2028
  %v2325 = vunpack.c.l.b16 %v2029
  %v2326 = vunpack.c.l.b16 %v2030
  %v2327 = vunpack.c.l.b16 %v2031
  %v2328 = vunpack.c.l.b16 %v2032
  %v2329 = vunpack.c.l.b16 %v2033
  %v2330 = vunpack.c.l.b16 %v2034
  %v2331 = vunpack.c.l.b16 %v2035
  %v2332 = vunpack.c.l.b16 %v2036
  %v2333 = vunpack.c.l.b16 %v2037
  %v2334 = vunpack.c.l.b16 %v2038
  %v2335 = vunpack.c.l.b16 %v2039
  %v2336 = vunpack.c.l.b16 %v2040
  %v2337 = vunpack.c.l.b16 %v2041
  %v2338 = vunpack.c.l.b16 %v2042
  %v2339 = vunpack.c.l.b16 %v2043
  %v2340 = vunpack.c.l.b16 %v2044
  %v2341 = vunpack.c.l.b16 %v2045
  %v2342 = vunpack.c.l.b16 %v2046
  %v2343 = vunpack.c.l.b16 %v2047
  %v2344 = vunpack.c.l.b16 %v2048
  %v2345 = vunpack.c.l.b16 %v2049
  %v2346 = vunpack.c.l.b16 %v2050
  %v2347 = vunpack.c.l.b16 %v2051
  %v2348 = vunpack.c.l.b16 %v2052
  %v2349 = vunpack.c.l.b16 %v2053
  %v2350 = vunpack.c.l.b16 %v2054
  %v2351 = vunpack.c.l.b16 %v2055
  %v2352 = vunpack.c.l.b16 %v2056
  %v2353 = vunpack.c.l.b16 %v2057
  %v2354 = vunpack.c.l.b16 %v2058
  %v2355 = vunpack.c.l.b16 %v2059
  %v2356 = vunpack.c.l.b16 %v2060
  %v2357 = vunpack.c.l.b16 %v2061
  %v2358 = vunpack.c.l.b16 %v2062
  %v2359 = vunpack.c.l.b16 %v2063
  %v2360 = vunpack.c.l.b16 %v2064
  %v2361 = vunpack.c.l.b16 %v2065
  %v2362 = vunpack.c.l.b16 %v2066
  %v2363 = vunpack.c.l.b16 %v2067
  %v2364 = vunpack.c.l.b16 %v2068
  %v2365 = vunpack.c.l.b16 %v2069
  %v2366 = vunpack.c.l.b16 %v2070
  %v2367 = vunpack.c.l.b16 %v2071
  %v2368 = vunpack.c.l.b16 %v2072
  %v2369 = vunpack.c.l.b16 %v2073
  %v2370 = vunpack.c.l.b16 %v2074
  %v2371 = vunpack.c.l.b16 %v2075
  %v2372 = vunpack.c.l.b16 %v2076
  %v2373 = vunpack.c.l.b16 %v2077
  %v2374 = vunpack.c.l.b16 %v2078
  %v2375 = vunpack.c.l.b16 %v2079
  %v2376 = vunpack.c.l.b16 %v2080
  %v2377 = vpack.c.b16 %v2234, %v2233
  %v2378 = vpack.c.b16 %v2236, %v2235
  %v2379 = vpack.c.b16 %v2238, %v2237
  %v2380 = vpack.c.b16 %v2240, %v2239
  %v2381 = vpack.c.b16 %v2242, %v2241
  %v2382 = vpack.c.b16 %v2244, %v2243
  %v2383 = vpack.c.b16 %v2246, %v2245
  %v2384 = vpack.c.b16 %v2248, %v2247
  %v2385 = vpack.c.b16 %v2250, %v2249
  %v2386 = vpack.c.b16 %v2252, %v2251
  %v2387 = vpack.c.b16 %v2254, %v2253
  %v2388 = vpack.c.b16 %v2256, %v2255
  %v2389 = vpack.c.b16 %v2258, %v2257
  %v2390 = vpack.c.b16 %v2260, %v2259
  %v2391 = vpack.c.b16 %v2262, %v2261
  %v2392 = vpack.c.b16 %v2264, %v2263
  %v2393 = vpack.c.b16 %v2266, %v2265
  %v2394 = vpack.c.b16 %v2268, %v2267
  %v2395 = vpack.c.b16 %v2270, %v2269
  %v2396 = vpack.c.b16 %v2272, %v2271
  %v2397 = vpack.c.b16 %v2274, %v2273
  %v2398 = vpack.c.b16 %v2276, %v2275
  %v2399 = vpack.c.b16 %v2278, %v2277
  %v2400 = vpack.c.b16 %v2280, %v2279
  %v2401 = vpack.c.b16 %v2282, %v2281
  %v2402 = vpack.c.b16 %v2284, %v2283
  %v2403 = vpack.c.b16 %v2286, %v2285
  %v2404 = vpack.c.b16 %v2288, %v2287
  %v2405 = vpack.c.b16 %v2290, %v2289
  %v2406 = vpack.c.b16 %v2292, %v2291
  %v2407 = vpack.c.b16 %v2294, %v2293
  %v2408 = vpack.c.b16 %v2296, %v2295
  %v2409 = vpack.c.b16 %v2298, %v2297
  %v2410 = vpack.c.b16 %v2300, %v2299
  %v2411 = vpack.c.b16 %v2302, %v2301
  %v2412 = vpack.c.b16 %v2304, %v2303
  %v2413 = vpack.c.b16 %v2306, %v2305
  %v2414 = vpack.c.b16 %v2308, %v2307
  %v2415 = vpack.c.b16 %v2310, %v2309
  %v2416 = vpack.c.b16 %v2312, %v2311
  %v2417 = vpack.c.b16 %v2314, %v2313
  %v2418 = vpack.c.b16 %v2316, %v2315
  %v2419 = vpack.c.b16 %v2318, %v2317
  %v2420 = vpack.c.b16 %v2320, %v2319
  %v2421 = vpack.c.b16 %v2322, %v2321
  %v2422 = vpack.c.b16 %v2324, %v2323
  %v2423 = vpack.c.b16 %v2326, %v2325
  %v2424 = vpack.c.b16 %v2328, %v2327
  %v2425 = vpack.c.b16 %v2330, %v2329
  %v2426 = vpack.c.b16 %v2332, %v2331
  %v2427 = vpack.c.b16 %v2334, %v2333
  %v2428 = vpack.c.b16 %v2336, %v2335
  %v2429 = vpack.c.b16 %v2338, %v2337
  %v2430 = vpack.c.b16 %v2340, %v2339
  %v2431 = vpack.c.b16 %v2342, %v2341
  %v2432 = vpack.c.b16 %v2344, %v2343
  %v2433 = vpack.c.b16 %v2346, %v2345
  %v2434 = vpack.c.b16 %v2348, %v2347
  %v2435 = vpack.c.b16 %v2350, %v2349
  %v2436 = vpack.c.b16 %v2352, %v2351
  %v2437 = vpack.c.b16 %v2354, %v2353
  %v2438 = vpack.c.b16 %v2356, %v2355
  %v2439 = vpack.c.b16 %v2358, %v2357
  %v2440 = vpack.c.b16 %v2360, %v2359
  %v2441 = vpack.c.b16 %v2362, %v2361
  %v2442 = vpack.c.b16 %v2364, %v2363
  %v2443 = vpack.c.b16 %v2366, %v2365
  %v2444 = vpack.c.b16 %v2368, %v2367
  %v2445 = vpack.c.b16 %v2370, %v2369
  %v2446 = vpack.c.b16 %v2372, %v2371
  %v2447 = vpack.c.b16 %v2374, %v2373
  %v2448 = vpack.c.b16 %v2376, %v2375
  %2521 = vmatprep.subr.bf16.mxu0 0
  %2522 = vmatpush1.bf16.msra.mxu0 %v2384
  %2523 = vmatprep.subr.bf16.mxu0 0
  %2524 = vmatpush1.bf16.msra.mxu0 %v2383
  %2525 = vmatprep.subr.bf16.mxu0 0
  %2526 = vmatpush1.bf16.msra.mxu0 %v2382
  %2527 = vmatprep.subr.bf16.mxu0 0
  %2528 = vmatpush1.bf16.msra.mxu0 %v2381
  %2529 = vmatprep.subr.bf16.mxu0 0
  %2530 = vmatpush1.bf16.msra.mxu0 %v2380
  %2531 = vmatprep.subr.bf16.mxu0 0
  %2532 = vmatpush1.bf16.msra.mxu0 %v2379
  %2533 = vmatprep.subr.bf16.mxu0 0
  %2534 = vmatpush1.bf16.msra.mxu0 %v2378
  %2535 = vmatprep.subr.bf16.mxu0 0
  %2536 = vmatpush1.bf16.msra.mxu0 %v2377
  %2537 = vmatprep.subr.bf16.mxu0 0
  %2538 = vmatpush2.bf16.msra.mxu0 %v2392
  %2539 = vmatprep.subr.bf16.mxu0 0
  %2540 = vmatpush2.bf16.msra.mxu0 %v2391
  %2541 = vmatprep.subr.bf16.mxu0 0
  %2542 = vmatpush2.bf16.msra.mxu0 %v2390
  %2543 = vmatprep.subr.bf16.mxu0 0
  %2544 = vmatpush2.bf16.msra.mxu0 %v2389
  %2545 = vmatprep.subr.bf16.mxu0 0
  %2546 = vmatpush2.bf16.msra.mxu0 %v2388
  %2547 = vmatprep.subr.bf16.mxu0 0
  %2548 = vmatpush2.bf16.msra.mxu0 %v2387
  %2549 = vmatprep.subr.bf16.mxu0 0
  %2550 = vmatpush2.bf16.msra.mxu0 %v2386
  %2551 = vmatprep.subr.bf16.mxu0 0
  %2552 = vmatpush2.bf16.msra.mxu0 %v2385
  %2553 = vmatprep.mubr.bf16.mxu0 %v1920
  %2554 = vmatmul.mubr.bf16.gmra.mxu0 %v1919
  %v2555 = vpop.f32.mrf.mxu0
  %v2556 = vadd.f32 %v2087, %v2555
  %v2557 = vpop.f32.mrf.mxu0
  %v2558 = vpop.f32.mrf.mxu0
  %v2559 = vadd.f32 %v2087, %v2558
  %v2560 = vpop.f32.mrf.mxu0
  %2561 = vmatprep.mubr.bf16.mxu0 %v1929
  %2562 = vmatmul.mubr.bf16.gmra.mxu0 %v1928
  %v2563 = vpop.f32.mrf.mxu0
  %v2564 = vadd.f32 %v2087, %v2563
  %v2565 = vpop.f32.mrf.mxu0
  %v2566 = vpop.f32.mrf.mxu0
  %v2567 = vpop.f32.mrf.mxu0
  %2568 = vdwg.mxu0
  %2569 = vmatprep.subr.bf16.mxu0 0
  %2570 = vmatpush1.bf16.msra.mxu0 %v2400
  %2571 = vmatprep.subr.bf16.mxu0 0
  %2572 = vmatpush1.bf16.msra.mxu0 %v2399
  %2573 = vmatprep.subr.bf16.mxu0 0
  %2574 = vmatpush1.bf16.msra.mxu0 %v2398
  %2575 = vmatprep.subr.bf16.mxu0 0
  %2576 = vmatpush1.bf16.msra.mxu0 %v2397
  %2577 = vmatprep.subr.bf16.mxu0 0
  %2578 = vmatpush1.bf16.msra.mxu0 %v2396
  %2579 = vmatprep.subr.bf16.mxu0 0
  %2580 = vmatpush1.bf16.msra.mxu0 %v2395
  %2581 = vmatprep.subr.bf16.mxu0 0
  %2582 = vmatpush1.bf16.msra.mxu0 %v2394
  %2583 = vmatprep.subr.bf16.mxu0 0
  %2584 = vmatpush1.bf16.msra.mxu0 %v2393
  %2585 = vmatprep.subr.bf16.mxu0 0
  %2586 = vmatpush2.bf16.msra.mxu0 %v2408
  %2587 = vmatprep.subr.bf16.mxu0 0
  %2588 = vmatpush2.bf16.msra.mxu0 %v2407
  %2589 = vmatprep.subr.bf16.mxu0 0
  %2590 = vmatpush2.bf16.msra.mxu0 %v2406
  %2591 = vmatprep.subr.bf16.mxu0 0
  %2592 = vmatpush2.bf16.msra.mxu0 %v2405
  %2593 = vmatprep.subr.bf16.mxu0 0
  %2594 = vmatpush2.bf16.msra.mxu0 %v2404
  %2595 = vmatprep.subr.bf16.mxu0 0
  %2596 = vmatpush2.bf16.msra.mxu0 %v2403
  %2597 = vmatprep.subr.bf16.mxu0 0
  %2598 = vmatpush2.bf16.msra.mxu0 %v2402
  %2599 = vmatprep.subr.bf16.mxu0 0
  %2600 = vmatpush2.bf16.msra.mxu0 %v2401
  %2601 = vmatprep.mubr.bf16.mxu0 %v1922
  %2602 = vmatmul.mubr.bf16.gmra.mxu0 %v1921
  %v2603 = vpop.f32.mrf.mxu0
  %v2604 = vadd.f32 %v2556, %v2603
  %v2605 = vpop.f32.mrf.mxu0
  %v2606 = vpop.f32.mrf.mxu0
  %v2607 = vadd.f32 %v2559, %v2606
  %v2608 = vpop.f32.mrf.mxu0
  %2609 = vmatprep.mubr.bf16.mxu0 %v1931
  %2610 = vmatmul.mubr.bf16.gmra.mxu0 %v1930
  %v2611 = vpop.f32.mrf.mxu0
  %v2612 = vadd.f32 %v2564, %v2611
  %v2613 = vpop.f32.mrf.mxu0
  %v2614 = vpop.f32.mrf.mxu0
  %v2615 = vpop.f32.mrf.mxu0
  %2616 = vdwg.mxu0
  %2617 = vmatprep.subr.bf16.mxu0 0
  %2618 = vmatpush1.bf16.msra.mxu0 %v2416
  %2619 = vmatprep.subr.bf16.mxu0 0
  %2620 = vmatpush1.bf16.msra.mxu0 %v2415
  %2621 = vmatprep.subr.bf16.mxu0 0
  %2622 = vmatpush1.bf16.msra.mxu0 %v2414
  %2623 = vmatprep.subr.bf16.mxu0 0
  %2624 = vmatpush1.bf16.msra.mxu0 %v2413
  %2625 = vmatprep.subr.bf16.mxu0 0
  %2626 = vmatpush1.bf16.msra.mxu0 %v2412
  %2627 = vmatprep.subr.bf16.mxu0 0
  %2628 = vmatpush1.bf16.msra.mxu0 %v2411
  %2629 = vmatprep.subr.bf16.mxu0 0
  %2630 = vmatpush1.bf16.msra.mxu0 %v2410
  %2631 = vmatprep.subr.bf16.mxu0 0
  %2632 = vmatpush1.bf16.msra.mxu0 %v2409
  %2633 = vmatprep.subr.bf16.mxu0 0
  %2634 = vmatpush2.bf16.msra.mxu0 %v2424
  %2635 = vmatprep.subr.bf16.mxu0 0
  %2636 = vmatpush2.bf16.msra.mxu0 %v2423
  %2637 = vmatprep.subr.bf16.mxu0 0
  %2638 = vmatpush2.bf16.msra.mxu0 %v2422
  %2639 = vmatprep.subr.bf16.mxu0 0
  %2640 = vmatpush2.bf16.msra.mxu0 %v2421
  %2641 = vmatprep.subr.bf16.mxu0 0
  %2642 = vmatpush2.bf16.msra.mxu0 %v2420
  %2643 = vmatprep.subr.bf16.mxu0 0
  %2644 = vmatpush2.bf16.msra.mxu0 %v2419
  %2645 = vmatprep.subr.bf16.mxu0 0
  %2646 = vmatpush2.bf16.msra.mxu0 %v2418
  %2647 = vmatprep.subr.bf16.mxu0 0
  %2648 = vmatpush2.bf16.msra.mxu0 %v2417
  %2649 = vmatprep.mubr.bf16.mxu0 %v1924
  %2650 = vmatmul.mubr.bf16.gmra.mxu0 %v1923
  %v2651 = vpop.f32.mrf.mxu0
  %v2652 = vadd.f32 %v2604, %v2651
  %v2653 = vpop.f32.mrf.mxu0
  %v2654 = vpop.f32.mrf.mxu0
  %v2655 = vadd.f32 %v2607, %v2654
  %v2656 = vpop.f32.mrf.mxu0
  %2657 = vmatprep.mubr.bf16.mxu0 %v1933
  %2658 = vmatmul.mubr.bf16.gmra.mxu0 %v1932
  %v2659 = vpop.f32.mrf.mxu0
  %v2660 = vadd.f32 %v2612, %v2659
  %v2661 = vpop.f32.mrf.mxu0
  %v2662 = vpop.f32.mrf.mxu0
  %v2663 = vpop.f32.mrf.mxu0
  %2664 = vdwg.mxu0
  %2665 = vmatprep.subr.bf16.mxu0 0
  %2666 = vmatpush1.bf16.msra.mxu0 %v2432
  %2667 = vmatprep.subr.bf16.mxu0 0
  %2668 = vmatpush1.bf16.msra.mxu0 %v2431
  %2669 = vmatprep.subr.bf16.mxu0 0
  %2670 = vmatpush1.bf16.msra.mxu0 %v2430
  %2671 = vmatprep.subr.bf16.mxu0 0
  %2672 = vmatpush1.bf16.msra.mxu0 %v2429
  %2673 = vmatprep.subr.bf16.mxu0 0
  %2674 = vmatpush1.bf16.msra.mxu0 %v2428
  %2675 = vmatprep.subr.bf16.mxu0 0
  %2676 = vmatpush1.bf16.msra.mxu0 %v2427
  %2677 = vmatprep.subr.bf16.mxu0 0
  %2678 = vmatpush1.bf16.msra.mxu0 %v2426
  %2679 = vmatprep.subr.bf16.mxu0 0
  %2680 = vmatpush1.bf16.msra.mxu0 %v2425
  %2681 = vmatprep.subr.bf16.mxu0 0
  %2682 = vmatpush2.bf16.msra.mxu0 %v2440
  %2683 = vmatprep.subr.bf16.mxu0 0
  %2684 = vmatpush2.bf16.msra.mxu0 %v2439
  %2685 = vmatprep.subr.bf16.mxu0 0
  %2686 = vmatpush2.bf16.msra.mxu0 %v2438
  %2687 = vmatprep.subr.bf16.mxu0 0
  %2688 = vmatpush2.bf16.msra.mxu0 %v2437
  %2689 = vmatprep.subr.bf16.mxu0 0
  %2690 = vmatpush2.bf16.msra.mxu0 %v2436
  %2691 = vmatprep.subr.bf16.mxu0 0
  %2692 = vmatpush2.bf16.msra.mxu0 %v2435
  %2693 = vmatprep.subr.bf16.mxu0 0
  %2694 = vmatpush2.bf16.msra.mxu0 %v2434
  %2695 = vmatprep.subr.bf16.mxu0 0
  %2696 = vmatpush2.bf16.msra.mxu0 %v2433
  %2697 = vmatprep.mubr.bf16.mxu0 %v1926
  %2698 = vmatmul.mubr.bf16.gmra.mxu0 %v1925
  %v2699 = vpop.f32.mrf.mxu0
  %v2700 = vadd.f32 %v2652, %v2699
  %v2701 = vpop.f32.mrf.mxu0
  %v2702 = vpop.f32.mrf.mxu0
  %v2703 = vadd.f32 %v2655, %v2702
  %v2704 = vpop.f32.mrf.mxu0
  %2705 = vmatprep.mubr.bf16.mxu0 %v1935
  %2706 = vmatmul.mubr.bf16.gmra.mxu0 %v1934
  %v2707 = vpop.f32.mrf.mxu0
  %v2708 = vadd.f32 %v2660, %v2707
  %v2709 = vpop.f32.mrf.mxu0
  %v2710 = vpop.f32.mrf.mxu0
  %v2711 = vpop.f32.mrf.mxu0
  %2712 = vdwg.mxu0
  %2713 = vmatprep.subr.bf16.mxu0 0
  %2714 = vmatpush1.bf16.msra.mxu0 %v2448
  %2715 = vmatprep.subr.bf16.mxu0 0
  %2716 = vmatpush1.bf16.msra.mxu0 %v2447
  %2717 = vmatprep.subr.bf16.mxu0 0
  %2718 = vmatpush1.bf16.msra.mxu0 %v2446
  %2719 = vmatprep.subr.bf16.mxu0 0
  %2720 = vmatpush1.bf16.msra.mxu0 %v2445
  %2721 = vmatprep.subr.bf16.mxu0 0
  %2722 = vmatpush1.bf16.msra.mxu0 %v2444
  %2723 = vmatprep.subr.bf16.mxu0 0
  %2724 = vmatpush1.bf16.msra.mxu0 %v2443
  %2725 = vmatprep.subr.bf16.mxu0 0
  %2726 = vmatpush1.bf16.msra.mxu0 %v2442
  %2727 = vmatprep.subr.bf16.mxu0 0
  %2728 = vmatpush1.bf16.msra.mxu0 %v2441
  %2729 = vmatprep.subr.bf16.mxu0 0
  %2730 = vmatpush2.bf16.msra.mxu0 0
  %2731 = vmatprep.subr.bf16.mxu0 0
  %2732 = vmatpush2.bf16.msra.mxu0 0
  %2733 = vmatprep.subr.bf16.mxu0 0
  %2734 = vmatpush2.bf16.msra.mxu0 0
  %2735 = vmatprep.subr.bf16.mxu0 0
  %2736 = vmatpush2.bf16.msra.mxu0 0
  %2737 = vmatprep.subr.bf16.mxu0 0
  %2738 = vmatpush2.bf16.msra.mxu0 0
  %2739 = vmatprep.subr.bf16.mxu0 0
  %2740 = vmatpush2.bf16.msra.mxu0 0
  %2741 = vmatprep.subr.bf16.mxu0 0
  %2742 = vmatpush2.bf16.msra.mxu0 0
  %2743 = vmatprep.subr.bf16.mxu0 0
  %2744 = vmatpush2.bf16.msra.mxu0 0
  %2745 = vmatprep.mubr.bf16.mxu0 0
  %2746 = vmatmul.mubr.bf16.gmra.mxu0 %v1927
  %v2747 = vpop.f32.mrf.mxu0
  %v2748 = vadd.f32 %v2700, %v2747
  %v2749 = vpop.f32.mrf.mxu0
  %v2750 = vpop.f32.mrf.mxu0
  %v2751 = vadd.f32 %v2703, %v2750
  %v2752 = vpop.f32.mrf.mxu0
  %2753 = vmatprep.mubr.bf16.mxu0 0
  %2754 = vmatmul.mubr.bf16.gmra.mxu0 %v1936
  %v2755 = vpop.f32.mrf.mxu0
  %v2756 = vadd.f32 %v2708, %v2755
  %v2757 = vpop.f32.mrf.mxu0
  %v2758 = vpop.f32.mrf.mxu0
  %v2759 = vpop.f32.mrf.mxu0
  %2760 = vdwg.mxu0
  %v2761 = vmax.f32 %v2748, 0.0
  %v2762 = vmax.f32 %v2751, 0.0
  %v2763 = vmax.f32 %v2756, 0.0
  %v2764 = vld [vmem:[%s3] sm:$0xf]
  %v2765 = vld [vmem:[%s3 + $0x4] sm:$0xf]
  %v2766 = vld [vmem:[%s3 + $0x8] sm:$0xf]
  %v2767 = vld [vmem:[%s3 + $0xc] sm:$0xf]
  %v2768 = vld [vmem:[%s3 + $0x10] sm:$0xf]
  %v2769 = vld [vmem:[%s3 + $0x14] sm:$0xf]
  %v2770 = vld [vmem:[%s3 + $0x18] sm:$0xf]
  %v2771 = vld [vmem:[%s3 + $0x1c] sm:$0xf]
  %v2772 = vld [vmem:[%s3 + $0x20] sm:$0xf]
  %v2773 = vpack.c.bf16 %v2762, %v2761
  %v2774 = vpack.c.bf16 %v2763, %v2763
  %v2784 = vunpack.c.l.b16 %v2764
  %v2785 = vunpack.c.l.b16 %v2765
  %v2786 = vunpack.c.l.b16 %v2766
  %v2787 = vunpack.c.l.b16 %v2767
  %v2788 = vunpack.c.l.b16 %v2768
  %v2789 = vunpack.c.l.b16 %v2769
  %v2790 = vunpack.c.l.b16 %v2770
  %v2791 = vunpack.c.l.b16 %v2771
  %v2792 = vunpack.c.l.b16 %v2772
  %v2793 = vpack.c.b16 %v2785, %v2784
  %v2794 = vpack.c.b16 %v2787, %v2786
  %v2795 = vpack.c.b16 %v2789, %v2788
  %v2796 = vpack.c.b16 %v2791, %v2790
  %v2797 = vpack.c.b16 %v2792, %v2792
  %vm2798 = vcmask 195584
  %v2800 = vsel %vm2798, %v2793, 0
  %v2803 = vsel %vm2798, %v2794, 0
  %v2806 = vsel %vm2798, %v2795, 0
  %v2809 = vsel %vm2798, %v2796, 0
  %v2812 = vsel %vm2798, %v2797, 0
  %v2815 = vsel %vm1713, %v2774, 0
  %2817 = vmatprep.subr.bf16.mxu0 0
  %2818 = vmatpush1.bf16.msra.mxu0 0
  %2819 = vmatprep.subr.bf16.mxu0 0
  %2820 = vmatpush1.bf16.msra.mxu0 0
  %2821 = vmatprep.subr.bf16.mxu0 0
  %2822 = vmatpush1.bf16.msra.mxu0 0
  %2823 = vmatprep.subr.bf16.mxu0 0
  %2824 = vmatpush1.bf16.msra.mxu0 0
  %2825 = vmatprep.subr.bf16.mxu0 0
  %2826 = vmatpush1.bf16.msra.mxu0 0
  %2827 = vmatprep.subr.bf16.mxu0 0
  %2828 = vmatpush1.bf16.msra.mxu0 0
  %2829 = vmatprep.subr.bf16.mxu0 0
  %2830 = vmatpush1.bf16.msra.mxu0 %v2815
  %2831 = vmatprep.subr.bf16.mxu0 0
  %2832 = vmatpush1.bf16.msra.mxu0 %v2773
  %2833 = vmatprep.subr.bf16.mxu0 0
  %2834 = vmatpush2.bf16.msra.mxu0 0
  %2835 = vmatprep.subr.bf16.mxu0 0
  %2836 = vmatpush2.bf16.msra.mxu0 0
  %2837 = vmatprep.subr.bf16.mxu0 0
  %2838 = vmatpush2.bf16.msra.mxu0 0
  %2839 = vmatprep.subr.bf16.mxu0 0
  %2840 = vmatpush2.bf16.msra.mxu0 0
  %2841 = vmatprep.subr.bf16.mxu0 0
  %2842 = vmatpush2.bf16.msra.mxu0 0
  %2843 = vmatprep.subr.bf16.mxu0 0
  %2844 = vmatpush2.bf16.msra.mxu0 0
  %2845 = vmatprep.subr.bf16.mxu0 0
  %2846 = vmatpush2.bf16.msra.mxu0 0
  %2847 = vmatprep.subr.bf16.mxu0 0
  %2848 = vmatpush2.bf16.msra.mxu0 0
  %2849 = vmatprep.mubr.bf16.mxu0 0
  %2850 = vmatmul.mubr.bf16.gmra.mxu0 %v2800
  %v2851 = vpop.f32.mrf.mxu0
  %v2852 = vadd.f32 0.0, %v2851
  %v2853 = vpop.f32.mrf.mxu0
  %v2854 = vpop.f32.mrf.mxu0
  %v2855 = vadd.f32 0.0, %v2854
  %v2856 = vpop.f32.mrf.mxu0
  %2857 = vmatprep.mubr.bf16.mxu0 0
  %2858 = vmatmul.mubr.bf16.gmra.mxu0 %v2803
  %v2859 = vpop.f32.mrf.mxu0
  %v2860 = vadd.f32 0.0, %v2859
  %v2861 = vpop.f32.mrf.mxu0
  %v2862 = vpop.f32.mrf.mxu0
  %v2863 = vadd.f32 0.0, %v2862
  %v2864 = vpop.f32.mrf.mxu0
  %2865 = vmatprep.mubr.bf16.mxu0 0
  %2866 = vmatmul.mubr.bf16.gmra.mxu0 %v2806
  %v2867 = vpop.f32.mrf.mxu0
  %v2868 = vadd.f32 0.0, %v2867
  %v2869 = vpop.f32.mrf.mxu0
  %v2870 = vpop.f32.mrf.mxu0
  %v2871 = vadd.f32 0.0, %v2870
  %v2872 = vpop.f32.mrf.mxu0
  %2873 = vmatprep.mubr.bf16.mxu0 0
  %2874 = vmatmul.mubr.bf16.gmra.mxu0 %v2809
  %v2875 = vpop.f32.mrf.mxu0
  %v2876 = vadd.f32 0.0, %v2875
  %v2877 = vpop.f32.mrf.mxu0
  %v2878 = vpop.f32.mrf.mxu0
  %v2879 = vadd.f32 0.0, %v2878
  %v2880 = vpop.f32.mrf.mxu0
  %2881 = vmatprep.mubr.bf16.mxu0 0
  %2882 = vmatmul.mubr.bf16.gmra.mxu0 %v2812
  %v2883 = vpop.f32.mrf.mxu0
  %v2884 = vadd.f32 0.0, %v2883
  %v2885 = vpop.f32.mrf.mxu0
  %v2886 = vpop.f32.mrf.mxu0
  %v2887 = vpop.f32.mrf.mxu0
  %2888 = vdwg.mxu0
  %2889 = vst [vmem:[#allocation3] sm:$0xff] %v2852
  %2890 = vst [vmem:[#allocation3 + $0x8] sm:$0xff] %v2855
  %2891 = vst [vmem:[#allocation3 + $0x10] sm:$0xff] %v2860
  %2892 = vst [vmem:[#allocation3 + $0x18] sm:$0xff] %v2863
  %2893 = vst [vmem:[#allocation3 + $0x20] sm:$0xff] %v2868
  %2894 = vst [vmem:[#allocation3 + $0x28] sm:$0xff] %v2871
  %2895 = vst [vmem:[#allocation3 + $0x30] sm:$0xff] %v2876
  %2896 = vst [vmem:[#allocation3 + $0x38] sm:$0xff] %v2879
  %2897 = vst [vmem:[#allocation3 + $0x40] sm:$0xff] %v2884
  %s2898 = sshll.u32 %s1889, 4
  %2899 = dma.done %s212, %s2898
  %v2900 = vld [vmem:[#allocation3] sm:$0xff]
  %v2901 = vld [vmem:[#allocation3 + $0x8] sm:$0xff]
  %v2902 = vld [vmem:[#allocation3 + $0x10] sm:$0xff]
  %v2903 = vld [vmem:[#allocation3 + $0x18] sm:$0xff]
  %v2904 = vld [vmem:[#allocation3 + $0x20] sm:$0xff]
  %v2905 = vld [vmem:[#allocation3 + $0x28] sm:$0xff]
  %v2906 = vld [vmem:[#allocation3 + $0x30] sm:$0xff]
  %v2907 = vld [vmem:[#allocation3 + $0x38] sm:$0xff]
  %v2908 = vld [vmem:[#allocation3 + $0x40] sm:$0xff]
  %v2909 = vpack.c.bf16 %v2900, %v2900
  %v2910 = vpack.c.bf16 %v2901, %v2901
  %v2911 = vpack.c.bf16 %v2902, %v2902
  %v2912 = vpack.c.bf16 %v2903, %v2903
  %v2913 = vpack.c.bf16 %v2904, %v2904
  %v2914 = vpack.c.bf16 %v2905, %v2905
  %v2915 = vpack.c.bf16 %v2906, %v2906
  %v2916 = vpack.c.bf16 %v2907, %v2907
  %v2917 = vpack.c.bf16 %v2908, %v2908
  %v2918 = vld [vmem:[#allocation5] sm:$0xf]
  %v2919 = vld [vmem:[#allocation5 + $0x4] sm:$0xf]
  %v2920 = vld [vmem:[#allocation5 + $0x8] sm:$0xf]
  %v2921 = vld [vmem:[#allocation5 + $0xc] sm:$0xf]
  %v2922 = vld [vmem:[#allocation5 + $0x10] sm:$0xf]
  %v2923 = vld [vmem:[#allocation5 + $0x14] sm:$0xf]
  %v2924 = vld [vmem:[#allocation5 + $0x18] sm:$0xf]
  %v2925 = vld [vmem:[#allocation5 + $0x1c] sm:$0xf]
  %v2926 = vld [vmem:[#allocation5 + $0x20] sm:$0xf]
  %v2927 = vld [vmem:[#allocation5 + $0x24] sm:$0xf]
  %v2928 = vld [vmem:[#allocation5 + $0x28] sm:$0xf]
  %v2929 = vld [vmem:[#allocation5 + $0x2c] sm:$0xf]
  %v2930 = vld [vmem:[#allocation5 + $0x30] sm:$0xf]
  %v2931 = vld [vmem:[#allocation5 + $0x34] sm:$0xf]
  %v2932 = vld [vmem:[#allocation5 + $0x38] sm:$0xf]
  %v2933 = vld [vmem:[#allocation5 + $0x3c] sm:$0xf]
  %v2934 = vld [vmem:[#allocation5 + $0x40] sm:$0xf]
  %v2935 = vld [vmem:[#allocation5 + $0x44] sm:$0xf]
  %v2936 = vld [vmem:[#allocation5 + $0x48] sm:$0xf]
  %v2937 = vld [vmem:[#allocation5 + $0x4c] sm:$0xf]
  %v2938 = vld [vmem:[#allocation5 + $0x50] sm:$0xf]
  %v2939 = vld [vmem:[#allocation5 + $0x54] sm:$0xf]
  %v2940 = vld [vmem:[#allocation5 + $0x58] sm:$0xf]
  %v2941 = vld [vmem:[#allocation5 + $0x5c] sm:$0xf]
  %v2942 = vld [vmem:[#allocation5 + $0x60] sm:$0xf]
  %v2943 = vld [vmem:[#allocation5 + $0x64] sm:$0xf]
  %v2944 = vld [vmem:[#allocation5 + $0x68] sm:$0xf]
  %v2945 = vld [vmem:[#allocation5 + $0x6c] sm:$0xf]
  %v2946 = vld [vmem:[#allocation5 + $0x70] sm:$0xf]
  %v2947 = vld [vmem:[#allocation5 + $0x74] sm:$0xf]
  %v2948 = vld [vmem:[#allocation5 + $0x78] sm:$0xf]
  %v2949 = vld [vmem:[#allocation5 + $0x7c] sm:$0xf]
  %v2950 = vld [vmem:[#allocation5 + $0x80] sm:$0xf]
  %v2951 = vld [vmem:[#allocation5 + $0x84] sm:$0xf]
  %v2952 = vld [vmem:[#allocation5 + $0x88] sm:$0xf]
  %v2953 = vld [vmem:[#allocation5 + $0x8c] sm:$0xf]
  %v2954 = vld [vmem:[#allocation5 + $0x90] sm:$0xf]
  %v2955 = vld [vmem:[#allocation5 + $0x94] sm:$0xf]
  %v2956 = vld [vmem:[#allocation5 + $0x98] sm:$0xf]
  %v2957 = vld [vmem:[#allocation5 + $0x9c] sm:$0xf]
  %v2958 = vld [vmem:[#allocation5 + $0xa0] sm:$0xf]
  %v2959 = vld [vmem:[#allocation5 + $0xa4] sm:$0xf]
  %v2960 = vld [vmem:[#allocation5 + $0xa8] sm:$0xf]
  %v2961 = vld [vmem:[#allocation5 + $0xac] sm:$0xf]
  %v2962 = vld [vmem:[#allocation5 + $0xb0] sm:$0xf]
  %v2963 = vld [vmem:[#allocation5 + $0xb4] sm:$0xf]
  %v2964 = vld [vmem:[#allocation5 + $0xb8] sm:$0xf]
  %v2965 = vld [vmem:[#allocation5 + $0xbc] sm:$0xf]
  %v2966 = vld [vmem:[#allocation5 + $0xc0] sm:$0xf]
  %v2967 = vld [vmem:[#allocation5 + $0xc4] sm:$0xf]
  %v2968 = vld [vmem:[#allocation5 + $0xc8] sm:$0xf]
  %v2969 = vld [vmem:[#allocation5 + $0xcc] sm:$0xf]
  %v2970 = vld [vmem:[#allocation5 + $0xd0] sm:$0xf]
  %v2971 = vld [vmem:[#allocation5 + $0xd4] sm:$0xf]
  %v2972 = vld [vmem:[#allocation5 + $0xd8] sm:$0xf]
  %v2973 = vld [vmem:[#allocation5 + $0xdc] sm:$0xf]
  %v2974 = vld [vmem:[#allocation5 + $0xe0] sm:$0xf]
  %v2975 = vld [vmem:[#allocation5 + $0xe4] sm:$0xf]
  %v2976 = vld [vmem:[#allocation5 + $0xe8] sm:$0xf]
  %v2977 = vld [vmem:[#allocation5 + $0xec] sm:$0xf]
  %v2978 = vld [vmem:[#allocation5 + $0xf0] sm:$0xf]
  %v2979 = vld [vmem:[#allocation5 + $0xf4] sm:$0xf]
  %v2980 = vld [vmem:[#allocation5 + $0xf8] sm:$0xf]
  %v2981 = vld [vmem:[#allocation5 + $0xfc] sm:$0xf]
  %v2982 = vld [vmem:[#allocation5 + $0x100] sm:$0xf]
  %v2983 = vld [vmem:[#allocation5 + $0x104] sm:$0xf]
  %v2984 = vld [vmem:[#allocation5 + $0x108] sm:$0xf]
  %v2985 = vld [vmem:[#allocation5 + $0x10c] sm:$0xf]
  %v2986 = vld [vmem:[#allocation5 + $0x110] sm:$0xf]
  %v2987 = vld [vmem:[#allocation5 + $0x114] sm:$0xf]
  %v2988 = vld [vmem:[#allocation5 + $0x118] sm:$0xf]
  %v2989 = vld [vmem:[#allocation5 + $0x11c] sm:$0xf]
  %v2990 = vld [vmem:[#allocation5 + $0x120] sm:$0xf]
  %v2991 = vld [vmem:[#allocation5 + $0x124] sm:$0xf]
  %v2992 = vld [vmem:[#allocation5 + $0x128] sm:$0xf]
  %v2993 = vld [vmem:[#allocation5 + $0x12c] sm:$0xf]
  %v2994 = vld [vmem:[#allocation5 + $0x130] sm:$0xf]
  %v2995 = vld [vmem:[#allocation5 + $0x134] sm:$0xf]
  %v2996 = vld [vmem:[#allocation5 + $0x138] sm:$0xf]
  %v2997 = vld [vmem:[#allocation5 + $0x13c] sm:$0xf]
  %v2998 = vld [vmem:[#allocation5 + $0x140] sm:$0xf]
  %v2999 = vld [vmem:[#allocation5 + $0x144] sm:$0xf]
  %v3000 = vld [vmem:[#allocation5 + $0x148] sm:$0xf]
  %v3001 = vld [vmem:[#allocation5 + $0x14c] sm:$0xf]
  %v3002 = vld [vmem:[#allocation5 + $0x150] sm:$0xf]
  %v3003 = vld [vmem:[#allocation5 + $0x154] sm:$0xf]
  %v3004 = vld [vmem:[#allocation5 + $0x158] sm:$0xf]
  %v3005 = vld [vmem:[#allocation5 + $0x15c] sm:$0xf]
  %v3006 = vld [vmem:[#allocation5 + $0x160] sm:$0xf]
  %v3007 = vld [vmem:[#allocation5 + $0x164] sm:$0xf]
  %v3008 = vld [vmem:[#allocation5 + $0x168] sm:$0xf]
  %v3009 = vld [vmem:[#allocation5 + $0x16c] sm:$0xf]
  %v3010 = vld [vmem:[#allocation5 + $0x170] sm:$0xf]
  %v3011 = vld [vmem:[#allocation5 + $0x174] sm:$0xf]
  %v3012 = vld [vmem:[#allocation5 + $0x178] sm:$0xf]
  %v3013 = vld [vmem:[#allocation5 + $0x17c] sm:$0xf]
  %v3014 = vld [vmem:[#allocation5 + $0x180] sm:$0xf]
  %v3015 = vld [vmem:[#allocation5 + $0x184] sm:$0xf]
  %v3016 = vld [vmem:[#allocation5 + $0x188] sm:$0xf]
  %v3017 = vld [vmem:[#allocation5 + $0x18c] sm:$0xf]
  %v3018 = vld [vmem:[#allocation5 + $0x190] sm:$0xf]
  %v3019 = vld [vmem:[#allocation5 + $0x194] sm:$0xf]
  %v3020 = vld [vmem:[#allocation5 + $0x198] sm:$0xf]
  %v3021 = vld [vmem:[#allocation5 + $0x19c] sm:$0xf]
  %v3022 = vld [vmem:[#allocation5 + $0x1a0] sm:$0xf]
  %v3023 = vld [vmem:[#allocation5 + $0x1a4] sm:$0xf]
  %v3024 = vld [vmem:[#allocation5 + $0x1a8] sm:$0xf]
  %v3025 = vld [vmem:[#allocation5 + $0x1ac] sm:$0xf]
  %v3026 = vld [vmem:[#allocation5 + $0x1b0] sm:$0xf]
  %v3027 = vld [vmem:[#allocation5 + $0x1b4] sm:$0xf]
  %v3028 = vld [vmem:[#allocation5 + $0x1b8] sm:$0xf]
  %v3029 = vld [vmem:[#allocation5 + $0x1bc] sm:$0xf]
  %v3030 = vld [vmem:[#allocation5 + $0x1c0] sm:$0xf]
  %v3031 = vld [vmem:[#allocation5 + $0x1c4] sm:$0xf]
  %v3032 = vld [vmem:[#allocation5 + $0x1c8] sm:$0xf]
  %v3033 = vld [vmem:[#allocation5 + $0x1cc] sm:$0xf]
  %v3034 = vld [vmem:[#allocation5 + $0x1d0] sm:$0xf]
  %v3035 = vld [vmem:[#allocation5 + $0x1d4] sm:$0xf]
  %v3036 = vld [vmem:[#allocation5 + $0x1d8] sm:$0xf]
  %v3037 = vld [vmem:[#allocation5 + $0x1dc] sm:$0xf]
  %v3038 = vld [vmem:[#allocation5 + $0x1e0] sm:$0xf]
  %v3039 = vld [vmem:[#allocation5 + $0x1e4] sm:$0xf]
  %v3040 = vld [vmem:[#allocation5 + $0x1e8] sm:$0xf]
  %v3041 = vld [vmem:[#allocation5 + $0x1ec] sm:$0xf]
  %v3042 = vld [vmem:[#allocation5 + $0x1f0] sm:$0xf]
  %v3043 = vld [vmem:[#allocation5 + $0x1f4] sm:$0xf]
  %v3044 = vld [vmem:[#allocation5 + $0x1f8] sm:$0xf]
  %v3045 = vld [vmem:[#allocation5 + $0x1fc] sm:$0xf]
  %v3046 = vld [vmem:[#allocation5 + $0x200] sm:$0xf]
  %v3047 = vld [vmem:[#allocation5 + $0x204] sm:$0xf]
  %v3048 = vld [vmem:[#allocation5 + $0x208] sm:$0xf]
  %v3049 = vld [vmem:[#allocation5 + $0x20c] sm:$0xf]
  %v3050 = vld [vmem:[#allocation5 + $0x210] sm:$0xf]
  %v3051 = vld [vmem:[#allocation5 + $0x214] sm:$0xf]
  %v3052 = vld [vmem:[#allocation5 + $0x218] sm:$0xf]
  %v3053 = vld [vmem:[#allocation5 + $0x21c] sm:$0xf]
  %v3054 = vld [vmem:[#allocation5 + $0x220] sm:$0xf]
  %v3055 = vld [vmem:[#allocation5 + $0x224] sm:$0xf]
  %v3056 = vld [vmem:[#allocation5 + $0x228] sm:$0xf]
  %v3057 = vld [vmem:[#allocation5 + $0x22c] sm:$0xf]
  %v3058 = vld [vmem:[#allocation5 + $0x230] sm:$0xf]
  %v3059 = vld [vmem:[#allocation5 + $0x234] sm:$0xf]
  %v3060 = vld [vmem:[#allocation5 + $0x238] sm:$0xf]
  %v3061 = vld [vmem:[#allocation5 + $0x23c] sm:$0xf]
  %s3062 = scalar_lea.vmem %s4, 2
  %v3063 = vld [vmem:[%s3062] sm:$0x1]
  %v3065 = vlaneseq
  %v3066 = vshrl.u32 %v3065, 7
  %v3067 = vsub.s32 0, %v3066
  %v3068 = vrot.slane %v3063, %v3067
  %v3214 = vunpack.c.l.b16 %v2918
  %v3215 = vunpack.c.l.b16 %v2919
  %v3216 = vunpack.c.l.b16 %v2920
  %v3217 = vunpack.c.l.b16 %v2921
  %v3218 = vunpack.c.l.b16 %v2922
  %v3219 = vunpack.c.l.b16 %v2923
  %v3220 = vunpack.c.l.b16 %v2924
  %v3221 = vunpack.c.l.b16 %v2925
  %v3222 = vunpack.c.l.b16 %v2926
  %v3223 = vunpack.c.l.b16 %v2927
  %v3224 = vunpack.c.l.b16 %v2928
  %v3225 = vunpack.c.l.b16 %v2929
  %v3226 = vunpack.c.l.b16 %v2930
  %v3227 = vunpack.c.l.b16 %v2931
  %v3228 = vunpack.c.l.b16 %v2932
  %v3229 = vunpack.c.l.b16 %v2933
  %v3230 = vunpack.c.l.b16 %v2934
  %v3231 = vunpack.c.l.b16 %v2935
  %v3232 = vunpack.c.l.b16 %v2936
  %v3233 = vunpack.c.l.b16 %v2937
  %v3234 = vunpack.c.l.b16 %v2938
  %v3235 = vunpack.c.l.b16 %v2939
  %v3236 = vunpack.c.l.b16 %v2940
  %v3237 = vunpack.c.l.b16 %v2941
  %v3238 = vunpack.c.l.b16 %v2942
  %v3239 = vunpack.c.l.b16 %v2943
  %v3240 = vunpack.c.l.b16 %v2944
  %v3241 = vunpack.c.l.b16 %v2945
  %v3242 = vunpack.c.l.b16 %v2946
  %v3243 = vunpack.c.l.b16 %v2947
  %v3244 = vunpack.c.l.b16 %v2948
  %v3245 = vunpack.c.l.b16 %v2949
  %v3246 = vunpack.c.l.b16 %v2950
  %v3247 = vunpack.c.l.b16 %v2951
  %v3248 = vunpack.c.l.b16 %v2952
  %v3249 = vunpack.c.l.b16 %v2953
  %v3250 = vunpack.c.l.b16 %v2954
  %v3251 = vunpack.c.l.b16 %v2955
  %v3252 = vunpack.c.l.b16 %v2956
  %v3253 = vunpack.c.l.b16 %v2957
  %v3254 = vunpack.c.l.b16 %v2958
  %v3255 = vunpack.c.l.b16 %v2959
  %v3256 = vunpack.c.l.b16 %v2960
  %v3257 = vunpack.c.l.b16 %v2961
  %v3258 = vunpack.c.l.b16 %v2962
  %v3259 = vunpack.c.l.b16 %v2963
  %v3260 = vunpack.c.l.b16 %v2964
  %v3261 = vunpack.c.l.b16 %v2965
  %v3262 = vunpack.c.l.b16 %v2966
  %v3263 = vunpack.c.l.b16 %v2967
  %v3264 = vunpack.c.l.b16 %v2968
  %v3265 = vunpack.c.l.b16 %v2969
  %v3266 = vunpack.c.l.b16 %v2970
  %v3267 = vunpack.c.l.b16 %v2971
  %v3268 = vunpack.c.l.b16 %v2972
  %v3269 = vunpack.c.l.b16 %v2973
  %v3270 = vunpack.c.l.b16 %v2974
  %v3271 = vunpack.c.l.b16 %v2975
  %v3272 = vunpack.c.l.b16 %v2976
  %v3273 = vunpack.c.l.b16 %v2977
  %v3274 = vunpack.c.l.b16 %v2978
  %v3275 = vunpack.c.l.b16 %v2979
  %v3276 = vunpack.c.l.b16 %v2980
  %v3277 = vunpack.c.l.b16 %v2981
  %v3278 = vunpack.c.l.b16 %v2982
  %v3279 = vunpack.c.l.b16 %v2983
  %v3280 = vunpack.c.l.b16 %v2984
  %v3281 = vunpack.c.l.b16 %v2985
  %v3282 = vunpack.c.l.b16 %v2986
  %v3283 = vunpack.c.l.b16 %v2987
  %v3284 = vunpack.c.l.b16 %v2988
  %v3285 = vunpack.c.l.b16 %v2989
  %v3286 = vunpack.c.l.b16 %v2990
  %v3287 = vunpack.c.l.b16 %v2991
  %v3288 = vunpack.c.l.b16 %v2992
  %v3289 = vunpack.c.l.b16 %v2993
  %v3290 = vunpack.c.l.b16 %v2994
  %v3291 = vunpack.c.l.b16 %v2995
  %v3292 = vunpack.c.l.b16 %v2996
  %v3293 = vunpack.c.l.b16 %v2997
  %v3294 = vunpack.c.l.b16 %v2998
  %v3295 = vunpack.c.l.b16 %v2999
  %v3296 = vunpack.c.l.b16 %v3000
  %v3297 = vunpack.c.l.b16 %v3001
  %v3298 = vunpack.c.l.b16 %v3002
  %v3299 = vunpack.c.l.b16 %v3003
  %v3300 = vunpack.c.l.b16 %v3004
  %v3301 = vunpack.c.l.b16 %v3005
  %v3302 = vunpack.c.l.b16 %v3006
  %v3303 = vunpack.c.l.b16 %v3007
  %v3304 = vunpack.c.l.b16 %v3008
  %v3305 = vunpack.c.l.b16 %v3009
  %v3306 = vunpack.c.l.b16 %v3010
  %v3307 = vunpack.c.l.b16 %v3011
  %v3308 = vunpack.c.l.b16 %v3012
  %v3309 = vunpack.c.l.b16 %v3013
  %v3310 = vunpack.c.l.b16 %v3014
  %v3311 = vunpack.c.l.b16 %v3015
  %v3312 = vunpack.c.l.b16 %v3016
  %v3313 = vunpack.c.l.b16 %v3017
  %v3314 = vunpack.c.l.b16 %v3018
  %v3315 = vunpack.c.l.b16 %v3019
  %v3316 = vunpack.c.l.b16 %v3020
  %v3317 = vunpack.c.l.b16 %v3021
  %v3318 = vunpack.c.l.b16 %v3022
  %v3319 = vunpack.c.l.b16 %v3023
  %v3320 = vunpack.c.l.b16 %v3024
  %v3321 = vunpack.c.l.b16 %v3025
  %v3322 = vunpack.c.l.b16 %v3026
  %v3323 = vunpack.c.l.b16 %v3027
  %v3324 = vunpack.c.l.b16 %v3028
  %v3325 = vunpack.c.l.b16 %v3029
  %v3326 = vunpack.c.l.b16 %v3030
  %v3327 = vunpack.c.l.b16 %v3031
  %v3328 = vunpack.c.l.b16 %v3032
  %v3329 = vunpack.c.l.b16 %v3033
  %v3330 = vunpack.c.l.b16 %v3034
  %v3331 = vunpack.c.l.b16 %v3035
  %v3332 = vunpack.c.l.b16 %v3036
  %v3333 = vunpack.c.l.b16 %v3037
  %v3334 = vunpack.c.l.b16 %v3038
  %v3335 = vunpack.c.l.b16 %v3039
  %v3336 = vunpack.c.l.b16 %v3040
  %v3337 = vunpack.c.l.b16 %v3041
  %v3338 = vunpack.c.l.b16 %v3042
  %v3339 = vunpack.c.l.b16 %v3043
  %v3340 = vunpack.c.l.b16 %v3044
  %v3341 = vunpack.c.l.b16 %v3045
  %v3342 = vunpack.c.l.b16 %v3046
  %v3343 = vunpack.c.l.b16 %v3047
  %v3344 = vunpack.c.l.b16 %v3048
  %v3345 = vunpack.c.l.b16 %v3049
  %v3346 = vunpack.c.l.b16 %v3050
  %v3347 = vunpack.c.l.b16 %v3051
  %v3348 = vunpack.c.l.b16 %v3052
  %v3349 = vunpack.c.l.b16 %v3053
  %v3350 = vunpack.c.l.b16 %v3054
  %v3351 = vunpack.c.l.b16 %v3055
  %v3352 = vunpack.c.l.b16 %v3056
  %v3353 = vunpack.c.l.b16 %v3057
  %v3354 = vunpack.c.l.b16 %v3058
  %v3355 = vunpack.c.l.b16 %v3059
  %v3356 = vunpack.c.l.b16 %v3060
  %v3357 = vunpack.c.l.b16 %v3061
  %v3358 = vpack.c.b16 %v3215, %v3214
  %v3359 = vpack.c.b16 %v3217, %v3216
  %v3360 = vpack.c.b16 %v3219, %v3218
  %v3361 = vpack.c.b16 %v3221, %v3220
  %v3362 = vpack.c.b16 %v3223, %v3222
  %v3363 = vpack.c.b16 %v3225, %v3224
  %v3364 = vpack.c.b16 %v3227, %v3226
  %v3365 = vpack.c.b16 %v3229, %v3228
  %v3366 = vpack.c.b16 %v3231, %v3230
  %v3367 = vpack.c.b16 %v3233, %v3232
  %v3368 = vpack.c.b16 %v3235, %v3234
  %v3369 = vpack.c.b16 %v3237, %v3236
  %v3370 = vpack.c.b16 %v3239, %v3238
  %v3371 = vpack.c.b16 %v3241, %v3240
  %v3372 = vpack.c.b16 %v3243, %v3242
  %v3373 = vpack.c.b16 %v3245, %v3244
  %v3374 = vpack.c.b16 %v3247, %v3246
  %v3375 = vpack.c.b16 %v3249, %v3248
  %v3376 = vpack.c.b16 %v3251, %v3250
  %v3377 = vpack.c.b16 %v3253, %v3252
  %v3378 = vpack.c.b16 %v3255, %v3254
  %v3379 = vpack.c.b16 %v3257, %v3256
  %v3380 = vpack.c.b16 %v3259, %v3258
  %v3381 = vpack.c.b16 %v3261, %v3260
  %v3382 = vpack.c.b16 %v3263, %v3262
  %v3383 = vpack.c.b16 %v3265, %v3264
  %v3384 = vpack.c.b16 %v3267, %v3266
  %v3385 = vpack.c.b16 %v3269, %v3268
  %v3386 = vpack.c.b16 %v3271, %v3270
  %v3387 = vpack.c.b16 %v3273, %v3272
  %v3388 = vpack.c.b16 %v3275, %v3274
  %v3389 = vpack.c.b16 %v3277, %v3276
  %v3390 = vpack.c.b16 %v3279, %v3278
  %v3391 = vpack.c.b16 %v3281, %v3280
  %v3392 = vpack.c.b16 %v3283, %v3282
  %v3393 = vpack.c.b16 %v3285, %v3284
  %v3394 = vpack.c.b16 %v3287, %v3286
  %v3395 = vpack.c.b16 %v3289, %v3288
  %v3396 = vpack.c.b16 %v3291, %v3290
  %v3397 = vpack.c.b16 %v3293, %v3292
  %v3398 = vpack.c.b16 %v3295, %v3294
  %v3399 = vpack.c.b16 %v3297, %v3296
  %v3400 = vpack.c.b16 %v3299, %v3298
  %v3401 = vpack.c.b16 %v3301, %v3300
  %v3402 = vpack.c.b16 %v3303, %v3302
  %v3403 = vpack.c.b16 %v3305, %v3304
  %v3404 = vpack.c.b16 %v3307, %v3306
  %v3405 = vpack.c.b16 %v3309, %v3308
  %v3406 = vpack.c.b16 %v3311, %v3310
  %v3407 = vpack.c.b16 %v3313, %v3312
  %v3408 = vpack.c.b16 %v3315, %v3314
  %v3409 = vpack.c.b16 %v3317, %v3316
  %v3410 = vpack.c.b16 %v3319, %v3318
  %v3411 = vpack.c.b16 %v3321, %v3320
  %v3412 = vpack.c.b16 %v3323, %v3322
  %v3413 = vpack.c.b16 %v3325, %v3324
  %v3414 = vpack.c.b16 %v3327, %v3326
  %v3415 = vpack.c.b16 %v3329, %v3328
  %v3416 = vpack.c.b16 %v3331, %v3330
  %v3417 = vpack.c.b16 %v3333, %v3332
  %v3418 = vpack.c.b16 %v3335, %v3334
  %v3419 = vpack.c.b16 %v3337, %v3336
  %v3420 = vpack.c.b16 %v3339, %v3338
  %v3421 = vpack.c.b16 %v3341, %v3340
  %v3422 = vpack.c.b16 %v3343, %v3342
  %v3423 = vpack.c.b16 %v3345, %v3344
  %v3424 = vpack.c.b16 %v3347, %v3346
  %v3425 = vpack.c.b16 %v3349, %v3348
  %v3426 = vpack.c.b16 %v3351, %v3350
  %v3427 = vpack.c.b16 %v3353, %v3352
  %v3428 = vpack.c.b16 %v3355, %v3354
  %v3429 = vpack.c.b16 %v3357, %v3356
  %3502 = vmatprep.subr.bf16.mxu0 0
  %3503 = vmatpush1.bf16.msra.mxu0 %v3365
  %3504 = vmatprep.subr.bf16.mxu0 0
  %3505 = vmatpush1.bf16.msra.mxu0 %v3364
  %3506 = vmatprep.subr.bf16.mxu0 0
  %3507 = vmatpush1.bf16.msra.mxu0 %v3363
  %3508 = vmatprep.subr.bf16.mxu0 0
  %3509 = vmatpush1.bf16.msra.mxu0 %v3362
  %3510 = vmatprep.subr.bf16.mxu0 0
  %3511 = vmatpush1.bf16.msra.mxu0 %v3361
  %3512 = vmatprep.subr.bf16.mxu0 0
  %3513 = vmatpush1.bf16.msra.mxu0 %v3360
  %3514 = vmatprep.subr.bf16.mxu0 0
  %3515 = vmatpush1.bf16.msra.mxu0 %v3359
  %3516 = vmatprep.subr.bf16.mxu0 0
  %3517 = vmatpush1.bf16.msra.mxu0 %v3358
  %3518 = vmatprep.subr.bf16.mxu0 0
  %3519 = vmatpush2.bf16.msra.mxu0 %v3373
  %3520 = vmatprep.subr.bf16.mxu0 0
  %3521 = vmatpush2.bf16.msra.mxu0 %v3372
  %3522 = vmatprep.subr.bf16.mxu0 0
  %3523 = vmatpush2.bf16.msra.mxu0 %v3371
  %3524 = vmatprep.subr.bf16.mxu0 0
  %3525 = vmatpush2.bf16.msra.mxu0 %v3370
  %3526 = vmatprep.subr.bf16.mxu0 0
  %3527 = vmatpush2.bf16.msra.mxu0 %v3369
  %3528 = vmatprep.subr.bf16.mxu0 0
  %3529 = vmatpush2.bf16.msra.mxu0 %v3368
  %3530 = vmatprep.subr.bf16.mxu0 0
  %3531 = vmatpush2.bf16.msra.mxu0 %v3367
  %3532 = vmatprep.subr.bf16.mxu0 0
  %3533 = vmatpush2.bf16.msra.mxu0 %v3366
  %3534 = vmatprep.mubr.bf16.mxu0 %v2910
  %3535 = vmatmul.mubr.bf16.gmra.mxu0 %v2909
  %v3536 = vpop.f32.mrf.mxu0
  %v3537 = vadd.f32 %v3068, %v3536
  %v3538 = vpop.f32.mrf.mxu0
  %v3539 = vpop.f32.mrf.mxu0
  %v3540 = vpop.f32.mrf.mxu0
  %3541 = vdwg.mxu0
  %3542 = vmatprep.subr.bf16.mxu0 0
  %3543 = vmatpush1.bf16.msra.mxu0 %v3381
  %3544 = vmatprep.subr.bf16.mxu0 0
  %3545 = vmatpush1.bf16.msra.mxu0 %v3380
  %3546 = vmatprep.subr.bf16.mxu0 0
  %3547 = vmatpush1.bf16.msra.mxu0 %v3379
  %3548 = vmatprep.subr.bf16.mxu0 0
  %3549 = vmatpush1.bf16.msra.mxu0 %v3378
  %3550 = vmatprep.subr.bf16.mxu0 0
  %3551 = vmatpush1.bf16.msra.mxu0 %v3377
  %3552 = vmatprep.subr.bf16.mxu0 0
  %3553 = vmatpush1.bf16.msra.mxu0 %v3376
  %3554 = vmatprep.subr.bf16.mxu0 0
  %3555 = vmatpush1.bf16.msra.mxu0 %v3375
  %3556 = vmatprep.subr.bf16.mxu0 0
  %3557 = vmatpush1.bf16.msra.mxu0 %v3374
  %3558 = vmatprep.subr.bf16.mxu0 0
  %3559 = vmatpush2.bf16.msra.mxu0 %v3389
  %3560 = vmatprep.subr.bf16.mxu0 0
  %3561 = vmatpush2.bf16.msra.mxu0 %v3388
  %3562 = vmatprep.subr.bf16.mxu0 0
  %3563 = vmatpush2.bf16.msra.mxu0 %v3387
  %3564 = vmatprep.subr.bf16.mxu0 0
  %3565 = vmatpush2.bf16.msra.mxu0 %v3386
  %3566 = vmatprep.subr.bf16.mxu0 0
  %3567 = vmatpush2.bf16.msra.mxu0 %v3385
  %3568 = vmatprep.subr.bf16.mxu0 0
  %3569 = vmatpush2.bf16.msra.mxu0 %v3384
  %3570 = vmatprep.subr.bf16.mxu0 0
  %3571 = vmatpush2.bf16.msra.mxu0 %v3383
  %3572 = vmatprep.subr.bf16.mxu0 0
  %3573 = vmatpush2.bf16.msra.mxu0 %v3382
  %3574 = vmatprep.mubr.bf16.mxu0 %v2912
  %3575 = vmatmul.mubr.bf16.gmra.mxu0 %v2911
  %v3576 = vpop.f32.mrf.mxu0
  %v3577 = vadd.f32 %v3537, %v3576
  %v3578 = vpop.f32.mrf.mxu0
  %v3579 = vpop.f32.mrf.mxu0
  %v3580 = vpop.f32.mrf.mxu0
  %3581 = vdwg.mxu0
  %3582 = vmatprep.subr.bf16.mxu0 0
  %3583 = vmatpush1.bf16.msra.mxu0 %v3397
  %3584 = vmatprep.subr.bf16.mxu0 0
  %3585 = vmatpush1.bf16.msra.mxu0 %v3396
  %3586 = vmatprep.subr.bf16.mxu0 0
  %3587 = vmatpush1.bf16.msra.mxu0 %v3395
  %3588 = vmatprep.subr.bf16.mxu0 0
  %3589 = vmatpush1.bf16.msra.mxu0 %v3394
  %3590 = vmatprep.subr.bf16.mxu0 0
  %3591 = vmatpush1.bf16.msra.mxu0 %v3393
  %3592 = vmatprep.subr.bf16.mxu0 0
  %3593 = vmatpush1.bf16.msra.mxu0 %v3392
  %3594 = vmatprep.subr.bf16.mxu0 0
  %3595 = vmatpush1.bf16.msra.mxu0 %v3391
  %3596 = vmatprep.subr.bf16.mxu0 0
  %3597 = vmatpush1.bf16.msra.mxu0 %v3390
  %3598 = vmatprep.subr.bf16.mxu0 0
  %3599 = vmatpush2.bf16.msra.mxu0 %v3405
  %3600 = vmatprep.subr.bf16.mxu0 0
  %3601 = vmatpush2.bf16.msra.mxu0 %v3404
  %3602 = vmatprep.subr.bf16.mxu0 0
  %3603 = vmatpush2.bf16.msra.mxu0 %v3403
  %3604 = vmatprep.subr.bf16.mxu0 0
  %3605 = vmatpush2.bf16.msra.mxu0 %v3402
  %3606 = vmatprep.subr.bf16.mxu0 0
  %3607 = vmatpush2.bf16.msra.mxu0 %v3401
  %3608 = vmatprep.subr.bf16.mxu0 0
  %3609 = vmatpush2.bf16.msra.mxu0 %v3400
  %3610 = vmatprep.subr.bf16.mxu0 0
  %3611 = vmatpush2.bf16.msra.mxu0 %v3399
  %3612 = vmatprep.subr.bf16.mxu0 0
  %3613 = vmatpush2.bf16.msra.mxu0 %v3398
  %3614 = vmatprep.mubr.bf16.mxu0 %v2914
  %3615 = vmatmul.mubr.bf16.gmra.mxu0 %v2913
  %v3616 = vpop.f32.mrf.mxu0
  %v3617 = vadd.f32 %v3577, %v3616
  %v3618 = vpop.f32.mrf.mxu0
  %v3619 = vpop.f32.mrf.mxu0
  %v3620 = vpop.f32.mrf.mxu0
  %3621 = vdwg.mxu0
  %3622 = vmatprep.subr.bf16.mxu0 0
  %3623 = vmatpush1.bf16.msra.mxu0 %v3413
  %3624 = vmatprep.subr.bf16.mxu0 0
  %3625 = vmatpush1.bf16.msra.mxu0 %v3412
  %3626 = vmatprep.subr.bf16.mxu0 0
  %3627 = vmatpush1.bf16.msra.mxu0 %v3411
  %3628 = vmatprep.subr.bf16.mxu0 0
  %3629 = vmatpush1.bf16.msra.mxu0 %v3410
  %3630 = vmatprep.subr.bf16.mxu0 0
  %3631 = vmatpush1.bf16.msra.mxu0 %v3409
  %3632 = vmatprep.subr.bf16.mxu0 0
  %3633 = vmatpush1.bf16.msra.mxu0 %v3408
  %3634 = vmatprep.subr.bf16.mxu0 0
  %3635 = vmatpush1.bf16.msra.mxu0 %v3407
  %3636 = vmatprep.subr.bf16.mxu0 0
  %3637 = vmatpush1.bf16.msra.mxu0 %v3406
  %3638 = vmatprep.subr.bf16.mxu0 0
  %3639 = vmatpush2.bf16.msra.mxu0 %v3421
  %3640 = vmatprep.subr.bf16.mxu0 0
  %3641 = vmatpush2.bf16.msra.mxu0 %v3420
  %3642 = vmatprep.subr.bf16.mxu0 0
  %3643 = vmatpush2.bf16.msra.mxu0 %v3419
  %3644 = vmatprep.subr.bf16.mxu0 0
  %3645 = vmatpush2.bf16.msra.mxu0 %v3418
  %3646 = vmatprep.subr.bf16.mxu0 0
  %3647 = vmatpush2.bf16.msra.mxu0 %v3417
  %3648 = vmatprep.subr.bf16.mxu0 0
  %3649 = vmatpush2.bf16.msra.mxu0 %v3416
  %3650 = vmatprep.subr.bf16.mxu0 0
  %3651 = vmatpush2.bf16.msra.mxu0 %v3415
  %3652 = vmatprep.subr.bf16.mxu0 0
  %3653 = vmatpush2.bf16.msra.mxu0 %v3414
  %3654 = vmatprep.mubr.bf16.mxu0 %v2916
  %3655 = vmatmul.mubr.bf16.gmra.mxu0 %v2915
  %v3656 = vpop.f32.mrf.mxu0
  %v3657 = vadd.f32 %v3617, %v3656
  %v3658 = vpop.f32.mrf.mxu0
  %v3659 = vpop.f32.mrf.mxu0
  %v3660 = vpop.f32.mrf.mxu0
  %3661 = vdwg.mxu0
  %3662 = vmatprep.subr.bf16.mxu0 0
  %3663 = vmatpush1.bf16.msra.mxu0 %v3429
  %3664 = vmatprep.subr.bf16.mxu0 0
  %3665 = vmatpush1.bf16.msra.mxu0 %v3428
  %3666 = vmatprep.subr.bf16.mxu0 0
  %3667 = vmatpush1.bf16.msra.mxu0 %v3427
  %3668 = vmatprep.subr.bf16.mxu0 0
  %3669 = vmatpush1.bf16.msra.mxu0 %v3426
  %3670 = vmatprep.subr.bf16.mxu0 0
  %3671 = vmatpush1.bf16.msra.mxu0 %v3425
  %3672 = vmatprep.subr.bf16.mxu0 0
  %3673 = vmatpush1.bf16.msra.mxu0 %v3424
  %3674 = vmatprep.subr.bf16.mxu0 0
  %3675 = vmatpush1.bf16.msra.mxu0 %v3423
  %3676 = vmatprep.subr.bf16.mxu0 0
  %3677 = vmatpush1.bf16.msra.mxu0 %v3422
  %3678 = vmatprep.subr.bf16.mxu0 0
  %3679 = vmatpush2.bf16.msra.mxu0 0
  %3680 = vmatprep.subr.bf16.mxu0 0
  %3681 = vmatpush2.bf16.msra.mxu0 0
  %3682 = vmatprep.subr.bf16.mxu0 0
  %3683 = vmatpush2.bf16.msra.mxu0 0
  %3684 = vmatprep.subr.bf16.mxu0 0
  %3685 = vmatpush2.bf16.msra.mxu0 0
  %3686 = vmatprep.subr.bf16.mxu0 0
  %3687 = vmatpush2.bf16.msra.mxu0 0
  %3688 = vmatprep.subr.bf16.mxu0 0
  %3689 = vmatpush2.bf16.msra.mxu0 0
  %3690 = vmatprep.subr.bf16.mxu0 0
  %3691 = vmatpush2.bf16.msra.mxu0 0
  %3692 = vmatprep.subr.bf16.mxu0 0
  %3693 = vmatpush2.bf16.msra.mxu0 0
  %3694 = vmatprep.mubr.bf16.mxu0 0
  %3695 = vmatmul.mubr.bf16.gmra.mxu0 %v2917
  %v3696 = vpop.f32.mrf.mxu0
  %v3697 = vadd.f32 %v3657, %v3696
  %v3698 = vpop.f32.mrf.mxu0
  %v3699 = vpop.f32.mrf.mxu0
  %v3700 = vpop.f32.mrf.mxu0
  %3701 = vdwg.mxu0
  %v3702 = vmax.f32 %v3697, 0.0
  %s3703 = smul.u32 4, 16
  %s3704 = smul.u32 %s3703, 1
  %s3705 = sshll.u32 %s3704, 4
  %3706 = dma.done %s398, %s3705
  %v3707 = vpack.c.bf16 %v3702, %v3702
  %v3708 = vld [vmem:[#allocation6] sm:$0xf]
  %v3709 = vld [vmem:[#allocation6 + $0x4] sm:$0xf]
  %v3710 = vld [vmem:[#allocation6 + $0x8] sm:$0xf]
  %v3711 = vld [vmem:[#allocation6 + $0xc] sm:$0xf]
  %v3712 = vld [vmem:[#allocation6 + $0x10] sm:$0xf]
  %v3713 = vld [vmem:[#allocation6 + $0x14] sm:$0xf]
  %v3714 = vld [vmem:[#allocation6 + $0x18] sm:$0xf]
  %v3715 = vld [vmem:[#allocation6 + $0x1c] sm:$0xf]
  %v3716 = vld [vmem:[#allocation6 + $0x20] sm:$0xf]
  %v3717 = vld [vmem:[#allocation6 + $0x24] sm:$0xf]
  %v3718 = vld [vmem:[#allocation6 + $0x28] sm:$0xf]
  %v3719 = vld [vmem:[#allocation6 + $0x2c] sm:$0xf]
  %v3720 = vld [vmem:[#allocation6 + $0x30] sm:$0xf]
  %v3721 = vld [vmem:[#allocation6 + $0x34] sm:$0xf]
  %v3722 = vld [vmem:[#allocation6 + $0x38] sm:$0xf]
  %v3723 = vld [vmem:[#allocation6 + $0x3c] sm:$0xf]
  %v3724 = vld [vmem:[%s5] sm:$0x1]
  %v3726 = vlaneseq
  %v3727 = vshrl.u32 %v3726, 7
  %v3728 = vsub.s32 0, %v3727
  %v3729 = vrot.slane %v3724, %v3728
  %v3747 = vunpack.c.l.b16 %v3708
  %v3748 = vunpack.c.l.b16 %v3709
  %v3749 = vunpack.c.l.b16 %v3710
  %v3750 = vunpack.c.l.b16 %v3711
  %v3751 = vunpack.c.l.b16 %v3712
  %v3752 = vunpack.c.l.b16 %v3713
  %v3753 = vunpack.c.l.b16 %v3714
  %v3754 = vunpack.c.l.b16 %v3715
  %v3755 = vunpack.c.l.b16 %v3716
  %v3756 = vunpack.c.l.b16 %v3717
  %v3757 = vunpack.c.l.b16 %v3718
  %v3758 = vunpack.c.l.b16 %v3719
  %v3759 = vunpack.c.l.b16 %v3720
  %v3760 = vunpack.c.l.b16 %v3721
  %v3761 = vunpack.c.l.b16 %v3722
  %v3762 = vunpack.c.l.b16 %v3723
  %v3763 = vpack.c.b16 %v3748, %v3747
  %v3764 = vpack.c.b16 %v3750, %v3749
  %v3765 = vpack.c.b16 %v3752, %v3751
  %v3766 = vpack.c.b16 %v3754, %v3753
  %v3767 = vpack.c.b16 %v3756, %v3755
  %v3768 = vpack.c.b16 %v3758, %v3757
  %v3769 = vpack.c.b16 %v3760, %v3759
  %v3770 = vpack.c.b16 %v3762, %v3761
  %3779 = vmatprep.subr.bf16.mxu0 0
  %3780 = vmatpush1.bf16.msra.mxu0 %v3770
  %3781 = vmatprep.subr.bf16.mxu0 0
  %3782 = vmatpush1.bf16.msra.mxu0 %v3769
  %3783 = vmatprep.subr.bf16.mxu0 0
  %3784 = vmatpush1.bf16.msra.mxu0 %v3768
  %3785 = vmatprep.subr.bf16.mxu0 0
  %3786 = vmatpush1.bf16.msra.mxu0 %v3767
  %3787 = vmatprep.subr.bf16.mxu0 0
  %3788 = vmatpush1.bf16.msra.mxu0 %v3766
  %3789 = vmatprep.subr.bf16.mxu0 0
  %3790 = vmatpush1.bf16.msra.mxu0 %v3765
  %3791 = vmatprep.subr.bf16.mxu0 0
  %3792 = vmatpush1.bf16.msra.mxu0 %v3764
  %3793 = vmatprep.subr.bf16.mxu0 0
  %3794 = vmatpush1.bf16.msra.mxu0 %v3763
  %3795 = vmatprep.subr.bf16.mxu0 0
  %3796 = vmatpush2.bf16.msra.mxu0 0
  %3797 = vmatprep.subr.bf16.mxu0 0
  %3798 = vmatpush2.bf16.msra.mxu0 0
  %3799 = vmatprep.subr.bf16.mxu0 0
  %3800 = vmatpush2.bf16.msra.mxu0 0
  %3801 = vmatprep.subr.bf16.mxu0 0
  %3802 = vmatpush2.bf16.msra.mxu0 0
  %3803 = vmatprep.subr.bf16.mxu0 0
  %3804 = vmatpush2.bf16.msra.mxu0 0
  %3805 = vmatprep.subr.bf16.mxu0 0
  %3806 = vmatpush2.bf16.msra.mxu0 0
  %3807 = vmatprep.subr.bf16.mxu0 0
  %3808 = vmatpush2.bf16.msra.mxu0 0
  %3809 = vmatprep.subr.bf16.mxu0 0
  %3810 = vmatpush2.bf16.msra.mxu0 0
  %3811 = vmatprep.mubr.bf16.mxu0 0
  %3812 = vmatmul.mubr.bf16.gmra.mxu0 %v3707
  %v3813 = vpop.f32.mrf.mxu0
  %v3814 = vadd.f32 %v3729, %v3813
  %v3815 = vpop.f32.mrf.mxu0
  %v3816 = vpop.f32.mrf.mxu0
  %v3817 = vpop.f32.mrf.mxu0
  %3818 = vdwg.mxu0
  %3819 = vst [vmem:[%s9] sm:$0xff] %v3814
  // Predicated region
  $region128: #{finetune_forward.1} parent=0 // pred_check
    _
  $region129: #{finetune_forward.1} parent=0 // pred_check_branch
    %3821 = sbr.rel (0) target = $region131
  $region130: #{finetune_forward.1} parent=0 // pred_region
    _
  $region131: #{finetune_forward.1} parent=0 // pred_fallthru
    _
  // Predicated region
  $region132: #{finetune_forward.1} parent=0 // pred_check
    _
  $region133: #{finetune_forward.1} parent=0 // pred_check_branch
    %3823 = sbr.rel (0) target = $region135
  $region134: #{finetune_forward.1} parent=0 // pred_region
    _
  $region135: #{finetune_forward.1} parent=0 // pred_fallthru
    _
  %3824 = vsyncmov [#allocation7]
  %s3825 = vpop.sfrf %3824
  %p3826 = scmp.eq.s32.totalorder %s3825, 0
  %p3827 = pneg %p3826
  %3829 = shalt.err (%p3827)
  %s3830 = scalar_lea.sflag [#allocation7], 1
  %3831 = vsyncmov %s3830
  %s3832 = vpop.sfrf %3831
  %p3833 = scmp.eq.s32.totalorder %s3832, 0
  %p3834 = pneg %p3833
  %3836 = shalt.err (%p3834)
  %s3837 = scalar_lea.sflag [#allocation7], 2
  %3838 = vsyncmov %s3837
  %s3839 = vpop.sfrf %3838
  %p3840 = scmp.eq.s32.totalorder %s3839, 0
  %p3841 = pneg %p3840
  %3843 = shalt.err (%p3841)

</llo_original>
